<compile_context>
chip_gen: v7x
topology: tpu7x:2x2x1
jax: 0.10.0
libtpu: 0.0.40
codegen_flags: <defaults>
</compile_context>

<pallas_src>
import math

import jax
import jax.numpy as jnp
import numpy as np
from jax.experimental import pallas as pl
from jax.experimental.pallas import tpu as pltpu

# ---------------- model configuration (small, consistent with the module) ----
D_MODEL = 32                        # d_model (== n_heads * d_query, required by builder)
N_HEADS = 2
D_QUERY = 16                        # per-head q/k/v dim
N_LAYERS = 2
N_CLASSES = 10
SEQ_LENGTH = 16                     # PositionalEncoding max_len (sequence_length arg)
FFN_DIM = N_HEADS * D_QUERY * 4     # 128
D_HALF = D_MODEL // 2               # 16 (embedding / positional dim)
C_OUT = N_CLASSES + 1               # 11
C_PAD = 128                         # lane-dense padded classifier width
LN_EPS = 1e-5
SOFTMAX_TEMP = 1.0 / math.sqrt(D_QUERY)

BATCH = 8                           # B (must be <= SEQ_LENGTH, see PE quirk)
SEQ = 8                             # L (tokens per example)
M_TOTAL = SEQ * BATCH               # flattened activation rows

# per-layer row layout inside the packed (…, 32) f32 parameter blob
ROWS_PER_LAYER = 3 * N_HEADS + 6    # [bq,bk,bvo]*heads, bo, ln1g, ln1b, b2, ln2g, ln2b
R_BO, R_LN1G, R_LN1B, R_B2, R_LN2G, R_LN2B = 6, 7, 8, 9, 10, 11


def _detect_row_blocks():
    """Use both TensorCores on v7x by splitting rows across a parallel grid."""
    try:
        kind = jax.devices()[0].device_kind.lower()
    except Exception:
        return 1
    return 2 if "v7" in kind else 1


NUM_ROW_BLOCKS = _detect_row_blocks()
if M_TOTAL % NUM_ROW_BLOCKS or (M_TOTAL // NUM_ROW_BLOCKS) % BATCH:
    NUM_ROW_BLOCKS = 1              # only split on sequence-group boundaries


# ------------------------------- Pallas kernel --------------------------------
def _layer_norm(v, g, b):
    # var = E[x^2] - mu^2: the two lane reductions are independent, so the XLU
    # reduces and the EUP rsqrt can overlap instead of serializing.
    mu = jnp.mean(v, axis=-1, keepdims=True)
    ms = jnp.mean(v * v, axis=-1, keepdims=True)
    return (v - mu) * jax.lax.rsqrt(ms - mu * mu + LN_EPS) * g + b


def transformer_kernel(x_ref, mask_ref, watt_ref, wfc_ref, p32_ref, p128_ref, o_ref):
    """Whole forward pass for one block of rows.

    x_ref   : (BLK, D) f32 activation rows (row n*B + b); attention is
              block-diagonal over groups of B consecutive rows, expressed by
              the precomputed additive mask bias.
    mask_ref: (BLK, BLK) f32  block-diag + causal bias (0 / -1e30), precomputed.
    watt_ref: (L*H*3, D, D) bf16  per-head [Wq*temp | 0], [Wk | 0], Wv_h@Wo_h.
    wfc_ref : (2L+1, D, FFN) bf16  per-layer w1, w2^T, then padded classifier.
    p32_ref : (L*12+2, D) f32  stacked biases / LN params (see prepare_params).
    p128_ref: (L+1, FFN) f32  per-layer b1, then padded classifier bias.
    """
    x = x_ref[...]                                   # (BLK, D) f32 residual stream
    bias = mask_ref[...]                             # (BLK, BLK) f32

    def p32row(i):                                   # (1, D) f32 row
        return p32_ref[i:i + 1, :]

    for l in range(N_LAYERS):
        base = l * ROWS_PER_LAYER
        x_bf = x.astype(jnp.bfloat16)

        # ---- multi-head causal softmax attention (per-head pre-split weights,
        #      folded value*out-projection; no lane slices / concat) ----------
        acc = None
        for h in range(N_HEADS):
            w = (l * N_HEADS + h) * 3
            r = base + 3 * h
            # q has softmax_temp folded in; columns D_QUERY: are zero-padded so
            # the 32-wide contraction below equals the 16-wide head contraction.
            q = jnp.dot(x_bf, watt_ref[w + 0],
                        preferred_element_type=jnp.float32) + p32row(r + 0)
            k = jnp.dot(x_bf, watt_ref[w + 1],
                        preferred_element_type=jnp.float32) + p32row(r + 1)
            vo = jnp.dot(x_bf, watt_ref[w + 2],
                         preferred_element_type=jnp.float32) + p32row(r + 2)

            s = jax.lax.dot_general(
                q.astype(jnp.bfloat16), k.astype(jnp.bfloat16),
                (((1,), (1,)), ((), ())),
                preferred_element_type=jnp.float32)                  # (BLK, BLK)
            s = s + bias
            # no row-max subtraction: valid scores are O(1) here and masked
            # entries (-1e30) underflow exp to exactly 0; every row keeps its
            # diagonal valid so the denominator is never 0.
            p = jnp.exp(s)
            inv = pl.reciprocal(jnp.sum(p, axis=-1, keepdims=True), approx=True)
            p = (p * inv).astype(jnp.bfloat16)
            ctx = jnp.dot(p, vo.astype(jnp.bfloat16),
                          preferred_element_type=jnp.float32)        # (BLK, D)
            acc = ctx if acc is None else acc + ctx

        attn = acc + p32row(base + R_BO)
        x = _layer_norm(x + attn, p32row(base + R_LN1G), p32row(base + R_LN1B))

        # ---- feed forward (relu); w2 stored transposed so both FFN weights
        #      share one lane-dense (D, FFN) blob ------------------------------
        y = jnp.dot(x.astype(jnp.bfloat16), wfc_ref[2 * l],
                    preferred_element_type=jnp.float32) + p128_ref[l:l + 1, :]
        y = jnp.maximum(y, 0.0).astype(jnp.bfloat16)
        y = jax.lax.dot_general(
            y, wfc_ref[2 * l + 1], (((1,), (1,)), ((), ())),
            preferred_element_type=jnp.float32) + p32row(base + R_B2)
        x = _layer_norm(x + y, p32row(base + R_LN2G), p32row(base + R_LN2B))

    # final encoder LayerNorm + classifier head (lane-dense, padded to C_PAD)
    fb = N_LAYERS * ROWS_PER_LAYER
    x = _layer_norm(x, p32row(fb), p32row(fb + 1))
    o_ref[...] = jnp.dot(x.astype(jnp.bfloat16), wfc_ref[2 * N_LAYERS],
                         preferred_element_type=jnp.float32) \
        + p128_ref[N_LAYERS:N_LAYERS + 1, :]


# ------------------------------- parameters ------------------------------------
def init_params(key):
    def nrm(k, shape, scale=0.1):
        return scale * jax.random.normal(k, shape, jnp.float32)

    keys = jax.random.split(key, 24)
    p = {}
    # value embedding table (n_classes + 1, d_model // 2), ~N(0, 1) like torch
    p["emb"] = jax.random.normal(keys[0], (N_CLASSES + 1, D_HALF), jnp.float32)

    # sinusoidal positional table — same construction as PositionalEncoding
    position = jnp.arange(SEQ_LENGTH, dtype=jnp.float32)[:, None]
    div_term = jnp.exp(jnp.arange(0, D_HALF, 2, dtype=jnp.float32)
                       * (-math.log(10000.0) / D_HALF))
    pe = jnp.zeros((SEQ_LENGTH, D_HALF), jnp.float32)
    pe = pe.at[:, 0::2].set(jnp.sin(position * div_term))
    pe = pe.at[:, 1::2].set(jnp.cos(position * div_term))
    p["pe"] = pe

    p["wq"] = nrm(keys[1], (N_LAYERS, D_MODEL, D_MODEL))
    p["bq"] = nrm(keys[2], (N_LAYERS, 1, D_MODEL), 0.02)
    p["wk"] = nrm(keys[3], (N_LAYERS, D_MODEL, D_MODEL))
    p["bk"] = nrm(keys[4], (N_LAYERS, 1, D_MODEL), 0.02)
    p["wv"] = nrm(keys[5], (N_LAYERS, D_MODEL, D_MODEL))
    p["bv"] = nrm(keys[6], (N_LAYERS, 1, D_MODEL), 0.02)
    p["wo"] = nrm(keys[7], (N_LAYERS, D_MODEL, D_MODEL))
    p["bo"] = nrm(keys[8], (N_LAYERS, 1, D_MODEL), 0.02)
    p["ln1g"] = 1.0 + nrm(keys[9], (N_LAYERS, 1, D_MODEL), 0.05)
    p["ln1b"] = nrm(keys[10], (N_LAYERS, 1, D_MODEL), 0.05)
    p["ln2g"] = 1.0 + nrm(keys[11], (N_LAYERS, 1, D_MODEL), 0.05)
    p["ln2b"] = nrm(keys[12], (N_LAYERS, 1, D_MODEL), 0.05)
    p["w1"] = nrm(keys[13], (N_LAYERS, D_MODEL, FFN_DIM))
    p["b1"] = nrm(keys[14], (N_LAYERS, 1, FFN_DIM), 0.02)
    p["w2"] = nrm(keys[15], (N_LAYERS, FFN_DIM, D_MODEL))
    p["b2"] = nrm(keys[16], (N_LAYERS, 1, D_MODEL), 0.02)
    p["lnfg"] = 1.0 + nrm(keys[17], (1, D_MODEL), 0.05)
    p["lnfb"] = nrm(keys[18], (1, D_MODEL), 0.05)
    p["wp"] = nrm(keys[19], (D_MODEL, C_OUT))
    p["bp"] = nrm(keys[20], (1, C_OUT), 0.02)
    return p


def prepare_params(params):
    """One-time packing of weights for the kernel (hoisted out of the call path)."""
    # ---- attention blob: per layer/head [Wq*temp | 0], [Wk | 0], Wv_h @ Wo_h ----
    blocks = []
    p32_rows = []
    for l in range(N_LAYERS):
        for h in range(N_HEADS):
            lo, hi = h * D_QUERY, (h + 1) * D_QUERY
            wq_pad = jnp.zeros((D_MODEL, D_MODEL), jnp.float32).at[:, :D_QUERY].set(
                params["wq"][l][:, lo:hi] * SOFTMAX_TEMP)
            wk_pad = jnp.zeros((D_MODEL, D_MODEL), jnp.float32).at[:, :D_QUERY].set(
                params["wk"][l][:, lo:hi])
            wvo = params["wv"][l][:, lo:hi] @ params["wo"][l][lo:hi, :]
            blocks += [wq_pad, wk_pad, wvo]

            bq_pad = jnp.zeros((1, D_MODEL), jnp.float32).at[:, :D_QUERY].set(
                params["bq"][l][:, lo:hi] * SOFTMAX_TEMP)
            bk_pad = jnp.zeros((1, D_MODEL), jnp.float32).at[:, :D_QUERY].set(
                params["bk"][l][:, lo:hi])
            bvo = params["bv"][l][:, lo:hi] @ params["wo"][l][lo:hi, :]
            p32_rows += [bq_pad, bk_pad, bvo]
        p32_rows += [params["bo"][l], params["ln1g"][l], params["ln1b"][l],
                     params["b2"][l], params["ln2g"][l], params["ln2b"][l]]
    p32_rows += [params["lnfg"], params["lnfb"]]
    watt = jnp.stack(blocks, axis=0).astype(jnp.bfloat16)          # (L*H*3, D, D)
    p32 = jnp.concatenate(p32_rows, axis=0)                        # (L*12+2, D) f32

    # ---- ffn + classifier blob (all lane-dense (D, FFN) tiles) -----------------
    mats = []
    for l in range(N_LAYERS):
        mats.append(params["w1"][l])                               # (D, FFN)
        mats.append(params["w2"][l].T)                             # (D, FFN)
    wp_pad = jnp.zeros((D_MODEL, C_PAD), jnp.float32).at[:, :C_OUT].set(params["wp"])
    mats.append(wp_pad)
    wfc = jnp.stack(mats, axis=0).astype(jnp.bfloat16)             # (2L+1, D, FFN)

    bp_pad = jnp.zeros((1, C_PAD), jnp.float32).at[:, :C_OUT].set(params["bp"])
    p128 = jnp.concatenate([params["b1"][l] for l in range(N_LAYERS)] + [bp_pad],
                           axis=0)                                 # (L+1, FFN) f32

    # ---- precomputed block-diag + causal additive mask bias --------------------
    blk = M_TOTAL // NUM_ROW_BLOCKS
    r = np.arange(blk)[:, None]
    c = np.arange(blk)[None, :]
    valid = (r // BATCH == c // BATCH) & (c <= r)
    mask = jnp.asarray(np.where(valid, 0.0, -1e30), dtype=jnp.float32)

    return {"emb": params["emb"], "pe": params["pe"],
            "watt": watt, "wfc": wfc, "p32": p32, "p128": p128, "mask": mask}


# ------------------------------- glue (plain JAX) ------------------------------
def embed_and_pos(tokens, params):
    """x.view(B,-1) -> embedding -> transpose(1,0) -> positional concat."""
    B = tokens.shape[0]
    assert B <= SEQ_LENGTH, "PositionalEncoding quirk requires batch <= max_len"
    tok = tokens.reshape(B, -1)                       # x.view(B, -1)
    L = tok.shape[1]
    emb = params["emb"][tok]                          # (B, L, D_HALF)
    emb = jnp.transpose(emb, (1, 0, 2))               # (L, B, D_HALF)
    # PositionalEncoding quirk: pe[:, :x.size(1), :] with x of shape (L,B,·)
    # slices the table by the *batch* axis B, then repeats along L.
    pos = params["pe"][:B]                            # (B, D_HALF)
    pos = jnp.broadcast_to(pos[None, :, :], (L, B, D_HALF))
    return jnp.concatenate([emb, pos], axis=-1)       # (L, B, D_MODEL)


def sequence_predictor_forward(tokens, prep):
    xcat = embed_and_pos(tokens, prep)                # (N, S, D) = (L, B, D)
    N, S, D = xcat.shape
    M = N * S
    x2d = xcat.reshape(M, D)                          # row n*S + s

    G = NUM_ROW_BLOCKS
    BLK = M // G
    assert BLK == prep["mask"].shape[0], "mask was prepared for a different split"

    def full_spec(arr):
        nd = arr.ndim
        return pl.BlockSpec(arr.shape, lambda i, nd=nd: (0,) * nd)

    in_specs = [pl.BlockSpec((BLK, D), lambda i: (i, 0)),
                full_spec(prep["mask"]),
                full_spec(prep["watt"]),
                full_spec(prep["wfc"]),
                full_spec(prep["p32"]),
                full_spec(prep["p128"])]
    out_specs = pl.BlockSpec((BLK, C_PAD), lambda i: (i, 0))

    out = pl.pallas_call(
        transformer_kernel,
        out_shape=jax.ShapeDtypeStruct((M, C_PAD), jnp.float32),
        grid=(G,),
        in_specs=in_specs,
        out_specs=out_specs,
        compiler_params=pltpu.CompilerParams(dimension_semantics=("parallel",)),
    )(x2d, prep["mask"], prep["watt"], prep["wfc"], prep["p32"], prep["p128"])

    return out.reshape(N, S, C_PAD)[:, :, :C_OUT]


# ------------------------------- pure-JAX reference ----------------------------
def reference_forward(tokens, params):
    x = embed_and_pos(tokens, params)                 # (N, S, D)
    N, S, D = x.shape
    causal = jnp.tril(jnp.ones((S, S), dtype=bool))

    def ln(v, g, b):
        mu = jnp.mean(v, axis=-1, keepdims=True)
        var = jnp.mean((v - mu) ** 2, axis=-1, keepdims=True)
        return (v - mu) / jnp.sqrt(var + LN_EPS) * g + b

    for l in range(N_LAYERS):
        q = x @ params["wq"][l] + params["bq"][l]
        k = x @ params["wk"][l] + params["bk"][l]
        v = x @ params["wv"][l] + params["bv"][l]
        heads = []
        for h in range(N_HEADS):
            lo, hi = h * D_QUERY, (h + 1) * D_QUERY
            qh, kh, vh = q[..., lo:hi], k[..., lo:hi], v[..., lo:hi]
            s = jnp.einsum("nld,nsd->nls", qh, kh)
            s = jnp.where(causal[None], s * SOFTMAX_TEMP, -1e30)
            p = jax.nn.softmax(s, axis=-1)
            heads.append(jnp.einsum("nls,nsd->nld", p, vh))
        attn = jnp.concatenate(heads, axis=-1) @ params["wo"][l] + params["bo"][l]
        x = ln(x + attn, params["ln1g"][l], params["ln1b"][l])
        y = jax.nn.relu(x @ params["w1"][l] + params["b1"][l])
        y = y @ params["w2"][l] + params["b2"][l]
        x = ln(x + y, params["ln2g"][l], params["ln2b"][l])
    x = ln(x, params["lnfg"], params["lnfb"])
    return x @ params["wp"] + params["bp"]


# ------------------------------- main -------------------------------------------
if __name__ == "__main__":
    key = jax.random.PRNGKey(0)
    pkey, tkey = jax.random.split(key)
    params = init_params(pkey)
    prep = jax.block_until_ready(prepare_params(params))   # one-time weight packing
    tokens = jax.random.randint(tkey, (BATCH, SEQ), 0, N_CLASSES + 1,
                                dtype=jnp.int32)

    fwd = jax.jit(sequence_predictor_forward)
    out = jax.block_until_ready(fwd(tokens, prep))
    assert out.shape == (SEQ, BATCH, C_OUT), out.shape

    ref = jax.block_until_ready(reference_forward(tokens, params))
    # kernel uses bf16 matmul operands (f32 accumulate), approx reciprocal and a
    # folded Wv@Wo; reference is pure f32
    np.testing.assert_allclose(np.asarray(out), np.asarray(ref),
                               rtol=4e-2, atol=4e-2)
    print("KERNEL_OK")
</pallas_src>

<mosaic_0001>
module attributes {stable_mosaic.version = 11 : i64} {
  func.func @transformer_kernel(%arg0: i32, %arg1: memref<64x32xf32, #tpu.memory_space<vmem>>, %arg2: memref<64x64xf32, #tpu.memory_space<vmem>>, %arg3: memref<12x32x32xbf16, #tpu.memory_space<vmem>>, %arg4: memref<5x32x128xbf16, #tpu.memory_space<vmem>>, %arg5: memref<26x32xf32, #tpu.memory_space<vmem>>, %arg6: memref<3x128xf32, #tpu.memory_space<vmem>>, %arg7: memref<64x128xf32, #tpu.memory_space<vmem>>) attributes {dimension_semantics = [#tpu.dimension_semantics<parallel>], iteration_bounds = array<i64: 1>, scalar_prefetch = 0 : i64, scratch_operands = 0 : i64, tpu.core_type = #tpu.core_type<tc>, window_params = [{transform_indices = @transform_0, window_bounds = array<i64: 64, 32>}, {pipeline_mode = #tpu.pipeline_mode<synchronous>, transform_indices = @transform_1, window_bounds = array<i64: 64, 64>}, {pipeline_mode = #tpu.pipeline_mode<synchronous>, transform_indices = @transform_2, window_bounds = array<i64: 12, 32, 32>}, {pipeline_mode = #tpu.pipeline_mode<synchronous>, transform_indices = @transform_3, window_bounds = array<i64: 5, 32, 128>}, {pipeline_mode = #tpu.pipeline_mode<synchronous>, transform_indices = @transform_4, window_bounds = array<i64: 26, 32>}, {pipeline_mode = #tpu.pipeline_mode<synchronous>, transform_indices = @transform_5, window_bounds = array<i64: 3, 128>}, {transform_indices = @transform_6, window_bounds = array<i64: 64, 128>}]} {
    %c0 = arith.constant 0 : index
    %c0_0 = arith.constant 0 : index
    %0 = vector.load %arg1[%c0, %c0_0] : memref<64x32xf32, #tpu.memory_space<vmem>>, vector<64x32xf32>
    %c0_1 = arith.constant 0 : index
    %c0_2 = arith.constant 0 : index
    %1 = vector.load %arg2[%c0_1, %c0_2] : memref<64x64xf32, #tpu.memory_space<vmem>>, vector<64x64xf32>
    %2 = arith.truncf %0 : vector<64x32xf32> to vector<64x32xbf16>
    %c0_3 = arith.constant 0 : index
    %c0_4 = arith.constant 0 : index
    %c0_5 = arith.constant 0 : index
    %3 = vector.load %arg3[%c0_3, %c0_4, %c0_5] : memref<12x32x32xbf16, #tpu.memory_space<vmem>>, vector<1x32x32xbf16>
    %4 = vector.shape_cast %3 : vector<1x32x32xbf16> to vector<32x32xbf16>
    %cst = arith.constant dense<0.000000e+00> : vector<64x32xf32>
    %5 = tpu.matmul %2, %4, %cst {dimension_numbers = #tpu.dot_dimension_numbers<[1], [0], [0], [1], [0, 0, 1, 1], [], []>} : vector<64x32xbf16>, vector<32x32xbf16>, vector<64x32xf32> -> vector<64x32xf32>
    %c0_6 = arith.constant 0 : index
    %c0_7 = arith.constant 0 : index
    %6 = vector.load %arg5[%c0_6, %c0_7] : memref<26x32xf32, #tpu.memory_space<vmem>>, vector<1x32xf32>
    %7 = vector.broadcast %6 : vector<1x32xf32> to vector<64x32xf32>
    %8 = arith.addf %5, %7 : vector<64x32xf32>
    %c1 = arith.constant 1 : index
    %c0_8 = arith.constant 0 : index
    %c0_9 = arith.constant 0 : index
    %9 = vector.load %arg3[%c1, %c0_8, %c0_9] : memref<12x32x32xbf16, #tpu.memory_space<vmem>>, vector<1x32x32xbf16>
    %10 = vector.shape_cast %9 : vector<1x32x32xbf16> to vector<32x32xbf16>
    %cst_10 = arith.constant dense<0.000000e+00> : vector<64x32xf32>
    %11 = tpu.matmul %2, %10, %cst_10 {dimension_numbers = #tpu.dot_dimension_numbers<[1], [0], [0], [1], [0, 0, 1, 1], [], []>} : vector<64x32xbf16>, vector<32x32xbf16>, vector<64x32xf32> -> vector<64x32xf32>
    %c1_11 = arith.constant 1 : index
    %c0_12 = arith.constant 0 : index
    %12 = vector.load %arg5[%c1_11, %c0_12] : memref<26x32xf32, #tpu.memory_space<vmem>>, vector<1x32xf32>
    %13 = vector.broadcast %12 : vector<1x32xf32> to vector<64x32xf32>
    %14 = arith.addf %11, %13 : vector<64x32xf32>
    %c2 = arith.constant 2 : index
    %c0_13 = arith.constant 0 : index
    %c0_14 = arith.constant 0 : index
    %15 = vector.load %arg3[%c2, %c0_13, %c0_14] : memref<12x32x32xbf16, #tpu.memory_space<vmem>>, vector<1x32x32xbf16>
    %16 = vector.shape_cast %15 : vector<1x32x32xbf16> to vector<32x32xbf16>
    %cst_15 = arith.constant dense<0.000000e+00> : vector<64x32xf32>
    %17 = tpu.matmul %2, %16, %cst_15 {dimension_numbers = #tpu.dot_dimension_numbers<[1], [0], [0], [1], [0, 0, 1, 1], [], []>} : vector<64x32xbf16>, vector<32x32xbf16>, vector<64x32xf32> -> vector<64x32xf32>
    %c2_16 = arith.constant 2 : index
    %c0_17 = arith.constant 0 : index
    %18 = vector.load %arg5[%c2_16, %c0_17] : memref<26x32xf32, #tpu.memory_space<vmem>>, vector<1x32xf32>
    %19 = vector.broadcast %18 : vector<1x32xf32> to vector<64x32xf32>
    %20 = arith.addf %17, %19 : vector<64x32xf32>
    %21 = arith.truncf %8 : vector<64x32xf32> to vector<64x32xbf16>
    %22 = arith.truncf %14 : vector<64x32xf32> to vector<64x32xbf16>
    %cst_18 = arith.constant dense<0.000000e+00> : vector<64x64xf32>
    %23 = tpu.matmul %21, %22, %cst_18 {dimension_numbers = #tpu.dot_dimension_numbers<[1], [1], [0], [0], [0, 0, 1, 0], [], []>} : vector<64x32xbf16>, vector<64x32xbf16>, vector<64x64xf32> -> vector<64x64xf32>
    %24 = arith.addf %23, %1 : vector<64x64xf32>
    %25 = math.exp %24 : vector<64x64xf32>
    %cst_19 = arith.constant dense<0.000000e+00> : vector<64xf32>
    %26 = vector.multi_reduction <add>, %25, %cst_19 [1] : vector<64x64xf32> to vector<64xf32>
    %27 = vector.shape_cast %26 : vector<64xf32> to vector<64x1xf32>
    %28 = tpu.reciprocal %27 {approx = true} : vector<64x1xf32> -> vector<64x1xf32>
    %29 = vector.broadcast %28 : vector<64x1xf32> to vector<64x64xf32>
    %30 = arith.mulf %25, %29 : vector<64x64xf32>
    %31 = arith.truncf %30 : vector<64x64xf32> to vector<64x64xbf16>
    %32 = arith.truncf %20 : vector<64x32xf32> to vector<64x32xbf16>
    %cst_20 = arith.constant dense<0.000000e+00> : vector<64x32xf32>
    %33 = tpu.matmul %31, %32, %cst_20 {dimension_numbers = #tpu.dot_dimension_numbers<[1], [0], [0], [1], [0, 0, 1, 1], [], []>} : vector<64x64xbf16>, vector<64x32xbf16>, vector<64x32xf32> -> vector<64x32xf32>
    %c3 = arith.constant 3 : index
    %c0_21 = arith.constant 0 : index
    %c0_22 = arith.constant 0 : index
    %34 = vector.load %arg3[%c3, %c0_21, %c0_22] : memref<12x32x32xbf16, #tpu.memory_space<vmem>>, vector<1x32x32xbf16>
    %35 = vector.shape_cast %34 : vector<1x32x32xbf16> to vector<32x32xbf16>
    %cst_23 = arith.constant dense<0.000000e+00> : vector<64x32xf32>
    %36 = tpu.matmul %2, %35, %cst_23 {dimension_numbers = #tpu.dot_dimension_numbers<[1], [0], [0], [1], [0, 0, 1, 1], [], []>} : vector<64x32xbf16>, vector<32x32xbf16>, vector<64x32xf32> -> vector<64x32xf32>
    %c3_24 = arith.constant 3 : index
    %c0_25 = arith.constant 0 : index
    %37 = vector.load %arg5[%c3_24, %c0_25] : memref<26x32xf32, #tpu.memory_space<vmem>>, vector<1x32xf32>
    %38 = vector.broadcast %37 : vector<1x32xf32> to vector<64x32xf32>
    %39 = arith.addf %36, %38 : vector<64x32xf32>
    %c4 = arith.constant 4 : index
    %c0_26 = arith.constant 0 : index
    %c0_27 = arith.constant 0 : index
    %40 = vector.load %arg3[%c4, %c0_26, %c0_27] : memref<12x32x32xbf16, #tpu.memory_space<vmem>>, vector<1x32x32xbf16>
    %41 = vector.shape_cast %40 : vector<1x32x32xbf16> to vector<32x32xbf16>
    %cst_28 = arith.constant dense<0.000000e+00> : vector<64x32xf32>
    %42 = tpu.matmul %2, %41, %cst_28 {dimension_numbers = #tpu.dot_dimension_numbers<[1], [0], [0], [1], [0, 0, 1, 1], [], []>} : vector<64x32xbf16>, vector<32x32xbf16>, vector<64x32xf32> -> vector<64x32xf32>
    %c4_29 = arith.constant 4 : index
    %c0_30 = arith.constant 0 : index
    %43 = vector.load %arg5[%c4_29, %c0_30] : memref<26x32xf32, #tpu.memory_space<vmem>>, vector<1x32xf32>
    %44 = vector.broadcast %43 : vector<1x32xf32> to vector<64x32xf32>
    %45 = arith.addf %42, %44 : vector<64x32xf32>
    %c5 = arith.constant 5 : index
    %c0_31 = arith.constant 0 : index
    %c0_32 = arith.constant 0 : index
    %46 = vector.load %arg3[%c5, %c0_31, %c0_32] : memref<12x32x32xbf16, #tpu.memory_space<vmem>>, vector<1x32x32xbf16>
    %47 = vector.shape_cast %46 : vector<1x32x32xbf16> to vector<32x32xbf16>
    %cst_33 = arith.constant dense<0.000000e+00> : vector<64x32xf32>
    %48 = tpu.matmul %2, %47, %cst_33 {dimension_numbers = #tpu.dot_dimension_numbers<[1], [0], [0], [1], [0, 0, 1, 1], [], []>} : vector<64x32xbf16>, vector<32x32xbf16>, vector<64x32xf32> -> vector<64x32xf32>
    %c5_34 = arith.constant 5 : index
    %c0_35 = arith.constant 0 : index
    %49 = vector.load %arg5[%c5_34, %c0_35] : memref<26x32xf32, #tpu.memory_space<vmem>>, vector<1x32xf32>
    %50 = vector.broadcast %49 : vector<1x32xf32> to vector<64x32xf32>
    %51 = arith.addf %48, %50 : vector<64x32xf32>
    %52 = arith.truncf %39 : vector<64x32xf32> to vector<64x32xbf16>
    %53 = arith.truncf %45 : vector<64x32xf32> to vector<64x32xbf16>
    %cst_36 = arith.constant dense<0.000000e+00> : vector<64x64xf32>
    %54 = tpu.matmul %52, %53, %cst_36 {dimension_numbers = #tpu.dot_dimension_numbers<[1], [1], [0], [0], [0, 0, 1, 0], [], []>} : vector<64x32xbf16>, vector<64x32xbf16>, vector<64x64xf32> -> vector<64x64xf32>
    %55 = arith.addf %54, %1 : vector<64x64xf32>
    %56 = math.exp %55 : vector<64x64xf32>
    %cst_37 = arith.constant dense<0.000000e+00> : vector<64xf32>
    %57 = vector.multi_reduction <add>, %56, %cst_37 [1] : vector<64x64xf32> to vector<64xf32>
    %58 = vector.shape_cast %57 : vector<64xf32> to vector<64x1xf32>
    %59 = tpu.reciprocal %58 {approx = true} : vector<64x1xf32> -> vector<64x1xf32>
    %60 = vector.broadcast %59 : vector<64x1xf32> to vector<64x64xf32>
    %61 = arith.mulf %56, %60 : vector<64x64xf32>
    %62 = arith.truncf %61 : vector<64x64xf32> to vector<64x64xbf16>
    %63 = arith.truncf %51 : vector<64x32xf32> to vector<64x32xbf16>
    %cst_38 = arith.constant dense<0.000000e+00> : vector<64x32xf32>
    %64 = tpu.matmul %62, %63, %cst_38 {dimension_numbers = #tpu.dot_dimension_numbers<[1], [0], [0], [1], [0, 0, 1, 1], [], []>} : vector<64x64xbf16>, vector<64x32xbf16>, vector<64x32xf32> -> vector<64x32xf32>
    %65 = arith.addf %33, %64 : vector<64x32xf32>
    %c6 = arith.constant 6 : index
    %c0_39 = arith.constant 0 : index
    %66 = vector.load %arg5[%c6, %c0_39] : memref<26x32xf32, #tpu.memory_space<vmem>>, vector<1x32xf32>
    %67 = vector.broadcast %66 : vector<1x32xf32> to vector<64x32xf32>
    %68 = arith.addf %65, %67 : vector<64x32xf32>
    %69 = arith.addf %0, %68 : vector<64x32xf32>
    %c7 = arith.constant 7 : index
    %c0_40 = arith.constant 0 : index
    %70 = vector.load %arg5[%c7, %c0_40] : memref<26x32xf32, #tpu.memory_space<vmem>>, vector<1x32xf32>
    %c8 = arith.constant 8 : index
    %c0_41 = arith.constant 0 : index
    %71 = vector.load %arg5[%c8, %c0_41] : memref<26x32xf32, #tpu.memory_space<vmem>>, vector<1x32xf32>
    %cst_42 = arith.constant dense<0.000000e+00> : vector<64xf32>
    %72 = vector.multi_reduction <add>, %69, %cst_42 [1] : vector<64x32xf32> to vector<64xf32>
    %73 = vector.shape_cast %72 : vector<64xf32> to vector<64x1xf32>
    %cst_43 = arith.constant 3.200000e+01 : f32
    %74 = vector.broadcast %cst_43 : f32 to vector<64x1xf32>
    %75 = arith.divf %73, %74 : vector<64x1xf32>
    %76 = arith.mulf %69, %69 : vector<64x32xf32>
    %cst_44 = arith.constant dense<0.000000e+00> : vector<64xf32>
    %77 = vector.multi_reduction <add>, %76, %cst_44 [1] : vector<64x32xf32> to vector<64xf32>
    %78 = vector.shape_cast %77 : vector<64xf32> to vector<64x1xf32>
    %cst_45 = arith.constant 3.200000e+01 : f32
    %79 = vector.broadcast %cst_45 : f32 to vector<64x1xf32>
    %80 = arith.divf %78, %79 : vector<64x1xf32>
    %81 = vector.broadcast %75 : vector<64x1xf32> to vector<64x32xf32>
    %82 = arith.subf %69, %81 : vector<64x32xf32>
    %83 = arith.mulf %75, %75 : vector<64x1xf32>
    %84 = arith.subf %80, %83 : vector<64x1xf32>
    %cst_46 = arith.constant 9.99999974E-6 : f32
    %85 = vector.broadcast %cst_46 : f32 to vector<64x1xf32>
    %86 = arith.addf %84, %85 : vector<64x1xf32>
    %87 = math.rsqrt %86 : vector<64x1xf32>
    %88 = vector.broadcast %87 : vector<64x1xf32> to vector<64x32xf32>
    %89 = arith.mulf %82, %88 : vector<64x32xf32>
    %90 = vector.broadcast %70 : vector<1x32xf32> to vector<64x32xf32>
    %91 = arith.mulf %89, %90 : vector<64x32xf32>
    %92 = vector.broadcast %71 : vector<1x32xf32> to vector<64x32xf32>
    %93 = arith.addf %91, %92 : vector<64x32xf32>
    %94 = arith.truncf %93 : vector<64x32xf32> to vector<64x32xbf16>
    %c0_47 = arith.constant 0 : index
    %c0_48 = arith.constant 0 : index
    %c0_49 = arith.constant 0 : index
    %95 = vector.load %arg4[%c0_47, %c0_48, %c0_49] : memref<5x32x128xbf16, #tpu.memory_space<vmem>>, vector<1x32x128xbf16>
    %96 = vector.shape_cast %95 : vector<1x32x128xbf16> to vector<32x128xbf16>
    %cst_50 = arith.constant dense<0.000000e+00> : vector<64x128xf32>
    %97 = tpu.matmul %94, %96, %cst_50 {dimension_numbers = #tpu.dot_dimension_numbers<[1], [0], [0], [1], [0, 0, 1, 1], [], []>} : vector<64x32xbf16>, vector<32x128xbf16>, vector<64x128xf32> -> vector<64x128xf32>
    %c0_51 = arith.constant 0 : index
    %c0_52 = arith.constant 0 : index
    %98 = vector.load %arg6[%c0_51, %c0_52] : memref<3x128xf32, #tpu.memory_space<vmem>>, vector<1x128xf32>
    %99 = vector.broadcast %98 : vector<1x128xf32> to vector<64x128xf32>
    %100 = arith.addf %97, %99 : vector<64x128xf32>
    %cst_53 = arith.constant 0.000000e+00 : f32
    %101 = vector.broadcast %cst_53 : f32 to vector<64x128xf32>
    %102 = arith.maximumf %100, %101 : vector<64x128xf32>
    %103 = arith.truncf %102 : vector<64x128xf32> to vector<64x128xbf16>
    %c1_54 = arith.constant 1 : index
    %c0_55 = arith.constant 0 : index
    %c0_56 = arith.constant 0 : index
    %104 = vector.load %arg4[%c1_54, %c0_55, %c0_56] : memref<5x32x128xbf16, #tpu.memory_space<vmem>>, vector<1x32x128xbf16>
    %105 = vector.shape_cast %104 : vector<1x32x128xbf16> to vector<32x128xbf16>
    %cst_57 = arith.constant dense<0.000000e+00> : vector<64x32xf32>
    %106 = tpu.matmul %103, %105, %cst_57 {dimension_numbers = #tpu.dot_dimension_numbers<[1], [1], [0], [0], [0, 0, 1, 0], [], []>} : vector<64x128xbf16>, vector<32x128xbf16>, vector<64x32xf32> -> vector<64x32xf32>
    %c9 = arith.constant 9 : index
    %c0_58 = arith.constant 0 : index
    %107 = vector.load %arg5[%c9, %c0_58] : memref<26x32xf32, #tpu.memory_space<vmem>>, vector<1x32xf32>
    %108 = vector.broadcast %107 : vector<1x32xf32> to vector<64x32xf32>
    %109 = arith.addf %106, %108 : vector<64x32xf32>
    %110 = arith.addf %93, %109 : vector<64x32xf32>
    %c10 = arith.constant 10 : index
    %c0_59 = arith.constant 0 : index
    %111 = vector.load %arg5[%c10, %c0_59] : memref<26x32xf32, #tpu.memory_space<vmem>>, vector<1x32xf32>
    %c11 = arith.constant 11 : index
    %c0_60 = arith.constant 0 : index
    %112 = vector.load %arg5[%c11, %c0_60] : memref<26x32xf32, #tpu.memory_space<vmem>>, vector<1x32xf32>
    %cst_61 = arith.constant dense<0.000000e+00> : vector<64xf32>
    %113 = vector.multi_reduction <add>, %110, %cst_61 [1] : vector<64x32xf32> to vector<64xf32>
    %114 = vector.shape_cast %113 : vector<64xf32> to vector<64x1xf32>
    %cst_62 = arith.constant 3.200000e+01 : f32
    %115 = vector.broadcast %cst_62 : f32 to vector<64x1xf32>
    %116 = arith.divf %114, %115 : vector<64x1xf32>
    %117 = arith.mulf %110, %110 : vector<64x32xf32>
    %cst_63 = arith.constant dense<0.000000e+00> : vector<64xf32>
    %118 = vector.multi_reduction <add>, %117, %cst_63 [1] : vector<64x32xf32> to vector<64xf32>
    %119 = vector.shape_cast %118 : vector<64xf32> to vector<64x1xf32>
    %cst_64 = arith.constant 3.200000e+01 : f32
    %120 = vector.broadcast %cst_64 : f32 to vector<64x1xf32>
    %121 = arith.divf %119, %120 : vector<64x1xf32>
    %122 = vector.broadcast %116 : vector<64x1xf32> to vector<64x32xf32>
    %123 = arith.subf %110, %122 : vector<64x32xf32>
    %124 = arith.mulf %116, %116 : vector<64x1xf32>
    %125 = arith.subf %121, %124 : vector<64x1xf32>
    %cst_65 = arith.constant 9.99999974E-6 : f32
    %126 = vector.broadcast %cst_65 : f32 to vector<64x1xf32>
    %127 = arith.addf %125, %126 : vector<64x1xf32>
    %128 = math.rsqrt %127 : vector<64x1xf32>
    %129 = vector.broadcast %128 : vector<64x1xf32> to vector<64x32xf32>
    %130 = arith.mulf %123, %129 : vector<64x32xf32>
    %131 = vector.broadcast %111 : vector<1x32xf32> to vector<64x32xf32>
    %132 = arith.mulf %130, %131 : vector<64x32xf32>
    %133 = vector.broadcast %112 : vector<1x32xf32> to vector<64x32xf32>
    %134 = arith.addf %132, %133 : vector<64x32xf32>
    %135 = arith.truncf %134 : vector<64x32xf32> to vector<64x32xbf16>
    %c6_66 = arith.constant 6 : index
    %c0_67 = arith.constant 0 : index
    %c0_68 = arith.constant 0 : index
    %136 = vector.load %arg3[%c6_66, %c0_67, %c0_68] : memref<12x32x32xbf16, #tpu.memory_space<vmem>>, vector<1x32x32xbf16>
    %137 = vector.shape_cast %136 : vector<1x32x32xbf16> to vector<32x32xbf16>
    %cst_69 = arith.constant dense<0.000000e+00> : vector<64x32xf32>
    %138 = tpu.matmul %135, %137, %cst_69 {dimension_numbers = #tpu.dot_dimension_numbers<[1], [0], [0], [1], [0, 0, 1, 1], [], []>} : vector<64x32xbf16>, vector<32x32xbf16>, vector<64x32xf32> -> vector<64x32xf32>
    %c12 = arith.constant 12 : index
    %c0_70 = arith.constant 0 : index
    %139 = vector.load %arg5[%c12, %c0_70] : memref<26x32xf32, #tpu.memory_space<vmem>>, vector<1x32xf32>
    %140 = vector.broadcast %139 : vector<1x32xf32> to vector<64x32xf32>
    %141 = arith.addf %138, %140 : vector<64x32xf32>
    %c7_71 = arith.constant 7 : index
    %c0_72 = arith.constant 0 : index
    %c0_73 = arith.constant 0 : index
    %142 = vector.load %arg3[%c7_71, %c0_72, %c0_73] : memref<12x32x32xbf16, #tpu.memory_space<vmem>>, vector<1x32x32xbf16>
    %143 = vector.shape_cast %142 : vector<1x32x32xbf16> to vector<32x32xbf16>
    %cst_74 = arith.constant dense<0.000000e+00> : vector<64x32xf32>
    %144 = tpu.matmul %135, %143, %cst_74 {dimension_numbers = #tpu.dot_dimension_numbers<[1], [0], [0], [1], [0, 0, 1, 1], [], []>} : vector<64x32xbf16>, vector<32x32xbf16>, vector<64x32xf32> -> vector<64x32xf32>
    %c13 = arith.constant 13 : index
    %c0_75 = arith.constant 0 : index
    %145 = vector.load %arg5[%c13, %c0_75] : memref<26x32xf32, #tpu.memory_space<vmem>>, vector<1x32xf32>
    %146 = vector.broadcast %145 : vector<1x32xf32> to vector<64x32xf32>
    %147 = arith.addf %144, %146 : vector<64x32xf32>
    %c8_76 = arith.constant 8 : index
    %c0_77 = arith.constant 0 : index
    %c0_78 = arith.constant 0 : index
    %148 = vector.load %arg3[%c8_76, %c0_77, %c0_78] : memref<12x32x32xbf16, #tpu.memory_space<vmem>>, vector<1x32x32xbf16>
    %149 = vector.shape_cast %148 : vector<1x32x32xbf16> to vector<32x32xbf16>
    %cst_79 = arith.constant dense<0.000000e+00> : vector<64x32xf32>
    %150 = tpu.matmul %135, %149, %cst_79 {dimension_numbers = #tpu.dot_dimension_numbers<[1], [0], [0], [1], [0, 0, 1, 1], [], []>} : vector<64x32xbf16>, vector<32x32xbf16>, vector<64x32xf32> -> vector<64x32xf32>
    %c14 = arith.constant 14 : index
    %c0_80 = arith.constant 0 : index
    %151 = vector.load %arg5[%c14, %c0_80] : memref<26x32xf32, #tpu.memory_space<vmem>>, vector<1x32xf32>
    %152 = vector.broadcast %151 : vector<1x32xf32> to vector<64x32xf32>
    %153 = arith.addf %150, %152 : vector<64x32xf32>
    %154 = arith.truncf %141 : vector<64x32xf32> to vector<64x32xbf16>
    %155 = arith.truncf %147 : vector<64x32xf32> to vector<64x32xbf16>
    %cst_81 = arith.constant dense<0.000000e+00> : vector<64x64xf32>
    %156 = tpu.matmul %154, %155, %cst_81 {dimension_numbers = #tpu.dot_dimension_numbers<[1], [1], [0], [0], [0, 0, 1, 0], [], []>} : vector<64x32xbf16>, vector<64x32xbf16>, vector<64x64xf32> -> vector<64x64xf32>
    %157 = arith.addf %156, %1 : vector<64x64xf32>
    %158 = math.exp %157 : vector<64x64xf32>
    %cst_82 = arith.constant dense<0.000000e+00> : vector<64xf32>
    %159 = vector.multi_reduction <add>, %158, %cst_82 [1] : vector<64x64xf32> to vector<64xf32>
    %160 = vector.shape_cast %159 : vector<64xf32> to vector<64x1xf32>
    %161 = tpu.reciprocal %160 {approx = true} : vector<64x1xf32> -> vector<64x1xf32>
    %162 = vector.broadcast %161 : vector<64x1xf32> to vector<64x64xf32>
    %163 = arith.mulf %158, %162 : vector<64x64xf32>
    %164 = arith.truncf %163 : vector<64x64xf32> to vector<64x64xbf16>
    %165 = arith.truncf %153 : vector<64x32xf32> to vector<64x32xbf16>
    %cst_83 = arith.constant dense<0.000000e+00> : vector<64x32xf32>
    %166 = tpu.matmul %164, %165, %cst_83 {dimension_numbers = #tpu.dot_dimension_numbers<[1], [0], [0], [1], [0, 0, 1, 1], [], []>} : vector<64x64xbf16>, vector<64x32xbf16>, vector<64x32xf32> -> vector<64x32xf32>
    %c9_84 = arith.constant 9 : index
    %c0_85 = arith.constant 0 : index
    %c0_86 = arith.constant 0 : index
    %167 = vector.load %arg3[%c9_84, %c0_85, %c0_86] : memref<12x32x32xbf16, #tpu.memory_space<vmem>>, vector<1x32x32xbf16>
    %168 = vector.shape_cast %167 : vector<1x32x32xbf16> to vector<32x32xbf16>
    %cst_87 = arith.constant dense<0.000000e+00> : vector<64x32xf32>
    %169 = tpu.matmul %135, %168, %cst_87 {dimension_numbers = #tpu.dot_dimension_numbers<[1], [0], [0], [1], [0, 0, 1, 1], [], []>} : vector<64x32xbf16>, vector<32x32xbf16>, vector<64x32xf32> -> vector<64x32xf32>
    %c15 = arith.constant 15 : index
    %c0_88 = arith.constant 0 : index
    %170 = vector.load %arg5[%c15, %c0_88] : memref<26x32xf32, #tpu.memory_space<vmem>>, vector<1x32xf32>
    %171 = vector.broadcast %170 : vector<1x32xf32> to vector<64x32xf32>
    %172 = arith.addf %169, %171 : vector<64x32xf32>
    %c10_89 = arith.constant 10 : index
    %c0_90 = arith.constant 0 : index
    %c0_91 = arith.constant 0 : index
    %173 = vector.load %arg3[%c10_89, %c0_90, %c0_91] : memref<12x32x32xbf16, #tpu.memory_space<vmem>>, vector<1x32x32xbf16>
    %174 = vector.shape_cast %173 : vector<1x32x32xbf16> to vector<32x32xbf16>
    %cst_92 = arith.constant dense<0.000000e+00> : vector<64x32xf32>
    %175 = tpu.matmul %135, %174, %cst_92 {dimension_numbers = #tpu.dot_dimension_numbers<[1], [0], [0], [1], [0, 0, 1, 1], [], []>} : vector<64x32xbf16>, vector<32x32xbf16>, vector<64x32xf32> -> vector<64x32xf32>
    %c16 = arith.constant 16 : index
    %c0_93 = arith.constant 0 : index
    %176 = vector.load %arg5[%c16, %c0_93] : memref<26x32xf32, #tpu.memory_space<vmem>>, vector<1x32xf32>
    %177 = vector.broadcast %176 : vector<1x32xf32> to vector<64x32xf32>
    %178 = arith.addf %175, %177 : vector<64x32xf32>
    %c11_94 = arith.constant 11 : index
    %c0_95 = arith.constant 0 : index
    %c0_96 = arith.constant 0 : index
    %179 = vector.load %arg3[%c11_94, %c0_95, %c0_96] : memref<12x32x32xbf16, #tpu.memory_space<vmem>>, vector<1x32x32xbf16>
    %180 = vector.shape_cast %179 : vector<1x32x32xbf16> to vector<32x32xbf16>
    %cst_97 = arith.constant dense<0.000000e+00> : vector<64x32xf32>
    %181 = tpu.matmul %135, %180, %cst_97 {dimension_numbers = #tpu.dot_dimension_numbers<[1], [0], [0], [1], [0, 0, 1, 1], [], []>} : vector<64x32xbf16>, vector<32x32xbf16>, vector<64x32xf32> -> vector<64x32xf32>
    %c17 = arith.constant 17 : index
    %c0_98 = arith.constant 0 : index
    %182 = vector.load %arg5[%c17, %c0_98] : memref<26x32xf32, #tpu.memory_space<vmem>>, vector<1x32xf32>
    %183 = vector.broadcast %182 : vector<1x32xf32> to vector<64x32xf32>
    %184 = arith.addf %181, %183 : vector<64x32xf32>
    %185 = arith.truncf %172 : vector<64x32xf32> to vector<64x32xbf16>
    %186 = arith.truncf %178 : vector<64x32xf32> to vector<64x32xbf16>
    %cst_99 = arith.constant dense<0.000000e+00> : vector<64x64xf32>
    %187 = tpu.matmul %185, %186, %cst_99 {dimension_numbers = #tpu.dot_dimension_numbers<[1], [1], [0], [0], [0, 0, 1, 0], [], []>} : vector<64x32xbf16>, vector<64x32xbf16>, vector<64x64xf32> -> vector<64x64xf32>
    %188 = arith.addf %187, %1 : vector<64x64xf32>
    %189 = math.exp %188 : vector<64x64xf32>
    %cst_100 = arith.constant dense<0.000000e+00> : vector<64xf32>
    %190 = vector.multi_reduction <add>, %189, %cst_100 [1] : vector<64x64xf32> to vector<64xf32>
    %191 = vector.shape_cast %190 : vector<64xf32> to vector<64x1xf32>
    %192 = tpu.reciprocal %191 {approx = true} : vector<64x1xf32> -> vector<64x1xf32>
    %193 = vector.broadcast %192 : vector<64x1xf32> to vector<64x64xf32>
    %194 = arith.mulf %189, %193 : vector<64x64xf32>
    %195 = arith.truncf %194 : vector<64x64xf32> to vector<64x64xbf16>
    %196 = arith.truncf %184 : vector<64x32xf32> to vector<64x32xbf16>
    %cst_101 = arith.constant dense<0.000000e+00> : vector<64x32xf32>
    %197 = tpu.matmul %195, %196, %cst_101 {dimension_numbers = #tpu.dot_dimension_numbers<[1], [0], [0], [1], [0, 0, 1, 1], [], []>} : vector<64x64xbf16>, vector<64x32xbf16>, vector<64x32xf32> -> vector<64x32xf32>
    %198 = arith.addf %166, %197 : vector<64x32xf32>
    %c18 = arith.constant 18 : index
    %c0_102 = arith.constant 0 : index
    %199 = vector.load %arg5[%c18, %c0_102] : memref<26x32xf32, #tpu.memory_space<vmem>>, vector<1x32xf32>
    %200 = vector.broadcast %199 : vector<1x32xf32> to vector<64x32xf32>
    %201 = arith.addf %198, %200 : vector<64x32xf32>
    %202 = arith.addf %134, %201 : vector<64x32xf32>
    %c19 = arith.constant 19 : index
    %c0_103 = arith.constant 0 : index
    %203 = vector.load %arg5[%c19, %c0_103] : memref<26x32xf32, #tpu.memory_space<vmem>>, vector<1x32xf32>
    %c20 = arith.constant 20 : index
    %c0_104 = arith.constant 0 : index
    %204 = vector.load %arg5[%c20, %c0_104] : memref<26x32xf32, #tpu.memory_space<vmem>>, vector<1x32xf32>
    %cst_105 = arith.constant dense<0.000000e+00> : vector<64xf32>
    %205 = vector.multi_reduction <add>, %202, %cst_105 [1] : vector<64x32xf32> to vector<64xf32>
    %206 = vector.shape_cast %205 : vector<64xf32> to vector<64x1xf32>
    %cst_106 = arith.constant 3.200000e+01 : f32
    %207 = vector.broadcast %cst_106 : f32 to vector<64x1xf32>
    %208 = arith.divf %206, %207 : vector<64x1xf32>
    %209 = arith.mulf %202, %202 : vector<64x32xf32>
    %cst_107 = arith.constant dense<0.000000e+00> : vector<64xf32>
    %210 = vector.multi_reduction <add>, %209, %cst_107 [1] : vector<64x32xf32> to vector<64xf32>
    %211 = vector.shape_cast %210 : vector<64xf32> to vector<64x1xf32>
    %cst_108 = arith.constant 3.200000e+01 : f32
    %212 = vector.broadcast %cst_108 : f32 to vector<64x1xf32>
    %213 = arith.divf %211, %212 : vector<64x1xf32>
    %214 = vector.broadcast %208 : vector<64x1xf32> to vector<64x32xf32>
    %215 = arith.subf %202, %214 : vector<64x32xf32>
    %216 = arith.mulf %208, %208 : vector<64x1xf32>
    %217 = arith.subf %213, %216 : vector<64x1xf32>
    %cst_109 = arith.constant 9.99999974E-6 : f32
    %218 = vector.broadcast %cst_109 : f32 to vector<64x1xf32>
    %219 = arith.addf %217, %218 : vector<64x1xf32>
    %220 = math.rsqrt %219 : vector<64x1xf32>
    %221 = vector.broadcast %220 : vector<64x1xf32> to vector<64x32xf32>
    %222 = arith.mulf %215, %221 : vector<64x32xf32>
    %223 = vector.broadcast %203 : vector<1x32xf32> to vector<64x32xf32>
    %224 = arith.mulf %222, %223 : vector<64x32xf32>
    %225 = vector.broadcast %204 : vector<1x32xf32> to vector<64x32xf32>
    %226 = arith.addf %224, %225 : vector<64x32xf32>
    %227 = arith.truncf %226 : vector<64x32xf32> to vector<64x32xbf16>
    %c2_110 = arith.constant 2 : index
    %c0_111 = arith.constant 0 : index
    %c0_112 = arith.constant 0 : index
    %228 = vector.load %arg4[%c2_110, %c0_111, %c0_112] : memref<5x32x128xbf16, #tpu.memory_space<vmem>>, vector<1x32x128xbf16>
    %229 = vector.shape_cast %228 : vector<1x32x128xbf16> to vector<32x128xbf16>
    %cst_113 = arith.constant dense<0.000000e+00> : vector<64x128xf32>
    %230 = tpu.matmul %227, %229, %cst_113 {dimension_numbers = #tpu.dot_dimension_numbers<[1], [0], [0], [1], [0, 0, 1, 1], [], []>} : vector<64x32xbf16>, vector<32x128xbf16>, vector<64x128xf32> -> vector<64x128xf32>
    %c1_114 = arith.constant 1 : index
    %c0_115 = arith.constant 0 : index
    %231 = vector.load %arg6[%c1_114, %c0_115] : memref<3x128xf32, #tpu.memory_space<vmem>>, vector<1x128xf32>
    %232 = vector.broadcast %231 : vector<1x128xf32> to vector<64x128xf32>
    %233 = arith.addf %230, %232 : vector<64x128xf32>
    %cst_116 = arith.constant 0.000000e+00 : f32
    %234 = vector.broadcast %cst_116 : f32 to vector<64x128xf32>
    %235 = arith.maximumf %233, %234 : vector<64x128xf32>
    %236 = arith.truncf %235 : vector<64x128xf32> to vector<64x128xbf16>
    %c3_117 = arith.constant 3 : index
    %c0_118 = arith.constant 0 : index
    %c0_119 = arith.constant 0 : index
    %237 = vector.load %arg4[%c3_117, %c0_118, %c0_119] : memref<5x32x128xbf16, #tpu.memory_space<vmem>>, vector<1x32x128xbf16>
    %238 = vector.shape_cast %237 : vector<1x32x128xbf16> to vector<32x128xbf16>
    %cst_120 = arith.constant dense<0.000000e+00> : vector<64x32xf32>
    %239 = tpu.matmul %236, %238, %cst_120 {dimension_numbers = #tpu.dot_dimension_numbers<[1], [1], [0], [0], [0, 0, 1, 0], [], []>} : vector<64x128xbf16>, vector<32x128xbf16>, vector<64x32xf32> -> vector<64x32xf32>
    %c21 = arith.constant 21 : index
    %c0_121 = arith.constant 0 : index
    %240 = vector.load %arg5[%c21, %c0_121] : memref<26x32xf32, #tpu.memory_space<vmem>>, vector<1x32xf32>
    %241 = vector.broadcast %240 : vector<1x32xf32> to vector<64x32xf32>
    %242 = arith.addf %239, %241 : vector<64x32xf32>
    %243 = arith.addf %226, %242 : vector<64x32xf32>
    %c22 = arith.constant 22 : index
    %c0_122 = arith.constant 0 : index
    %244 = vector.load %arg5[%c22, %c0_122] : memref<26x32xf32, #tpu.memory_space<vmem>>, vector<1x32xf32>
    %c23 = arith.constant 23 : index
    %c0_123 = arith.constant 0 : index
    %245 = vector.load %arg5[%c23, %c0_123] : memref<26x32xf32, #tpu.memory_space<vmem>>, vector<1x32xf32>
    %cst_124 = arith.constant dense<0.000000e+00> : vector<64xf32>
    %246 = vector.multi_reduction <add>, %243, %cst_124 [1] : vector<64x32xf32> to vector<64xf32>
    %247 = vector.shape_cast %246 : vector<64xf32> to vector<64x1xf32>
    %cst_125 = arith.constant 3.200000e+01 : f32
    %248 = vector.broadcast %cst_125 : f32 to vector<64x1xf32>
    %249 = arith.divf %247, %248 : vector<64x1xf32>
    %250 = arith.mulf %243, %243 : vector<64x32xf32>
    %cst_126 = arith.constant dense<0.000000e+00> : vector<64xf32>
    %251 = vector.multi_reduction <add>, %250, %cst_126 [1] : vector<64x32xf32> to vector<64xf32>
    %252 = vector.shape_cast %251 : vector<64xf32> to vector<64x1xf32>
    %cst_127 = arith.constant 3.200000e+01 : f32
    %253 = vector.broadcast %cst_127 : f32 to vector<64x1xf32>
    %254 = arith.divf %252, %253 : vector<64x1xf32>
    %255 = vector.broadcast %249 : vector<64x1xf32> to vector<64x32xf32>
    %256 = arith.subf %243, %255 : vector<64x32xf32>
    %257 = arith.mulf %249, %249 : vector<64x1xf32>
    %258 = arith.subf %254, %257 : vector<64x1xf32>
    %cst_128 = arith.constant 9.99999974E-6 : f32
    %259 = vector.broadcast %cst_128 : f32 to vector<64x1xf32>
    %260 = arith.addf %258, %259 : vector<64x1xf32>
    %261 = math.rsqrt %260 : vector<64x1xf32>
    %262 = vector.broadcast %261 : vector<64x1xf32> to vector<64x32xf32>
    %263 = arith.mulf %256, %262 : vector<64x32xf32>
    %264 = vector.broadcast %244 : vector<1x32xf32> to vector<64x32xf32>
    %265 = arith.mulf %263, %264 : vector<64x32xf32>
    %266 = vector.broadcast %245 : vector<1x32xf32> to vector<64x32xf32>
    %267 = arith.addf %265, %266 : vector<64x32xf32>
    %c24 = arith.constant 24 : index
    %c0_129 = arith.constant 0 : index
    %268 = vector.load %arg5[%c24, %c0_129] : memref<26x32xf32, #tpu.memory_space<vmem>>, vector<1x32xf32>
    %c25 = arith.constant 25 : index
    %c0_130 = arith.constant 0 : index
    %269 = vector.load %arg5[%c25, %c0_130] : memref<26x32xf32, #tpu.memory_space<vmem>>, vector<1x32xf32>
    %cst_131 = arith.constant dense<0.000000e+00> : vector<64xf32>
    %270 = vector.multi_reduction <add>, %267, %cst_131 [1] : vector<64x32xf32> to vector<64xf32>
    %271 = vector.shape_cast %270 : vector<64xf32> to vector<64x1xf32>
    %cst_132 = arith.constant 3.200000e+01 : f32
    %272 = vector.broadcast %cst_132 : f32 to vector<64x1xf32>
    %273 = arith.divf %271, %272 : vector<64x1xf32>
    %274 = arith.mulf %267, %267 : vector<64x32xf32>
    %cst_133 = arith.constant dense<0.000000e+00> : vector<64xf32>
    %275 = vector.multi_reduction <add>, %274, %cst_133 [1] : vector<64x32xf32> to vector<64xf32>
    %276 = vector.shape_cast %275 : vector<64xf32> to vector<64x1xf32>
    %cst_134 = arith.constant 3.200000e+01 : f32
    %277 = vector.broadcast %cst_134 : f32 to vector<64x1xf32>
    %278 = arith.divf %276, %277 : vector<64x1xf32>
    %279 = vector.broadcast %273 : vector<64x1xf32> to vector<64x32xf32>
    %280 = arith.subf %267, %279 : vector<64x32xf32>
    %281 = arith.mulf %273, %273 : vector<64x1xf32>
    %282 = arith.subf %278, %281 : vector<64x1xf32>
    %cst_135 = arith.constant 9.99999974E-6 : f32
    %283 = vector.broadcast %cst_135 : f32 to vector<64x1xf32>
    %284 = arith.addf %282, %283 : vector<64x1xf32>
    %285 = math.rsqrt %284 : vector<64x1xf32>
    %286 = vector.broadcast %285 : vector<64x1xf32> to vector<64x32xf32>
    %287 = arith.mulf %280, %286 : vector<64x32xf32>
    %288 = vector.broadcast %268 : vector<1x32xf32> to vector<64x32xf32>
    %289 = arith.mulf %287, %288 : vector<64x32xf32>
    %290 = vector.broadcast %269 : vector<1x32xf32> to vector<64x32xf32>
    %291 = arith.addf %289, %290 : vector<64x32xf32>
    %292 = arith.truncf %291 : vector<64x32xf32> to vector<64x32xbf16>
    %c4_136 = arith.constant 4 : index
    %c0_137 = arith.constant 0 : index
    %c0_138 = arith.constant 0 : index
    %293 = vector.load %arg4[%c4_136, %c0_137, %c0_138] : memref<5x32x128xbf16, #tpu.memory_space<vmem>>, vector<1x32x128xbf16>
    %294 = vector.shape_cast %293 : vector<1x32x128xbf16> to vector<32x128xbf16>
    %cst_139 = arith.constant dense<0.000000e+00> : vector<64x128xf32>
    %295 = tpu.matmul %292, %294, %cst_139 {dimension_numbers = #tpu.dot_dimension_numbers<[1], [0], [0], [1], [0, 0, 1, 1], [], []>} : vector<64x32xbf16>, vector<32x128xbf16>, vector<64x128xf32> -> vector<64x128xf32>
    %c2_140 = arith.constant 2 : index
    %c0_141 = arith.constant 0 : index
    %296 = vector.load %arg6[%c2_140, %c0_141] : memref<3x128xf32, #tpu.memory_space<vmem>>, vector<1x128xf32>
    %297 = vector.broadcast %296 : vector<1x128xf32> to vector<64x128xf32>
    %298 = arith.addf %295, %297 : vector<64x128xf32>
    %c0_142 = arith.constant 0 : index
    %c0_143 = arith.constant 0 : index
    %299 = vector.load %arg7[%c0_142, %c0_143] : memref<64x128xf32, #tpu.memory_space<vmem>>, vector<64x128xf32>
    tpu.vector_store %arg7[%c0_142, %c0_143], %298 {strides = array<i32>} : memref<64x128xf32, #tpu.memory_space<vmem>>, vector<64x128xf32>,
    return
  }
  func.func @transform_0(%arg0: i32) -> (i32, i32) {
    %c0_i32 = arith.constant 0 : i32
    %c0_i32_0 = arith.constant 0 : i32
    return %arg0, %c0_i32 : i32, i32
  }
  func.func @transform_1(%arg0: i32) -> (i32, i32) {
    %c0_i32 = arith.constant 0 : i32
    %c0_i32_0 = arith.constant 0 : i32
    %c0_i32_1 = arith.constant 0 : i32
    return %c0_i32, %c0_i32_0 : i32, i32
  }
  func.func @transform_2(%arg0: i32) -> (i32, i32, i32) {
    %c0_i32 = arith.constant 0 : i32
    %c0_i32_0 = arith.constant 0 : i32
    %c0_i32_1 = arith.constant 0 : i32
    %c0_i32_2 = arith.constant 0 : i32
    return %c0_i32, %c0_i32_0, %c0_i32_1 : i32, i32, i32
  }
  func.func @transform_3(%arg0: i32) -> (i32, i32, i32) {
    %c0_i32 = arith.constant 0 : i32
    %c0_i32_0 = arith.constant 0 : i32
    %c0_i32_1 = arith.constant 0 : i32
    %c0_i32_2 = arith.constant 0 : i32
    return %c0_i32, %c0_i32_0, %c0_i32_1 : i32, i32, i32
  }
  func.func @transform_4(%arg0: i32) -> (i32, i32) {
    %c0_i32 = arith.constant 0 : i32
    %c0_i32_0 = arith.constant 0 : i32
    %c0_i32_1 = arith.constant 0 : i32
    return %c0_i32, %c0_i32_0 : i32, i32
  }
  func.func @transform_5(%arg0: i32) -> (i32, i32) {
    %c0_i32 = arith.constant 0 : i32
    %c0_i32_0 = arith.constant 0 : i32
    %c0_i32_1 = arith.constant 0 : i32
    return %c0_i32, %c0_i32_0 : i32, i32
  }
  func.func @transform_6(%arg0: i32) -> (i32, i32) {
    %c0_i32 = arith.constant 0 : i32
    %c0_i32_0 = arith.constant 0 : i32
    return %arg0, %c0_i32 : i32, i32
  }
}

</mosaic_0001>

<llo_original>
// kernel: sequence_predictor_forward.1
$region0: #{sequence_predictor_forward.1}
  #allocation0 [shape = 'u32[]', space=smem, size = 0x4, offset = 0x4, fixed_abs, tag = 'smem constant byte address 0x4 - core index']
  #allocation1 [shape = 'u32[144,128]{1,0:T(1,128)}', space=vmem, size = 0x12000, scoped, tag = 'internal scratch']
  %s0 = inlined_call_operand.vmem [shape: f32[64,32], index: 0, kind: input, shape index: {}]
  %s1 = inlined_call_operand.vmem [shape: f32[64,64], index: 1, kind: input, shape index: {}]
  %s2 = inlined_call_operand.vmem [shape: bf16[12,32,32], index: 2, kind: input, shape index: {}]
  %s3 = inlined_call_operand.vmem [shape: bf16[5,32,128], index: 3, kind: input, shape index: {}]
  %s4 = inlined_call_operand.vmem [shape: f32[26,32], index: 4, kind: input, shape index: {}]
  %s5 = inlined_call_operand.vmem [shape: f32[3,128], index: 5, kind: input, shape index: {}]
  %s6 = inlined_call_operand.hbm [shape: f32[64,128], index: 6, kind: output, shape index: {}]
  %s7 = sld [smem:[#allocation0]]
  $region34: #{sequence_predictor_forward.1} parent=0
    _
  %s9 = ssub.s32 1, %s7
  %s10 = scalar_select 0, %s9, %s7
  $region1: #{sequence_predictor_forward.1} parent=0
    #allocation2 [shape = 'u8[32768]{0}', space=vmem, size = 0x8000, scoped, tag = 'output window, operand 0, single buffered']
    #allocation3 [shape = 's32[1]{0}', space=sflag, size = 0x4, scoped, tag = 'scoped memory for sequence_predictor_forward.1']
    %11 = vsyncpa [#allocation3], 0
    // Predicated region
    $region2: #{sequence_predictor_forward.1} parent=1 // pred_check
      _
    $region3: #{sequence_predictor_forward.1} parent=1 // pred_check_branch
      %13 = sbr.rel (0) target = $region5
    $region4: #{sequence_predictor_forward.1} parent=1 // pred_region
      _
    $region5: #{sequence_predictor_forward.1} parent=1 // pred_fallthru
      _
    // Predicated region
    $region6: #{sequence_predictor_forward.1} parent=1 // pred_check
      _
    $region7: #{sequence_predictor_forward.1} parent=1 // pred_check_branch
      %15 = sbr.rel (0) target = $region9
    $region8: #{sequence_predictor_forward.1} parent=1 // pred_region
      _
    $region9: #{sequence_predictor_forward.1} parent=1 // pred_fallthru
      _
    // Predicated region
    $region10: #{sequence_predictor_forward.1} parent=1 // pred_check
      _
    $region11: #{sequence_predictor_forward.1} parent=1 // pred_check_branch
      %17 = sbr.rel (0) target = $region13
    $region12: #{sequence_predictor_forward.1} parent=1 // pred_region
      _
    $region13: #{sequence_predictor_forward.1} parent=1 // pred_fallthru
      _
    // Predicated region
    $region14: #{sequence_predictor_forward.1} parent=1 // pred_check
      _
    $region15: #{sequence_predictor_forward.1} parent=1 // pred_check_branch
      %19 = sbr.rel (0) target = $region17
    $region16: #{sequence_predictor_forward.1} parent=1 // pred_region
      _
    $region17: #{sequence_predictor_forward.1} parent=1 // pred_fallthru
      _
    // Predicated region
    $region18: #{sequence_predictor_forward.1} parent=1 // pred_check
      _
    $region19: #{sequence_predictor_forward.1} parent=1 // pred_check_branch
      %21 = sbr.rel (0) target = $region21
    $region20: #{sequence_predictor_forward.1} parent=1 // pred_region
      _
    $region21: #{sequence_predictor_forward.1} parent=1 // pred_fallthru
      _
    // Predicated region
    $region22: #{sequence_predictor_forward.1} parent=1 // pred_check
      _
    $region23: #{sequence_predictor_forward.1} parent=1 // pred_check_branch
      %23 = sbr.rel (0) target = $region25
    $region24: #{sequence_predictor_forward.1} parent=1 // pred_region
      _
    $region25: #{sequence_predictor_forward.1} parent=1 // pred_fallthru
      _
    %v25 = vld [vmem:[%s0] sm:$0xff]
    %v26 = vld [vmem:[%s0 + $0x8] sm:$0xff]
    %v27 = vld [vmem:[%s0 + $0x10] sm:$0xff]
    %v28 = vld [vmem:[%s0 + $0x18] sm:$0xff]
    %v29 = vld [vmem:[%s0 + $0x20] sm:$0xff]
    %v30 = vld [vmem:[%s0 + $0x28] sm:$0xff]
    %v31 = vld [vmem:[%s0 + $0x30] sm:$0xff]
    %v32 = vld [vmem:[%s0 + $0x38] sm:$0xff]
    %v33 = vld [vmem:[%s1] sm:$0xff]
    %v34 = vld [vmem:[%s1 + $0x8] sm:$0xff]
    %v35 = vld [vmem:[%s1 + $0x10] sm:$0xff]
    %v36 = vld [vmem:[%s1 + $0x18] sm:$0xff]
    %v37 = vld [vmem:[%s1 + $0x20] sm:$0xff]
    %v38 = vld [vmem:[%s1 + $0x28] sm:$0xff]
    %v39 = vld [vmem:[%s1 + $0x30] sm:$0xff]
    %v40 = vld [vmem:[%s1 + $0x38] sm:$0xff]
    %v41 = vpack.c.bf16 %v26, %v25
    %v42 = vpack.c.bf16 %v28, %v27
    %v43 = vpack.c.bf16 %v30, %v29
    %v44 = vpack.c.bf16 %v32, %v31
    %v45 = vld [vmem:[%s2] sm:$0xf]
    %v46 = vld [vmem:[%s2 + $0x4] sm:$0xf]
    %v47 = vld [vmem:[%s2 + $0x8] sm:$0xf]
    %v48 = vld [vmem:[%s2 + $0xc] sm:$0xf]
    %v49 = vld [vmem:[%s4] sm:$0x1]
    %v50 = vlaneseq
    %v51 = vshrl.u32 %v50, 7
    %v52 = vsub.s32 0, %v51
    %v53 = vrot.slane %v49, %v52
    %v58 = vunpack.c.l.b16 %v45
    %v59 = vunpack.c.l.b16 %v46
    %v60 = vunpack.c.l.b16 %v47
    %v61 = vunpack.c.l.b16 %v48
    %v62 = vpack.c.b16 %v59, %v58
    %v63 = vpack.c.b16 %v61, %v60
    %vm66 = vcmask 261120
    %v68 = vsel %vm66, %v41, 0
    %v71 = vsel %vm66, %v42, 0
    %v74 = vsel %vm66, %v43, 0
    %v77 = vsel %vm66, %v44, 0
    %79 = vmatprep.subr.bf16.mxu0 0
    %80 = vmatpush1.bf16.msra.mxu0 %v62
    %81 = vmatprep.subr.bf16.mxu0 0
    %82 = vmatpush1.bf16.msra.mxu0 %v63
    %83 = vmatprep.subr.bf16.mxu0 0
    %84 = vmatpush1.bf16.msra.mxu0 0
    %85 = vmatprep.subr.bf16.mxu0 0
    %86 = vmatpush1.bf16.msra.mxu0 0
    %87 = vmatprep.subr.bf16.mxu0 0
    %88 = vmatpush1.bf16.msra.mxu0 0
    %89 = vmatprep.subr.bf16.mxu0 0
    %90 = vmatpush1.bf16.msra.mxu0 0
    %91 = vmatprep.subr.bf16.mxu0 0
    %92 = vmatpush1.bf16.msra.mxu0 0
    %93 = vmatprep.subr.bf16.mxu0 0
    %94 = vmatpush1.bf16.msra.mxu0 0
    %95 = vmatprep.subr.bf16.mxu0 0
    %96 = vmatpush1.bf16.msra.mxu0 0
    %97 = vmatprep.subr.bf16.mxu0 0
    %98 = vmatpush1.bf16.msra.mxu0 0
    %99 = vmatprep.subr.bf16.mxu0 0
    %100 = vmatpush1.bf16.msra.mxu0 0
    %101 = vmatprep.subr.bf16.mxu0 0
    %102 = vmatpush1.bf16.msra.mxu0 0
    %103 = vmatprep.subr.bf16.mxu0 0
    %104 = vmatpush1.bf16.msra.mxu0 0
    %105 = vmatprep.subr.bf16.mxu0 0
    %106 = vmatpush1.bf16.msra.mxu0 0
    %107 = vmatprep.subr.bf16.mxu0 0
    %108 = vmatpush1.bf16.msra.mxu0 0
    %109 = vmatprep.subr.bf16.mxu0 0
    %110 = vmatpush1.bf16.msra.mxu0 0
    %111 = vmatprep.mubr.bf16.mxu0 0
    %112 = vmatmul.mubr.bf16.gmra.mrb[0].mxu0 %v68
    %v113 = vpop.f32.mrb[0].mxu0
    %v114 = vadd.f32 %v53, %v113
    %v115 = vpop.f32.mrb[0].mxu0
    %v116 = vpop.f32.mrb[0].mxu0
    %v117 = vadd.f32 %v53, %v116
    %v118 = vpop.f32.mrb[0].mxu0
    %119 = vmatprep.mubr.bf16.mxu0 0
    %120 = vmatmul.mubr.bf16.gmra.mrb[0].mxu0 %v71
    %v121 = vpop.f32.mrb[0].mxu0
    %v122 = vadd.f32 %v53, %v121
    %v123 = vpop.f32.mrb[0].mxu0
    %v124 = vpop.f32.mrb[0].mxu0
    %v125 = vadd.f32 %v53, %v124
    %v126 = vpop.f32.mrb[0].mxu0
    %127 = vmatprep.mubr.bf16.mxu0 0
    %128 = vmatmul.mubr.bf16.gmra.mrb[0].mxu0 %v74
    %v129 = vpop.f32.mrb[0].mxu0
    %v130 = vadd.f32 %v53, %v129
    %v131 = vpop.f32.mrb[0].mxu0
    %v132 = vpop.f32.mrb[0].mxu0
    %v133 = vadd.f32 %v53, %v132
    %v134 = vpop.f32.mrb[0].mxu0
    %135 = vmatprep.mubr.bf16.mxu0 0
    %136 = vmatmul.mubr.bf16.gmra.mrb[0].mxu0 %v77
    %v137 = vpop.f32.mrb[0].mxu0
    %v138 = vadd.f32 %v53, %v137
    %v139 = vpop.f32.mrb[0].mxu0
    %v140 = vpop.f32.mrb[0].mxu0
    %v141 = vadd.f32 %v53, %v140
    %v142 = vpop.f32.mrb[0].mxu0
    %143 = vdwg.mxu0
    %s144 = scalar_lea.vmem %s2, 16
    %v145 = vld [vmem:[%s144] sm:$0xf]
    %v146 = vld [vmem:[%s144 + $0x4] sm:$0xf]
    %v147 = vld [vmem:[%s144 + $0x8] sm:$0xf]
    %v148 = vld [vmem:[%s144 + $0xc] sm:$0xf]
    %v149 = vld [vmem:[%s4 + $0x1] sm:$0x1]
    %v150 = vlaneseq
    %v151 = vshrl.u32 %v150, 7
    %v152 = vsub.s32 0, %v151
    %v153 = vrot.slane %v149, %v152
    %v158 = vunpack.c.l.b16 %v145
    %v159 = vunpack.c.l.b16 %v146
    %v160 = vunpack.c.l.b16 %v147
    %v161 = vunpack.c.l.b16 %v148
    %v162 = vpack.c.b16 %v159, %v158
    %v163 = vpack.c.b16 %v161, %v160
    %166 = vmatprep.subr.bf16.mxu0 0
    %167 = vmatpush1.bf16.msra.mxu0 %v162
    %168 = vmatprep.subr.bf16.mxu0 0
    %169 = vmatpush1.bf16.msra.mxu0 %v163
    %170 = vmatprep.subr.bf16.mxu0 0
    %171 = vmatpush1.bf16.msra.mxu0 0
    %172 = vmatprep.subr.bf16.mxu0 0
    %173 = vmatpush1.bf16.msra.mxu0 0
    %174 = vmatprep.subr.bf16.mxu0 0
    %175 = vmatpush1.bf16.msra.mxu0 0
    %176 = vmatprep.subr.bf16.mxu0 0
    %177 = vmatpush1.bf16.msra.mxu0 0
    %178 = vmatprep.subr.bf16.mxu0 0
    %179 = vmatpush1.bf16.msra.mxu0 0
    %180 = vmatprep.subr.bf16.mxu0 0
    %181 = vmatpush1.bf16.msra.mxu0 0
    %182 = vmatprep.subr.bf16.mxu0 0
    %183 = vmatpush1.bf16.msra.mxu0 0
    %184 = vmatprep.subr.bf16.mxu0 0
    %185 = vmatpush1.bf16.msra.mxu0 0
    %186 = vmatprep.subr.bf16.mxu0 0
    %187 = vmatpush1.bf16.msra.mxu0 0
    %188 = vmatprep.subr.bf16.mxu0 0
    %189 = vmatpush1.bf16.msra.mxu0 0
    %190 = vmatprep.subr.bf16.mxu0 0
    %191 = vmatpush1.bf16.msra.mxu0 0
    %192 = vmatprep.subr.bf16.mxu0 0
    %193 = vmatpush1.bf16.msra.mxu0 0
    %194 = vmatprep.subr.bf16.mxu0 0
    %195 = vmatpush1.bf16.msra.mxu0 0
    %196 = vmatprep.subr.bf16.mxu0 0
    %197 = vmatpush1.bf16.msra.mxu0 0
    %198 = vmatprep.mubr.bf16.mxu0 0
    %199 = vmatmul.mubr.bf16.gmra.mrb[0].mxu0 %v68
    %v200 = vpop.f32.mrb[0].mxu0
    %v201 = vadd.f32 %v153, %v200
    %v202 = vpop.f32.mrb[0].mxu0
    %v203 = vpop.f32.mrb[0].mxu0
    %v204 = vadd.f32 %v153, %v203
    %v205 = vpop.f32.mrb[0].mxu0
    %206 = vmatprep.mubr.bf16.mxu0 0
    %207 = vmatmul.mubr.bf16.gmra.mrb[0].mxu0 %v71
    %v208 = vpop.f32.mrb[0].mxu0
    %v209 = vadd.f32 %v153, %v208
    %v210 = vpop.f32.mrb[0].mxu0
    %v211 = vpop.f32.mrb[0].mxu0
    %v212 = vadd.f32 %v153, %v211
    %v213 = vpop.f32.mrb[0].mxu0
    %214 = vmatprep.mubr.bf16.mxu0 0
    %215 = vmatmul.mubr.bf16.gmra.mrb[0].mxu0 %v74
    %v216 = vpop.f32.mrb[0].mxu0
    %v217 = vadd.f32 %v153, %v216
    %v218 = vpop.f32.mrb[0].mxu0
    %v219 = vpop.f32.mrb[0].mxu0
    %v220 = vadd.f32 %v153, %v219
    %v221 = vpop.f32.mrb[0].mxu0
    %222 = vmatprep.mubr.bf16.mxu0 0
    %223 = vmatmul.mubr.bf16.gmra.mrb[0].mxu0 %v77
    %v224 = vpop.f32.mrb[0].mxu0
    %v225 = vadd.f32 %v153, %v224
    %v226 = vpop.f32.mrb[0].mxu0
    %v227 = vpop.f32.mrb[0].mxu0
    %v228 = vadd.f32 %v153, %v227
    %v229 = vpop.f32.mrb[0].mxu0
    %230 = vdwg.mxu0
    %s231 = scalar_lea.vmem %s2, 32
    %v232 = vld [vmem:[%s231] sm:$0xf]
    %v233 = vld [vmem:[%s231 + $0x4] sm:$0xf]
    %v234 = vld [vmem:[%s231 + $0x8] sm:$0xf]
    %v235 = vld [vmem:[%s231 + $0xc] sm:$0xf]
    %v236 = vld [vmem:[%s4 + $0x2] sm:$0x1]
    %v237 = vlaneseq
    %v238 = vshrl.u32 %v237, 7
    %v239 = vsub.s32 0, %v238
    %v240 = vrot.slane %v236, %v239
    %v245 = vunpack.c.l.b16 %v232
    %v246 = vunpack.c.l.b16 %v233
    %v247 = vunpack.c.l.b16 %v234
    %v248 = vunpack.c.l.b16 %v235
    %v249 = vpack.c.b16 %v246, %v245
    %v250 = vpack.c.b16 %v248, %v247
    %253 = vmatprep.subr.bf16.mxu0 0
    %254 = vmatpush1.bf16.msra.mxu0 %v249
    %255 = vmatprep.subr.bf16.mxu0 0
    %256 = vmatpush1.bf16.msra.mxu0 %v250
    %257 = vmatprep.subr.bf16.mxu0 0
    %258 = vmatpush1.bf16.msra.mxu0 0
    %259 = vmatprep.subr.bf16.mxu0 0
    %260 = vmatpush1.bf16.msra.mxu0 0
    %261 = vmatprep.subr.bf16.mxu0 0
    %262 = vmatpush1.bf16.msra.mxu0 0
    %263 = vmatprep.subr.bf16.mxu0 0
    %264 = vmatpush1.bf16.msra.mxu0 0
    %265 = vmatprep.subr.bf16.mxu0 0
    %266 = vmatpush1.bf16.msra.mxu0 0
    %267 = vmatprep.subr.bf16.mxu0 0
    %268 = vmatpush1.bf16.msra.mxu0 0
    %269 = vmatprep.subr.bf16.mxu0 0
    %270 = vmatpush1.bf16.msra.mxu0 0
    %271 = vmatprep.subr.bf16.mxu0 0
    %272 = vmatpush1.bf16.msra.mxu0 0
    %273 = vmatprep.subr.bf16.mxu0 0
    %274 = vmatpush1.bf16.msra.mxu0 0
    %275 = vmatprep.subr.bf16.mxu0 0
    %276 = vmatpush1.bf16.msra.mxu0 0
    %277 = vmatprep.subr.bf16.mxu0 0
    %278 = vmatpush1.bf16.msra.mxu0 0
    %279 = vmatprep.subr.bf16.mxu0 0
    %280 = vmatpush1.bf16.msra.mxu0 0
    %281 = vmatprep.subr.bf16.mxu0 0
    %282 = vmatpush1.bf16.msra.mxu0 0
    %283 = vmatprep.subr.bf16.mxu0 0
    %284 = vmatpush1.bf16.msra.mxu0 0
    %285 = vmatprep.mubr.bf16.mxu0 0
    %286 = vmatmul.mubr.bf16.gmra.mrb[0].mxu0 %v68
    %v287 = vpop.f32.mrb[0].mxu0
    %v288 = vadd.f32 %v240, %v287
    %v289 = vpop.f32.mrb[0].mxu0
    %v290 = vpop.f32.mrb[0].mxu0
    %v291 = vadd.f32 %v240, %v290
    %v292 = vpop.f32.mrb[0].mxu0
    %293 = vmatprep.mubr.bf16.mxu0 0
    %294 = vmatmul.mubr.bf16.gmra.mrb[0].mxu0 %v71
    %v295 = vpop.f32.mrb[0].mxu0
    %v296 = vadd.f32 %v240, %v295
    %v297 = vpop.f32.mrb[0].mxu0
    %v298 = vpop.f32.mrb[0].mxu0
    %v299 = vadd.f32 %v240, %v298
    %v300 = vpop.f32.mrb[0].mxu0
    %301 = vmatprep.mubr.bf16.mxu0 0
    %302 = vmatmul.mubr.bf16.gmra.mrb[0].mxu0 %v74
    %v303 = vpop.f32.mrb[0].mxu0
    %v304 = vadd.f32 %v240, %v303
    %v305 = vpop.f32.mrb[0].mxu0
    %v306 = vpop.f32.mrb[0].mxu0
    %v307 = vadd.f32 %v240, %v306
    %v308 = vpop.f32.mrb[0].mxu0
    %309 = vmatprep.mubr.bf16.mxu0 0
    %310 = vmatmul.mubr.bf16.gmra.mrb[0].mxu0 %v77
    %v311 = vpop.f32.mrb[0].mxu0
    %v312 = vadd.f32 %v240, %v311
    %v313 = vpop.f32.mrb[0].mxu0
    %v314 = vpop.f32.mrb[0].mxu0
    %v315 = vadd.f32 %v240, %v314
    %v316 = vpop.f32.mrb[0].mxu0
    %317 = vdwg.mxu0
    %v318 = vpack.c.bf16 %v117, %v114
    %v319 = vpack.c.bf16 %v125, %v122
    %v320 = vpack.c.bf16 %v133, %v130
    %v321 = vpack.c.bf16 %v141, %v138
    %v322 = vpack.c.bf16 %v204, %v201
    %v323 = vpack.c.bf16 %v212, %v209
    %v324 = vpack.c.bf16 %v220, %v217
    %v325 = vpack.c.bf16 %v228, %v225
    %v327 = vsel %vm66, %v318, 0
    %v330 = vsel %vm66, %v319, 0
    %v333 = vsel %vm66, %v320, 0
    %v336 = vsel %vm66, %v321, 0
    %v339 = vsel %vm66, %v322, 0
    %v342 = vsel %vm66, %v323, 0
    %v345 = vsel %vm66, %v324, 0
    %v348 = vsel %vm66, %v325, 0
    %350 = vmatprep.subr.bf16.mxu0 0
    %351 = vmatpush1.bf16.xpose.msra.mxu0 %v339
    %352 = vmatprep.subr.bf16.mxu0 0
    %353 = vmatpush1.bf16.xpose.msra.mxu0 %v342
    %354 = vmatprep.subr.bf16.mxu0 0
    %355 = vmatpush1.bf16.xpose.msra.mxu0 %v345
    %356 = vmatprep.subr.bf16.mxu0 0
    %357 = vmatpush1.bf16.xpose.msra.mxu0 %v348
    %358 = vmatprep.subr.bf16.mxu0 0
    %359 = vmatpush1.bf16.xpose.msra.mxu0 0
    %360 = vmatprep.subr.bf16.mxu0 0
    %361 = vmatpush1.bf16.xpose.msra.mxu0 0
    %362 = vmatprep.subr.bf16.mxu0 0
    %363 = vmatpush1.bf16.xpose.msra.mxu0 0
    %364 = vmatprep.subr.bf16.mxu0 0
    %365 = vmatpush1.bf16.xpose.msra.mxu0 0
    %366 = vmatprep.subr.bf16.mxu0 0
    %367 = vmatpush1.bf16.xpose.msra.mxu0 0
    %368 = vmatprep.subr.bf16.mxu0 0
    %369 = vmatpush1.bf16.xpose.msra.mxu0 0
    %370 = vmatprep.subr.bf16.mxu0 0
    %371 = vmatpush1.bf16.xpose.msra.mxu0 0
    %372 = vmatprep.subr.bf16.mxu0 0
    %373 = vmatpush1.bf16.xpose.msra.mxu0 0
    %374 = vmatprep.subr.bf16.mxu0 0
    %375 = vmatpush1.bf16.xpose.msra.mxu0 0
    %376 = vmatprep.subr.bf16.mxu0 0
    %377 = vmatpush1.bf16.xpose.msra.mxu0 0
    %378 = vmatprep.subr.bf16.mxu0 0
    %379 = vmatpush1.bf16.xpose.msra.mxu0 0
    %380 = vmatprep.subr.bf16.mxu0 0
    %381 = vmatpush1.bf16.xpose.msra.mxu0 0
    %382 = vmatprep.mubr.bf16.mxu0 0
    %383 = vmatmul.mubr.bf16.gmra.mrb[0].mxu0 %v327
    %v384 = vpop.f32.mrb[0].mxu0
    %v385 = vadd.f32 %v33, %v384
    %v386 = vpop.f32.mrb[0].mxu0
    %v387 = vpop.f32.mrb[0].mxu0
    %v388 = vadd.f32 %v34, %v387
    %v389 = vpop.f32.mrb[0].mxu0
    %390 = vmatprep.mubr.bf16.mxu0 0
    %391 = vmatmul.mubr.bf16.gmra.mrb[0].mxu0 %v330
    %v392 = vpop.f32.mrb[0].mxu0
    %v393 = vadd.f32 %v35, %v392
    %v394 = vpop.f32.mrb[0].mxu0
    %v395 = vpop.f32.mrb[0].mxu0
    %v396 = vadd.f32 %v36, %v395
    %v397 = vpop.f32.mrb[0].mxu0
    %398 = vmatprep.mubr.bf16.mxu0 0
    %399 = vmatmul.mubr.bf16.gmra.mrb[0].mxu0 %v333
    %v400 = vpop.f32.mrb[0].mxu0
    %v401 = vadd.f32 %v37, %v400
    %v402 = vpop.f32.mrb[0].mxu0
    %v403 = vpop.f32.mrb[0].mxu0
    %v404 = vadd.f32 %v38, %v403
    %v405 = vpop.f32.mrb[0].mxu0
    %406 = vmatprep.mubr.bf16.mxu0 0
    %407 = vmatmul.mubr.bf16.gmra.mrb[0].mxu0 %v336
    %v408 = vpop.f32.mrb[0].mxu0
    %v409 = vadd.f32 %v39, %v408
    %v410 = vpop.f32.mrb[0].mxu0
    %v411 = vpop.f32.mrb[0].mxu0
    %v412 = vadd.f32 %v40, %v411
    %v413 = vpop.f32.mrb[0].mxu0
    %414 = vdwg.mxu0
    %v415 = vmul.f32 %v385, 1.442695
    %v416 = vpow.pop %v415
    %v417 = vmul.f32 %v388, 1.442695
    %v418 = vpow.pop %v417
    %v419 = vmul.f32 %v393, 1.442695
    %v420 = vpow.pop %v419
    %v421 = vmul.f32 %v396, 1.442695
    %v422 = vpow.pop %v421
    %v423 = vmul.f32 %v401, 1.442695
    %v424 = vpow.pop %v423
    %v425 = vmul.f32 %v404, 1.442695
    %v426 = vpow.pop %v425
    %v427 = vmul.f32 %v409, 1.442695
    %v428 = vpow.pop %v427
    %v429 = vmul.f32 %v412, 1.442695
    %v430 = vpow.pop %v429
    %vm431 = vcmask 523264
    %v432 = vsel %vm431, %v416, 0.0
    %433 = vadd.xlane.f32.xlu0 %v432
    %v434 = vpop.xlane.xlu0 %433
    %v435 = vsel %vm431, %v418, 0.0
    %436 = vadd.xlane.f32.xlu0 %v435
    %v437 = vpop.xlane.xlu0 %436
    %v438 = vsel %vm431, %v420, 0.0
    %439 = vadd.xlane.f32.xlu0 %v438
    %v440 = vpop.xlane.xlu0 %439
    %v441 = vsel %vm431, %v422, 0.0
    %442 = vadd.xlane.f32.xlu0 %v441
    %v443 = vpop.xlane.xlu0 %442
    %v444 = vsel %vm431, %v424, 0.0
    %445 = vadd.xlane.f32.xlu0 %v444
    %v446 = vpop.xlane.xlu0 %445
    %v447 = vsel %vm431, %v426, 0.0
    %448 = vadd.xlane.f32.xlu0 %v447
    %v449 = vpop.xlane.xlu0 %448
    %v450 = vsel %vm431, %v428, 0.0
    %451 = vadd.xlane.f32.xlu0 %v450
    %v452 = vpop.xlane.xlu0 %451
    %v453 = vsel %vm431, %v430, 0.0
    %454 = vadd.xlane.f32.xlu0 %v453
    %v455 = vpop.xlane.xlu0 %454
    %v456 = vrcp.pop %v434
    %v457 = vrcp.pop %v437
    %v458 = vrcp.pop %v440
    %v459 = vrcp.pop %v443
    %v460 = vrcp.pop %v446
    %v461 = vrcp.pop %v449
    %v462 = vrcp.pop %v452
    %v463 = vrcp.pop %v455
    %v464 = vmul.f32 %v416, %v456
    %v465 = vmul.f32 %v418, %v457
    %v466 = vmul.f32 %v420, %v458
    %v467 = vmul.f32 %v422, %v459
    %v468 = vmul.f32 %v424, %v460
    %v469 = vmul.f32 %v426, %v461
    %v470 = vmul.f32 %v428, %v462
    %v471 = vmul.f32 %v430, %v463
    %v472 = vpack.c.bf16 %v465, %v464
    %v473 = vpack.c.bf16 %v467, %v466
    %v474 = vpack.c.bf16 %v469, %v468
    %v475 = vpack.c.bf16 %v471, %v470
    %v476 = vpack.c.bf16 %v291, %v288
    %v477 = vpack.c.bf16 %v299, %v296
    %v478 = vpack.c.bf16 %v307, %v304
    %v479 = vpack.c.bf16 %v315, %v312
    %s480 = scalar_lea.vmem %s2, 48
    %v481 = vld [vmem:[%s480] sm:$0xf]
    %v482 = vld [vmem:[%s480 + $0x4] sm:$0xf]
    %v483 = vld [vmem:[%s480 + $0x8] sm:$0xf]
    %v484 = vld [vmem:[%s480 + $0xc] sm:$0xf]
    %v485 = vld [vmem:[%s4 + $0x3] sm:$0x1]
    %v486 = vlaneseq
    %v487 = vshrl.u32 %v486, 7
    %v488 = vsub.s32 0, %v487
    %v489 = vrot.slane %v485, %v488
    %v494 = vunpack.c.l.b16 %v481
    %v495 = vunpack.c.l.b16 %v482
    %v496 = vunpack.c.l.b16 %v483
    %v497 = vunpack.c.l.b16 %v484
    %v498 = vpack.c.b16 %v495, %v494
    %v499 = vpack.c.b16 %v497, %v496
    %502 = vmatprep.subr.bf16.mxu0 0
    %503 = vmatpush1.bf16.msra.mxu0 %v498
    %504 = vmatprep.subr.bf16.mxu0 0
    %505 = vmatpush1.bf16.msra.mxu0 %v499
    %506 = vmatprep.subr.bf16.mxu0 0
    %507 = vmatpush1.bf16.msra.mxu0 0
    %508 = vmatprep.subr.bf16.mxu0 0
    %509 = vmatpush1.bf16.msra.mxu0 0
    %510 = vmatprep.subr.bf16.mxu0 0
    %511 = vmatpush1.bf16.msra.mxu0 0
    %512 = vmatprep.subr.bf16.mxu0 0
    %513 = vmatpush1.bf16.msra.mxu0 0
    %514 = vmatprep.subr.bf16.mxu0 0
    %515 = vmatpush1.bf16.msra.mxu0 0
    %516 = vmatprep.subr.bf16.mxu0 0
    %517 = vmatpush1.bf16.msra.mxu0 0
    %518 = vmatprep.subr.bf16.mxu0 0
    %519 = vmatpush1.bf16.msra.mxu0 0
    %520 = vmatprep.subr.bf16.mxu0 0
    %521 = vmatpush1.bf16.msra.mxu0 0
    %522 = vmatprep.subr.bf16.mxu0 0
    %523 = vmatpush1.bf16.msra.mxu0 0
    %524 = vmatprep.subr.bf16.mxu0 0
    %525 = vmatpush1.bf16.msra.mxu0 0
    %526 = vmatprep.subr.bf16.mxu0 0
    %527 = vmatpush1.bf16.msra.mxu0 0
    %528 = vmatprep.subr.bf16.mxu0 0
    %529 = vmatpush1.bf16.msra.mxu0 0
    %530 = vmatprep.subr.bf16.mxu0 0
    %531 = vmatpush1.bf16.msra.mxu0 0
    %532 = vmatprep.subr.bf16.mxu0 0
    %533 = vmatpush1.bf16.msra.mxu0 0
    %534 = vmatprep.mubr.bf16.mxu0 0
    %535 = vmatmul.mubr.bf16.gmra.mrb[0].mxu0 %v68
    %v536 = vpop.f32.mrb[0].mxu0
    %v537 = vadd.f32 %v489, %v536
    %v538 = vpop.f32.mrb[0].mxu0
    %v539 = vpop.f32.mrb[0].mxu0
    %v540 = vadd.f32 %v489, %v539
    %v541 = vpop.f32.mrb[0].mxu0
    %542 = vmatprep.mubr.bf16.mxu0 0
    %543 = vmatmul.mubr.bf16.gmra.mrb[0].mxu0 %v71
    %v544 = vpop.f32.mrb[0].mxu0
    %v545 = vadd.f32 %v489, %v544
    %v546 = vpop.f32.mrb[0].mxu0
    %v547 = vpop.f32.mrb[0].mxu0
    %v548 = vadd.f32 %v489, %v547
    %v549 = vpop.f32.mrb[0].mxu0
    %550 = vmatprep.mubr.bf16.mxu0 0
    %551 = vmatmul.mubr.bf16.gmra.mrb[0].mxu0 %v74
    %v552 = vpop.f32.mrb[0].mxu0
    %v553 = vadd.f32 %v489, %v552
    %v554 = vpop.f32.mrb[0].mxu0
    %v555 = vpop.f32.mrb[0].mxu0
    %v556 = vadd.f32 %v489, %v555
    %v557 = vpop.f32.mrb[0].mxu0
    %558 = vmatprep.mubr.bf16.mxu0 0
    %559 = vmatmul.mubr.bf16.gmra.mrb[0].mxu0 %v77
    %v560 = vpop.f32.mrb[0].mxu0
    %v561 = vadd.f32 %v489, %v560
    %v562 = vpop.f32.mrb[0].mxu0
    %v563 = vpop.f32.mrb[0].mxu0
    %v564 = vadd.f32 %v489, %v563
    %v565 = vpop.f32.mrb[0].mxu0
    %566 = vdwg.mxu0
    %s567 = scalar_lea.vmem %s2, 64
    %v568 = vld [vmem:[%s567] sm:$0xf]
    %v569 = vld [vmem:[%s567 + $0x4] sm:$0xf]
    %v570 = vld [vmem:[%s567 + $0x8] sm:$0xf]
    %v571 = vld [vmem:[%s567 + $0xc] sm:$0xf]
    %v572 = vld [vmem:[%s4 + $0x4] sm:$0x1]
    %v573 = vlaneseq
    %v574 = vshrl.u32 %v573, 7
    %v575 = vsub.s32 0, %v574
    %v576 = vrot.slane %v572, %v575
    %v581 = vunpack.c.l.b16 %v568
    %v582 = vunpack.c.l.b16 %v569
    %v583 = vunpack.c.l.b16 %v570
    %v584 = vunpack.c.l.b16 %v571
    %v585 = vpack.c.b16 %v582, %v581
    %v586 = vpack.c.b16 %v584, %v583
    %589 = vmatprep.subr.bf16.mxu0 0
    %590 = vmatpush1.bf16.msra.mxu0 %v585
    %591 = vmatprep.subr.bf16.mxu0 0
    %592 = vmatpush1.bf16.msra.mxu0 %v586
    %593 = vmatprep.subr.bf16.mxu0 0
    %594 = vmatpush1.bf16.msra.mxu0 0
    %595 = vmatprep.subr.bf16.mxu0 0
    %596 = vmatpush1.bf16.msra.mxu0 0
    %597 = vmatprep.subr.bf16.mxu0 0
    %598 = vmatpush1.bf16.msra.mxu0 0
    %599 = vmatprep.subr.bf16.mxu0 0
    %600 = vmatpush1.bf16.msra.mxu0 0
    %601 = vmatprep.subr.bf16.mxu0 0
    %602 = vmatpush1.bf16.msra.mxu0 0
    %603 = vmatprep.subr.bf16.mxu0 0
    %604 = vmatpush1.bf16.msra.mxu0 0
    %605 = vmatprep.subr.bf16.mxu0 0
    %606 = vmatpush1.bf16.msra.mxu0 0
    %607 = vmatprep.subr.bf16.mxu0 0
    %608 = vmatpush1.bf16.msra.mxu0 0
    %609 = vmatprep.subr.bf16.mxu0 0
    %610 = vmatpush1.bf16.msra.mxu0 0
    %611 = vmatprep.subr.bf16.mxu0 0
    %612 = vmatpush1.bf16.msra.mxu0 0
    %613 = vmatprep.subr.bf16.mxu0 0
    %614 = vmatpush1.bf16.msra.mxu0 0
    %615 = vmatprep.subr.bf16.mxu0 0
    %616 = vmatpush1.bf16.msra.mxu0 0
    %617 = vmatprep.subr.bf16.mxu0 0
    %618 = vmatpush1.bf16.msra.mxu0 0
    %619 = vmatprep.subr.bf16.mxu0 0
    %620 = vmatpush1.bf16.msra.mxu0 0
    %621 = vmatprep.mubr.bf16.mxu0 0
    %622 = vmatmul.mubr.bf16.gmra.mrb[0].mxu0 %v68
    %v623 = vpop.f32.mrb[0].mxu0
    %v624 = vadd.f32 %v576, %v623
    %v625 = vpop.f32.mrb[0].mxu0
    %v626 = vpop.f32.mrb[0].mxu0
    %v627 = vadd.f32 %v576, %v626
    %v628 = vpop.f32.mrb[0].mxu0
    %629 = vmatprep.mubr.bf16.mxu0 0
    %630 = vmatmul.mubr.bf16.gmra.mrb[0].mxu0 %v71
    %v631 = vpop.f32.mrb[0].mxu0
    %v632 = vadd.f32 %v576, %v631
    %v633 = vpop.f32.mrb[0].mxu0
    %v634 = vpop.f32.mrb[0].mxu0
    %v635 = vadd.f32 %v576, %v634
    %v636 = vpop.f32.mrb[0].mxu0
    %637 = vmatprep.mubr.bf16.mxu0 0
    %638 = vmatmul.mubr.bf16.gmra.mrb[0].mxu0 %v74
    %v639 = vpop.f32.mrb[0].mxu0
    %v640 = vadd.f32 %v576, %v639
    %v641 = vpop.f32.mrb[0].mxu0
    %v642 = vpop.f32.mrb[0].mxu0
    %v643 = vadd.f32 %v576, %v642
    %v644 = vpop.f32.mrb[0].mxu0
    %645 = vmatprep.mubr.bf16.mxu0 0
    %646 = vmatmul.mubr.bf16.gmra.mrb[0].mxu0 %v77
    %v647 = vpop.f32.mrb[0].mxu0
    %v648 = vadd.f32 %v576, %v647
    %v649 = vpop.f32.mrb[0].mxu0
    %v650 = vpop.f32.mrb[0].mxu0
    %v651 = vadd.f32 %v576, %v650
    %v652 = vpop.f32.mrb[0].mxu0
    %653 = vdwg.mxu0
    %s654 = scalar_lea.vmem %s2, 80
    %v655 = vld [vmem:[%s654] sm:$0xf]
    %v656 = vld [vmem:[%s654 + $0x4] sm:$0xf]
    %v657 = vld [vmem:[%s654 + $0x8] sm:$0xf]
    %v658 = vld [vmem:[%s654 + $0xc] sm:$0xf]
    %v659 = vld [vmem:[%s4 + $0x5] sm:$0x1]
    %v660 = vlaneseq
    %v661 = vshrl.u32 %v660, 7
    %v662 = vsub.s32 0, %v661
    %v663 = vrot.slane %v659, %v662
    %v668 = vunpack.c.l.b16 %v655
    %v669 = vunpack.c.l.b16 %v656
    %v670 = vunpack.c.l.b16 %v657
    %v671 = vunpack.c.l.b16 %v658
    %v672 = vpack.c.b16 %v669, %v668
    %v673 = vpack.c.b16 %v671, %v670
    %676 = vmatprep.subr.bf16.mxu0 0
    %677 = vmatpush1.bf16.msra.mxu0 %v672
    %678 = vmatprep.subr.bf16.mxu0 0
    %679 = vmatpush1.bf16.msra.mxu0 %v673
    %680 = vmatprep.subr.bf16.mxu0 0
    %681 = vmatpush1.bf16.msra.mxu0 0
    %682 = vmatprep.subr.bf16.mxu0 0
    %683 = vmatpush1.bf16.msra.mxu0 0
    %684 = vmatprep.subr.bf16.mxu0 0
    %685 = vmatpush1.bf16.msra.mxu0 0
    %686 = vmatprep.subr.bf16.mxu0 0
    %687 = vmatpush1.bf16.msra.mxu0 0
    %688 = vmatprep.subr.bf16.mxu0 0
    %689 = vmatpush1.bf16.msra.mxu0 0
    %690 = vmatprep.subr.bf16.mxu0 0
    %691 = vmatpush1.bf16.msra.mxu0 0
    %692 = vmatprep.subr.bf16.mxu0 0
    %693 = vmatpush1.bf16.msra.mxu0 0
    %694 = vmatprep.subr.bf16.mxu0 0
    %695 = vmatpush1.bf16.msra.mxu0 0
    %696 = vmatprep.subr.bf16.mxu0 0
    %697 = vmatpush1.bf16.msra.mxu0 0
    %698 = vmatprep.subr.bf16.mxu0 0
    %699 = vmatpush1.bf16.msra.mxu0 0
    %700 = vmatprep.subr.bf16.mxu0 0
    %701 = vmatpush1.bf16.msra.mxu0 0
    %702 = vmatprep.subr.bf16.mxu0 0
    %703 = vmatpush1.bf16.msra.mxu0 0
    %704 = vmatprep.subr.bf16.mxu0 0
    %705 = vmatpush1.bf16.msra.mxu0 0
    %706 = vmatprep.subr.bf16.mxu0 0
    %707 = vmatpush1.bf16.msra.mxu0 0
    %708 = vmatprep.mubr.bf16.mxu0 0
    %709 = vmatmul.mubr.bf16.gmra.mrb[0].mxu0 %v68
    %v710 = vpop.f32.mrb[0].mxu0
    %v711 = vadd.f32 %v663, %v710
    %v712 = vpop.f32.mrb[0].mxu0
    %v713 = vpop.f32.mrb[0].mxu0
    %v714 = vadd.f32 %v663, %v713
    %v715 = vpop.f32.mrb[0].mxu0
    %716 = vmatprep.mubr.bf16.mxu0 0
    %717 = vmatmul.mubr.bf16.gmra.mrb[0].mxu0 %v71
    %v718 = vpop.f32.mrb[0].mxu0
    %v719 = vadd.f32 %v663, %v718
    %v720 = vpop.f32.mrb[0].mxu0
    %v721 = vpop.f32.mrb[0].mxu0
    %v722 = vadd.f32 %v663, %v721
    %v723 = vpop.f32.mrb[0].mxu0
    %724 = vmatprep.mubr.bf16.mxu0 0
    %725 = vmatmul.mubr.bf16.gmra.mrb[0].mxu0 %v74
    %v726 = vpop.f32.mrb[0].mxu0
    %v727 = vadd.f32 %v663, %v726
    %v728 = vpop.f32.mrb[0].mxu0
    %v729 = vpop.f32.mrb[0].mxu0
    %v730 = vadd.f32 %v663, %v729
    %v731 = vpop.f32.mrb[0].mxu0
    %732 = vmatprep.mubr.bf16.mxu0 0
    %733 = vmatmul.mubr.bf16.gmra.mrb[0].mxu0 %v77
    %v734 = vpop.f32.mrb[0].mxu0
    %v735 = vadd.f32 %v663, %v734
    %v736 = vpop.f32.mrb[0].mxu0
    %v737 = vpop.f32.mrb[0].mxu0
    %v738 = vadd.f32 %v663, %v737
    %v739 = vpop.f32.mrb[0].mxu0
    %740 = vdwg.mxu0
    %v741 = vpack.c.bf16 %v540, %v537
    %v742 = vpack.c.bf16 %v548, %v545
    %v743 = vpack.c.bf16 %v556, %v553
    %v744 = vpack.c.bf16 %v564, %v561
    %v745 = vpack.c.bf16 %v627, %v624
    %v746 = vpack.c.bf16 %v635, %v632
    %v747 = vpack.c.bf16 %v643, %v640
    %v748 = vpack.c.bf16 %v651, %v648
    %v750 = vsel %vm66, %v741, 0
    %v753 = vsel %vm66, %v742, 0
    %v756 = vsel %vm66, %v743, 0
    %v759 = vsel %vm66, %v744, 0
    %v762 = vsel %vm66, %v745, 0
    %v765 = vsel %vm66, %v746, 0
    %v768 = vsel %vm66, %v747, 0
    %v771 = vsel %vm66, %v748, 0
    %773 = vmatprep.subr.bf16.mxu0 0
    %774 = vmatpush1.bf16.xpose.msra.mxu0 %v762
    %775 = vmatprep.subr.bf16.mxu0 0
    %776 = vmatpush1.bf16.xpose.msra.mxu0 %v765
    %777 = vmatprep.subr.bf16.mxu0 0
    %778 = vmatpush1.bf16.xpose.msra.mxu0 %v768
    %779 = vmatprep.subr.bf16.mxu0 0
    %780 = vmatpush1.bf16.xpose.msra.mxu0 %v771
    %781 = vmatprep.subr.bf16.mxu0 0
    %782 = vmatpush1.bf16.xpose.msra.mxu0 0
    %783 = vmatprep.subr.bf16.mxu0 0
    %784 = vmatpush1.bf16.xpose.msra.mxu0 0
    %785 = vmatprep.subr.bf16.mxu0 0
    %786 = vmatpush1.bf16.xpose.msra.mxu0 0
    %787 = vmatprep.subr.bf16.mxu0 0
    %788 = vmatpush1.bf16.xpose.msra.mxu0 0
    %789 = vmatprep.subr.bf16.mxu0 0
    %790 = vmatpush1.bf16.xpose.msra.mxu0 0
    %791 = vmatprep.subr.bf16.mxu0 0
    %792 = vmatpush1.bf16.xpose.msra.mxu0 0
    %793 = vmatprep.subr.bf16.mxu0 0
    %794 = vmatpush1.bf16.xpose.msra.mxu0 0
    %795 = vmatprep.subr.bf16.mxu0 0
    %796 = vmatpush1.bf16.xpose.msra.mxu0 0
    %797 = vmatprep.subr.bf16.mxu0 0
    %798 = vmatpush1.bf16.xpose.msra.mxu0 0
    %799 = vmatprep.subr.bf16.mxu0 0
    %800 = vmatpush1.bf16.xpose.msra.mxu0 0
    %801 = vmatprep.subr.bf16.mxu0 0
    %802 = vmatpush1.bf16.xpose.msra.mxu0 0
    %803 = vmatprep.subr.bf16.mxu0 0
    %804 = vmatpush1.bf16.xpose.msra.mxu0 0
    %805 = vmatprep.mubr.bf16.mxu0 0
    %806 = vmatmul.mubr.bf16.gmra.mrb[0].mxu0 %v750
    %v807 = vpop.f32.mrb[0].mxu0
    %v808 = vadd.f32 %v33, %v807
    %v809 = vpop.f32.mrb[0].mxu0
    %v810 = vpop.f32.mrb[0].mxu0
    %v811 = vadd.f32 %v34, %v810
    %v812 = vpop.f32.mrb[0].mxu0
    %813 = vmatprep.mubr.bf16.mxu0 0
    %814 = vmatmul.mubr.bf16.gmra.mrb[0].mxu0 %v753
    %v815 = vpop.f32.mrb[0].mxu0
    %v816 = vadd.f32 %v35, %v815
    %v817 = vpop.f32.mrb[0].mxu0
    %v818 = vpop.f32.mrb[0].mxu0
    %v819 = vadd.f32 %v36, %v818
    %v820 = vpop.f32.mrb[0].mxu0
    %821 = vmatprep.mubr.bf16.mxu0 0
    %822 = vmatmul.mubr.bf16.gmra.mrb[0].mxu0 %v756
    %v823 = vpop.f32.mrb[0].mxu0
    %v824 = vadd.f32 %v37, %v823
    %v825 = vpop.f32.mrb[0].mxu0
    %v826 = vpop.f32.mrb[0].mxu0
    %v827 = vadd.f32 %v38, %v826
    %v828 = vpop.f32.mrb[0].mxu0
    %829 = vmatprep.mubr.bf16.mxu0 0
    %830 = vmatmul.mubr.bf16.gmra.mrb[0].mxu0 %v759
    %v831 = vpop.f32.mrb[0].mxu0
    %v832 = vadd.f32 %v39, %v831
    %v833 = vpop.f32.mrb[0].mxu0
    %v834 = vpop.f32.mrb[0].mxu0
    %v835 = vadd.f32 %v40, %v834
    %v836 = vpop.f32.mrb[0].mxu0
    %837 = vdwg.mxu0
    %v838 = vmul.f32 %v808, 1.442695
    %v839 = vpow.pop %v838
    %v840 = vmul.f32 %v811, 1.442695
    %v841 = vpow.pop %v840
    %v842 = vmul.f32 %v816, 1.442695
    %v843 = vpow.pop %v842
    %v844 = vmul.f32 %v819, 1.442695
    %v845 = vpow.pop %v844
    %v846 = vmul.f32 %v824, 1.442695
    %v847 = vpow.pop %v846
    %v848 = vmul.f32 %v827, 1.442695
    %v849 = vpow.pop %v848
    %v850 = vmul.f32 %v832, 1.442695
    %v851 = vpow.pop %v850
    %v852 = vmul.f32 %v835, 1.442695
    %v853 = vpow.pop %v852
    %v854 = vsel %vm431, %v839, 0.0
    %855 = vadd.xlane.f32.xlu0 %v854
    %v856 = vpop.xlane.xlu0 %855
    %v857 = vsel %vm431, %v841, 0.0
    %858 = vadd.xlane.f32.xlu0 %v857
    %v859 = vpop.xlane.xlu0 %858
    %v860 = vsel %vm431, %v843, 0.0
    %861 = vadd.xlane.f32.xlu0 %v860
    %v862 = vpop.xlane.xlu0 %861
    %v863 = vsel %vm431, %v845, 0.0
    %864 = vadd.xlane.f32.xlu0 %v863
    %v865 = vpop.xlane.xlu0 %864
    %v866 = vsel %vm431, %v847, 0.0
    %867 = vadd.xlane.f32.xlu0 %v866
    %v868 = vpop.xlane.xlu0 %867
    %v869 = vsel %vm431, %v849, 0.0
    %870 = vadd.xlane.f32.xlu0 %v869
    %v871 = vpop.xlane.xlu0 %870
    %v872 = vsel %vm431, %v851, 0.0
    %873 = vadd.xlane.f32.xlu0 %v872
    %v874 = vpop.xlane.xlu0 %873
    %v875 = vsel %vm431, %v853, 0.0
    %876 = vadd.xlane.f32.xlu0 %v875
    %v877 = vpop.xlane.xlu0 %876
    %v878 = vrcp.pop %v856
    %v879 = vrcp.pop %v859
    %v880 = vrcp.pop %v862
    %v881 = vrcp.pop %v865
    %v882 = vrcp.pop %v868
    %v883 = vrcp.pop %v871
    %v884 = vrcp.pop %v874
    %v885 = vrcp.pop %v877
    %v886 = vmul.f32 %v839, %v878
    %v887 = vmul.f32 %v841, %v879
    %v888 = vmul.f32 %v843, %v880
    %v889 = vmul.f32 %v845, %v881
    %v890 = vmul.f32 %v847, %v882
    %v891 = vmul.f32 %v849, %v883
    %v892 = vmul.f32 %v851, %v884
    %v893 = vmul.f32 %v853, %v885
    %v894 = vpack.c.bf16 %v887, %v886
    %v895 = vpack.c.bf16 %v889, %v888
    %v896 = vpack.c.bf16 %v891, %v890
    %v897 = vpack.c.bf16 %v893, %v892
    %v898 = vpack.c.bf16 %v714, %v711
    %v899 = vpack.c.bf16 %v722, %v719
    %v900 = vpack.c.bf16 %v730, %v727
    %v901 = vpack.c.bf16 %v738, %v735
    %v903 = vsel %vm431, %v894, 0
    %v906 = vsel %vm431, %v895, 0
    %v909 = vsel %vm431, %v896, 0
    %v912 = vsel %vm431, %v897, 0
    %914 = vmatprep.subr.bf16.mxu0 0
    %915 = vmatpush1.bf16.msra.mxu0 %v898
    %916 = vmatprep.subr.bf16.mxu0 0
    %917 = vmatpush1.bf16.msra.mxu0 %v899
    %918 = vmatprep.subr.bf16.mxu0 0
    %919 = vmatpush1.bf16.msra.mxu0 %v900
    %920 = vmatprep.subr.bf16.mxu0 0
    %921 = vmatpush1.bf16.msra.mxu0 %v901
    %922 = vmatprep.subr.bf16.mxu0 0
    %923 = vmatpush1.bf16.msra.mxu0 0
    %924 = vmatprep.subr.bf16.mxu0 0
    %925 = vmatpush1.bf16.msra.mxu0 0
    %926 = vmatprep.subr.bf16.mxu0 0
    %927 = vmatpush1.bf16.msra.mxu0 0
    %928 = vmatprep.subr.bf16.mxu0 0
    %929 = vmatpush1.bf16.msra.mxu0 0
    %930 = vmatprep.subr.bf16.mxu0 0
    %931 = vmatpush1.bf16.msra.mxu0 0
    %932 = vmatprep.subr.bf16.mxu0 0
    %933 = vmatpush1.bf16.msra.mxu0 0
    %934 = vmatprep.subr.bf16.mxu0 0
    %935 = vmatpush1.bf16.msra.mxu0 0
    %936 = vmatprep.subr.bf16.mxu0 0
    %937 = vmatpush1.bf16.msra.mxu0 0
    %938 = vmatprep.subr.bf16.mxu0 0
    %939 = vmatpush1.bf16.msra.mxu0 0
    %940 = vmatprep.subr.bf16.mxu0 0
    %941 = vmatpush1.bf16.msra.mxu0 0
    %942 = vmatprep.subr.bf16.mxu0 0
    %943 = vmatpush1.bf16.msra.mxu0 0
    %944 = vmatprep.subr.bf16.mxu0 0
    %945 = vmatpush1.bf16.msra.mxu0 0
    %946 = vmatprep.mubr.bf16.mxu0 0
    %947 = vmatmul.mubr.bf16.gmra.mrb[0].mxu0 %v903
    %v948 = vpop.f32.mrb[0].mxu0
    %v949 = vadd.f32 0.0, %v948
    %v950 = vpop.f32.mrb[0].mxu0
    %v951 = vpop.f32.mrb[0].mxu0
    %v952 = vadd.f32 0.0, %v951
    %v953 = vpop.f32.mrb[0].mxu0
    %954 = vmatprep.mubr.bf16.mxu0 0
    %955 = vmatmul.mubr.bf16.gmra.mrb[0].mxu0 %v906
    %v956 = vpop.f32.mrb[0].mxu0
    %v957 = vadd.f32 0.0, %v956
    %v958 = vpop.f32.mrb[0].mxu0
    %v959 = vpop.f32.mrb[0].mxu0
    %v960 = vadd.f32 0.0, %v959
    %v961 = vpop.f32.mrb[0].mxu0
    %962 = vmatprep.mubr.bf16.mxu0 0
    %963 = vmatmul.mubr.bf16.gmra.mrb[0].mxu0 %v909
    %v964 = vpop.f32.mrb[0].mxu0
    %v965 = vadd.f32 0.0, %v964
    %v966 = vpop.f32.mrb[0].mxu0
    %v967 = vpop.f32.mrb[0].mxu0
    %v968 = vadd.f32 0.0, %v967
    %v969 = vpop.f32.mrb[0].mxu0
    %970 = vmatprep.mubr.bf16.mxu0 0
    %971 = vmatmul.mubr.bf16.gmra.mrb[0].mxu0 %v912
    %v972 = vpop.f32.mrb[0].mxu0
    %v973 = vadd.f32 0.0, %v972
    %v974 = vpop.f32.mrb[0].mxu0
    %v975 = vpop.f32.mrb[0].mxu0
    %v976 = vadd.f32 0.0, %v975
    %v977 = vpop.f32.mrb[0].mxu0
    %978 = vdwg.mxu0
    %v980 = vsel %vm431, %v472, 0
    %v983 = vsel %vm431, %v473, 0
    %v986 = vsel %vm431, %v474, 0
    %v989 = vsel %vm431, %v475, 0
    %991 = vmatprep.subr.bf16.mxu0 0
    %992 = vmatpush1.bf16.msra.mxu0 %v476
    %993 = vmatprep.subr.bf16.mxu0 0
    %994 = vmatpush1.bf16.msra.mxu0 %v477
    %995 = vmatprep.subr.bf16.mxu0 0
    %996 = vmatpush1.bf16.msra.mxu0 %v478
    %997 = vmatprep.subr.bf16.mxu0 0
    %998 = vmatpush1.bf16.msra.mxu0 %v479
    %999 = vmatprep.subr.bf16.mxu0 0
    %1000 = vmatpush1.bf16.msra.mxu0 0
    %1001 = vmatprep.subr.bf16.mxu0 0
    %1002 = vmatpush1.bf16.msra.mxu0 0
    %1003 = vmatprep.subr.bf16.mxu0 0
    %1004 = vmatpush1.bf16.msra.mxu0 0
    %1005 = vmatprep.subr.bf16.mxu0 0
    %1006 = vmatpush1.bf16.msra.mxu0 0
    %1007 = vmatprep.subr.bf16.mxu0 0
    %1008 = vmatpush1.bf16.msra.mxu0 0
    %1009 = vmatprep.subr.bf16.mxu0 0
    %1010 = vmatpush1.bf16.msra.mxu0 0
    %1011 = vmatprep.subr.bf16.mxu0 0
    %1012 = vmatpush1.bf16.msra.mxu0 0
    %1013 = vmatprep.subr.bf16.mxu0 0
    %1014 = vmatpush1.bf16.msra.mxu0 0
    %1015 = vmatprep.subr.bf16.mxu0 0
    %1016 = vmatpush1.bf16.msra.mxu0 0
    %1017 = vmatprep.subr.bf16.mxu0 0
    %1018 = vmatpush1.bf16.msra.mxu0 0
    %1019 = vmatprep.subr.bf16.mxu0 0
    %1020 = vmatpush1.bf16.msra.mxu0 0
    %1021 = vmatprep.subr.bf16.mxu0 0
    %1022 = vmatpush1.bf16.msra.mxu0 0
    %1023 = vmatprep.mubr.bf16.mxu0 0
    %1024 = vmatmul.mubr.bf16.gmra.mrb[0].mxu0 %v980
    %v1025 = vpop.f32.mrb[0].mxu0
    %v1026 = vadd.f32 %v949, %v1025
    %v1027 = vpop.f32.mrb[0].mxu0
    %v1028 = vpop.f32.mrb[0].mxu0
    %v1029 = vadd.f32 %v952, %v1028
    %v1030 = vpop.f32.mrb[0].mxu0
    %1031 = vmatprep.mubr.bf16.mxu0 0
    %1032 = vmatmul.mubr.bf16.gmra.mrb[0].mxu0 %v983
    %v1033 = vpop.f32.mrb[0].mxu0
    %v1034 = vadd.f32 %v957, %v1033
    %v1035 = vpop.f32.mrb[0].mxu0
    %v1036 = vpop.f32.mrb[0].mxu0
    %v1037 = vadd.f32 %v960, %v1036
    %v1038 = vpop.f32.mrb[0].mxu0
    %1039 = vmatprep.mubr.bf16.mxu0 0
    %1040 = vmatmul.mubr.bf16.gmra.mrb[0].mxu0 %v986
    %v1041 = vpop.f32.mrb[0].mxu0
    %v1042 = vadd.f32 %v965, %v1041
    %v1043 = vpop.f32.mrb[0].mxu0
    %v1044 = vpop.f32.mrb[0].mxu0
    %v1045 = vadd.f32 %v968, %v1044
    %v1046 = vpop.f32.mrb[0].mxu0
    %1047 = vmatprep.mubr.bf16.mxu0 0
    %1048 = vmatmul.mubr.bf16.gmra.mrb[0].mxu0 %v989
    %v1049 = vpop.f32.mrb[0].mxu0
    %v1050 = vadd.f32 %v973, %v1049
    %v1051 = vpop.f32.mrb[0].mxu0
    %v1052 = vpop.f32.mrb[0].mxu0
    %v1053 = vadd.f32 %v976, %v1052
    %v1054 = vpop.f32.mrb[0].mxu0
    %1055 = vdwg.mxu0
    %v1056 = vld [vmem:[%s4 + $0x6] sm:$0x1]
    %v1057 = vlaneseq
    %v1058 = vshrl.u32 %v1057, 7
    %v1059 = vsub.s32 0, %v1058
    %v1060 = vrot.slane %v1056, %v1059
    %v1061 = vadd.f32 %v1026, %v1060
    %v1062 = vadd.f32 %v1029, %v1060
    %v1063 = vadd.f32 %v1034, %v1060
    %v1064 = vadd.f32 %v1037, %v1060
    %v1065 = vadd.f32 %v1042, %v1060
    %v1066 = vadd.f32 %v1045, %v1060
    %v1067 = vadd.f32 %v1050, %v1060
    %v1068 = vadd.f32 %v1053, %v1060
    %v1069 = vadd.f32 %v25, %v1061
    %v1070 = vadd.f32 %v26, %v1062
    %v1071 = vadd.f32 %v27, %v1063
    %v1072 = vadd.f32 %v28, %v1064
    %v1073 = vadd.f32 %v29, %v1065
    %v1074 = vadd.f32 %v30, %v1066
    %v1075 = vadd.f32 %v31, %v1067
    %v1076 = vadd.f32 %v32, %v1068
    %v1077 = vld [vmem:[%s4 + $0x7] sm:$0x1]
    %v1078 = vld [vmem:[%s4 + $0x8] sm:$0x1]
    %v1079 = vsel %vm66, %v1069, 0.0
    %1080 = vadd.xlane.f32.xlu0 %v1079
    %v1081 = vpop.xlane.xlu0 %1080
    %v1082 = vsel %vm66, %v1070, 0.0
    %1083 = vadd.xlane.f32.xlu0 %v1082
    %v1084 = vpop.xlane.xlu0 %1083
    %v1085 = vsel %vm66, %v1071, 0.0
    %1086 = vadd.xlane.f32.xlu0 %v1085
    %v1087 = vpop.xlane.xlu0 %1086
    %v1088 = vsel %vm66, %v1072, 0.0
    %1089 = vadd.xlane.f32.xlu0 %v1088
    %v1090 = vpop.xlane.xlu0 %1089
    %v1091 = vsel %vm66, %v1073, 0.0
    %1092 = vadd.xlane.f32.xlu0 %v1091
    %v1093 = vpop.xlane.xlu0 %1092
    %v1094 = vsel %vm66, %v1074, 0.0
    %1095 = vadd.xlane.f32.xlu0 %v1094
    %v1096 = vpop.xlane.xlu0 %1095
    %v1097 = vsel %vm66, %v1075, 0.0
    %1098 = vadd.xlane.f32.xlu0 %v1097
    %v1099 = vpop.xlane.xlu0 %1098
    %v1100 = vsel %vm66, %v1076, 0.0
    %1101 = vadd.xlane.f32.xlu0 %v1100
    %v1102 = vpop.xlane.xlu0 %1101
    %v1103 = vrcp.pop 32.0
    %v1104 = vmul.f32 %v1081, %v1103
    %v1105 = vmul.f32 %v1084, %v1103
    %v1106 = vmul.f32 %v1087, %v1103
    %v1107 = vmul.f32 %v1090, %v1103
    %v1108 = vmul.f32 %v1093, %v1103
    %v1109 = vmul.f32 %v1096, %v1103
    %v1110 = vmul.f32 %v1099, %v1103
    %v1111 = vmul.f32 %v1102, %v1103
    %v1112 = vmul.f32 %v1069, %v1069
    %v1113 = vmul.f32 %v1070, %v1070
    %v1114 = vmul.f32 %v1071, %v1071
    %v1115 = vmul.f32 %v1072, %v1072
    %v1116 = vmul.f32 %v1073, %v1073
    %v1117 = vmul.f32 %v1074, %v1074
    %v1118 = vmul.f32 %v1075, %v1075
    %v1119 = vmul.f32 %v1076, %v1076
    %v1120 = vsel %vm66, %v1112, 0.0
    %1121 = vadd.xlane.f32.xlu0 %v1120
    %v1122 = vpop.xlane.xlu0 %1121
    %v1123 = vsel %vm66, %v1113, 0.0
    %1124 = vadd.xlane.f32.xlu0 %v1123
    %v1125 = vpop.xlane.xlu0 %1124
    %v1126 = vsel %vm66, %v1114, 0.0
    %1127 = vadd.xlane.f32.xlu0 %v1126
    %v1128 = vpop.xlane.xlu0 %1127
    %v1129 = vsel %vm66, %v1115, 0.0
    %1130 = vadd.xlane.f32.xlu0 %v1129
    %v1131 = vpop.xlane.xlu0 %1130
    %v1132 = vsel %vm66, %v1116, 0.0
    %1133 = vadd.xlane.f32.xlu0 %v1132
    %v1134 = vpop.xlane.xlu0 %1133
    %v1135 = vsel %vm66, %v1117, 0.0
    %1136 = vadd.xlane.f32.xlu0 %v1135
    %v1137 = vpop.xlane.xlu0 %1136
    %v1138 = vsel %vm66, %v1118, 0.0
    %1139 = vadd.xlane.f32.xlu0 %v1138
    %v1140 = vpop.xlane.xlu0 %1139
    %v1141 = vsel %vm66, %v1119, 0.0
    %1142 = vadd.xlane.f32.xlu0 %v1141
    %v1143 = vpop.xlane.xlu0 %1142
    %v1144 = vmul.f32 %v1122, %v1103
    %v1145 = vmul.f32 %v1125, %v1103
    %v1146 = vmul.f32 %v1128, %v1103
    %v1147 = vmul.f32 %v1131, %v1103
    %v1148 = vmul.f32 %v1134, %v1103
    %v1149 = vmul.f32 %v1137, %v1103
    %v1150 = vmul.f32 %v1140, %v1103
    %v1151 = vmul.f32 %v1143, %v1103
    %v1152 = vsub.f32 %v1069, %v1104
    %v1153 = vsub.f32 %v1070, %v1105
    %v1154 = vsub.f32 %v1071, %v1106
    %v1155 = vsub.f32 %v1072, %v1107
    %v1156 = vsub.f32 %v1073, %v1108
    %v1157 = vsub.f32 %v1074, %v1109
    %v1158 = vsub.f32 %v1075, %v1110
    %v1159 = vsub.f32 %v1076, %v1111
    %v1160 = vmul.f32 %v1104, %v1104
    %v1161 = vmul.f32 %v1105, %v1105
    %v1162 = vmul.f32 %v1106, %v1106
    %v1163 = vmul.f32 %v1107, %v1107
    %v1164 = vmul.f32 %v1108, %v1108
    %v1165 = vmul.f32 %v1109, %v1109
    %v1166 = vmul.f32 %v1110, %v1110
    %v1167 = vmul.f32 %v1111, %v1111
    %v1168 = vsub.f32 %v1144, %v1160
    %v1169 = vsub.f32 %v1145, %v1161
    %v1170 = vsub.f32 %v1146, %v1162
    %v1171 = vsub.f32 %v1147, %v1163
    %v1172 = vsub.f32 %v1148, %v1164
    %v1173 = vsub.f32 %v1149, %v1165
    %v1174 = vsub.f32 %v1150, %v1166
    %v1175 = vsub.f32 %v1151, %v1167
    %v1176 = vadd.f32 %v1168, 1e-05
    %v1177 = vadd.f32 %v1169, 1e-05
    %v1178 = vadd.f32 %v1170, 1e-05
    %v1179 = vadd.f32 %v1171, 1e-05
    %v1180 = vadd.f32 %v1172, 1e-05
    %v1181 = vadd.f32 %v1173, 1e-05
    %v1182 = vadd.f32 %v1174, 1e-05
    %v1183 = vadd.f32 %v1175, 1e-05
    %v1184 = vrsqrt.pop %v1176
    %v1185 = vrsqrt.pop %v1177
    %v1186 = vrsqrt.pop %v1178
    %v1187 = vrsqrt.pop %v1179
    %v1188 = vrsqrt.pop %v1180
    %v1189 = vrsqrt.pop %v1181
    %v1190 = vrsqrt.pop %v1182
    %v1191 = vrsqrt.pop %v1183
    %v1192 = vmul.f32 %v1152, %v1184
    %v1193 = vmul.f32 %v1153, %v1185
    %v1194 = vmul.f32 %v1154, %v1186
    %v1195 = vmul.f32 %v1155, %v1187
    %v1196 = vmul.f32 %v1156, %v1188
    %v1197 = vmul.f32 %v1157, %v1189
    %v1198 = vmul.f32 %v1158, %v1190
    %v1199 = vmul.f32 %v1159, %v1191
    %v1200 = vlaneseq
    %v1201 = vshrl.u32 %v1200, 7
    %v1202 = vsub.s32 0, %v1201
    %v1203 = vrot.slane %v1077, %v1202
    %v1204 = vmul.f32 %v1192, %v1203
    %v1205 = vmul.f32 %v1193, %v1203
    %v1206 = vmul.f32 %v1194, %v1203
    %v1207 = vmul.f32 %v1195, %v1203
    %v1208 = vmul.f32 %v1196, %v1203
    %v1209 = vmul.f32 %v1197, %v1203
    %v1210 = vmul.f32 %v1198, %v1203
    %v1211 = vmul.f32 %v1199, %v1203
    %v1212 = vlaneseq
    %v1213 = vshrl.u32 %v1212, 7
    %v1214 = vsub.s32 0, %v1213
    %v1215 = vrot.slane %v1078, %v1214
    %v1216 = vadd.f32 %v1204, %v1215
    %v1217 = vadd.f32 %v1205, %v1215
    %v1218 = vadd.f32 %v1206, %v1215
    %v1219 = vadd.f32 %v1207, %v1215
    %v1220 = vadd.f32 %v1208, %v1215
    %v1221 = vadd.f32 %v1209, %v1215
    %v1222 = vadd.f32 %v1210, %v1215
    %v1223 = vadd.f32 %v1211, %v1215
    %v1224 = vpack.c.bf16 %v1217, %v1216
    %v1225 = vpack.c.bf16 %v1219, %v1218
    %v1226 = vpack.c.bf16 %v1221, %v1220
    %v1227 = vpack.c.bf16 %v1223, %v1222
    %v1228 = vld [vmem:[%s3] sm:$0xf]
    %v1229 = vld [vmem:[%s3 + $0x4] sm:$0xf]
    %v1230 = vld [vmem:[%s3 + $0x8] sm:$0xf]
    %v1231 = vld [vmem:[%s3 + $0xc] sm:$0xf]
    %v1232 = vld [vmem:[%s5] sm:$0x1]
    %v1233 = vlaneseq
    %v1234 = vshrl.u32 %v1233, 7
    %v1235 = vsub.s32 0, %v1234
    %v1236 = vrot.slane %v1232, %v1235
    %v1241 = vunpack.c.l.b16 %v1228
    %v1242 = vunpack.c.l.b16 %v1229
    %v1243 = vunpack.c.l.b16 %v1230
    %v1244 = vunpack.c.l.b16 %v1231
    %v1245 = vpack.c.b16 %v1242, %v1241
    %v1246 = vpack.c.b16 %v1244, %v1243
    %v1250 = vsel %vm66, %v1224, 0
    %v1253 = vsel %vm66, %v1225, 0
    %v1256 = vsel %vm66, %v1226, 0
    %v1259 = vsel %vm66, %v1227, 0
    %1261 = vmatprep.subr.bf16.mxu0 0
    %1262 = vmatpush1.bf16.msra.mxu0 %v1245
    %1263 = vmatprep.subr.bf16.mxu0 0
    %1264 = vmatpush1.bf16.msra.mxu0 %v1246
    %1265 = vmatprep.subr.bf16.mxu0 0
    %1266 = vmatpush1.bf16.msra.mxu0 0
    %1267 = vmatprep.subr.bf16.mxu0 0
    %1268 = vmatpush1.bf16.msra.mxu0 0
    %1269 = vmatprep.subr.bf16.mxu0 0
    %1270 = vmatpush1.bf16.msra.mxu0 0
    %1271 = vmatprep.subr.bf16.mxu0 0
    %1272 = vmatpush1.bf16.msra.mxu0 0
    %1273 = vmatprep.subr.bf16.mxu0 0
    %1274 = vmatpush1.bf16.msra.mxu0 0
    %1275 = vmatprep.subr.bf16.mxu0 0
    %1276 = vmatpush1.bf16.msra.mxu0 0
    %1277 = vmatprep.subr.bf16.mxu0 0
    %1278 = vmatpush1.bf16.msra.mxu0 0
    %1279 = vmatprep.subr.bf16.mxu0 0
    %1280 = vmatpush1.bf16.msra.mxu0 0
    %1281 = vmatprep.subr.bf16.mxu0 0
    %1282 = vmatpush1.bf16.msra.mxu0 0
    %1283 = vmatprep.subr.bf16.mxu0 0
    %1284 = vmatpush1.bf16.msra.mxu0 0
    %1285 = vmatprep.subr.bf16.mxu0 0
    %1286 = vmatpush1.bf16.msra.mxu0 0
    %1287 = vmatprep.subr.bf16.mxu0 0
    %1288 = vmatpush1.bf16.msra.mxu0 0
    %1289 = vmatprep.subr.bf16.mxu0 0
    %1290 = vmatpush1.bf16.msra.mxu0 0
    %1291 = vmatprep.subr.bf16.mxu0 0
    %1292 = vmatpush1.bf16.msra.mxu0 0
    %1293 = vmatprep.mubr.bf16.mxu0 0
    %1294 = vmatmul.mubr.bf16.gmra.mrb[0].mxu0 %v1250
    %v1295 = vpop.f32.mrb[0].mxu0
    %v1296 = vadd.f32 %v1236, %v1295
    %v1297 = vpop.f32.mrb[0].mxu0
    %v1298 = vpop.f32.mrb[0].mxu0
    %v1299 = vadd.f32 %v1236, %v1298
    %v1300 = vpop.f32.mrb[0].mxu0
    %1301 = vmatprep.mubr.bf16.mxu0 0
    %1302 = vmatmul.mubr.bf16.gmra.mrb[0].mxu0 %v1253
    %v1303 = vpop.f32.mrb[0].mxu0
    %v1304 = vadd.f32 %v1236, %v1303
    %v1305 = vpop.f32.mrb[0].mxu0
    %v1306 = vpop.f32.mrb[0].mxu0
    %v1307 = vadd.f32 %v1236, %v1306
    %v1308 = vpop.f32.mrb[0].mxu0
    %1309 = vmatprep.mubr.bf16.mxu0 0
    %1310 = vmatmul.mubr.bf16.gmra.mrb[0].mxu0 %v1256
    %v1311 = vpop.f32.mrb[0].mxu0
    %v1312 = vadd.f32 %v1236, %v1311
    %v1313 = vpop.f32.mrb[0].mxu0
    %v1314 = vpop.f32.mrb[0].mxu0
    %v1315 = vadd.f32 %v1236, %v1314
    %v1316 = vpop.f32.mrb[0].mxu0
    %1317 = vmatprep.mubr.bf16.mxu0 0
    %1318 = vmatmul.mubr.bf16.gmra.mrb[0].mxu0 %v1259
    %v1319 = vpop.f32.mrb[0].mxu0
    %v1320 = vadd.f32 %v1236, %v1319
    %v1321 = vpop.f32.mrb[0].mxu0
    %v1322 = vpop.f32.mrb[0].mxu0
    %v1323 = vadd.f32 %v1236, %v1322
    %v1324 = vpop.f32.mrb[0].mxu0
    %1325 = vdwg.mxu0
    %v1326 = vmax.f32 %v1296, 0.0
    %v1327 = vmax.f32 %v1299, 0.0
    %v1328 = vmax.f32 %v1304, 0.0
    %v1329 = vmax.f32 %v1307, 0.0
    %v1330 = vmax.f32 %v1312, 0.0
    %v1331 = vmax.f32 %v1315, 0.0
    %v1332 = vmax.f32 %v1320, 0.0
    %v1333 = vmax.f32 %v1323, 0.0
    %v1334 = vpack.c.bf16 %v1327, %v1326
    %v1335 = vpack.c.bf16 %v1329, %v1328
    %v1336 = vpack.c.bf16 %v1331, %v1330
    %v1337 = vpack.c.bf16 %v1333, %v1332
    %s1338 = scalar_lea.vmem %s3, 16
    %v1339 = vld [vmem:[%s1338] sm:$0xf]
    %v1340 = vld [vmem:[%s1338 + $0x4] sm:$0xf]
    %v1341 = vld [vmem:[%s1338 + $0x8] sm:$0xf]
    %v1342 = vld [vmem:[%s1338 + $0xc] sm:$0xf]
    %v1343 = vld [vmem:[%s4 + $0x9] sm:$0x1]
    %v1344 = vlaneseq
    %v1345 = vshrl.u32 %v1344, 7
    %v1346 = vsub.s32 0, %v1345
    %v1347 = vrot.slane %v1343, %v1346
    %v1352 = vunpack.c.l.b16 %v1339
    %v1353 = vunpack.c.l.b16 %v1340
    %v1354 = vunpack.c.l.b16 %v1341
    %v1355 = vunpack.c.l.b16 %v1342
    %v1356 = vpack.c.b16 %v1353, %v1352
    %v1357 = vpack.c.b16 %v1355, %v1354
    %1360 = vmatprep.subr.bf16.mxu0 0
    %1361 = vmatpush1.bf16.xpose.msra.mxu0 %v1356
    %1362 = vmatprep.subr.bf16.mxu0 0
    %1363 = vmatpush1.bf16.xpose.msra.mxu0 %v1357
    %1364 = vmatprep.subr.bf16.mxu0 0
    %1365 = vmatpush1.bf16.xpose.msra.mxu0 0
    %1366 = vmatprep.subr.bf16.mxu0 0
    %1367 = vmatpush1.bf16.xpose.msra.mxu0 0
    %1368 = vmatprep.subr.bf16.mxu0 0
    %1369 = vmatpush1.bf16.xpose.msra.mxu0 0
    %1370 = vmatprep.subr.bf16.mxu0 0
    %1371 = vmatpush1.bf16.xpose.msra.mxu0 0
    %1372 = vmatprep.subr.bf16.mxu0 0
    %1373 = vmatpush1.bf16.xpose.msra.mxu0 0
    %1374 = vmatprep.subr.bf16.mxu0 0
    %1375 = vmatpush1.bf16.xpose.msra.mxu0 0
    %1376 = vmatprep.subr.bf16.mxu0 0
    %1377 = vmatpush1.bf16.xpose.msra.mxu0 0
    %1378 = vmatprep.subr.bf16.mxu0 0
    %1379 = vmatpush1.bf16.xpose.msra.mxu0 0
    %1380 = vmatprep.subr.bf16.mxu0 0
    %1381 = vmatpush1.bf16.xpose.msra.mxu0 0
    %1382 = vmatprep.subr.bf16.mxu0 0
    %1383 = vmatpush1.bf16.xpose.msra.mxu0 0
    %1384 = vmatprep.subr.bf16.mxu0 0
    %1385 = vmatpush1.bf16.xpose.msra.mxu0 0
    %1386 = vmatprep.subr.bf16.mxu0 0
    %1387 = vmatpush1.bf16.xpose.msra.mxu0 0
    %1388 = vmatprep.subr.bf16.mxu0 0
    %1389 = vmatpush1.bf16.xpose.msra.mxu0 0
    %1390 = vmatprep.subr.bf16.mxu0 0
    %1391 = vmatpush1.bf16.xpose.msra.mxu0 0
    %1392 = vmatprep.mubr.bf16.mxu0 0
    %1393 = vmatmul.mubr.bf16.gmra.mrb[0].mxu0 %v1334
    %v1394 = vpop.f32.mrb[0].mxu0
    %v1395 = vadd.f32 %v1347, %v1394
    %v1396 = vpop.f32.mrb[0].mxu0
    %v1397 = vpop.f32.mrb[0].mxu0
    %v1398 = vadd.f32 %v1347, %v1397
    %v1399 = vpop.f32.mrb[0].mxu0
    %1400 = vmatprep.mubr.bf16.mxu0 0
    %1401 = vmatmul.mubr.bf16.gmra.mrb[0].mxu0 %v1335
    %v1402 = vpop.f32.mrb[0].mxu0
    %v1403 = vadd.f32 %v1347, %v1402
    %v1404 = vpop.f32.mrb[0].mxu0
    %v1405 = vpop.f32.mrb[0].mxu0
    %v1406 = vadd.f32 %v1347, %v1405
    %v1407 = vpop.f32.mrb[0].mxu0
    %1408 = vmatprep.mubr.bf16.mxu0 0
    %1409 = vmatmul.mubr.bf16.gmra.mrb[0].mxu0 %v1336
    %v1410 = vpop.f32.mrb[0].mxu0
    %v1411 = vadd.f32 %v1347, %v1410
    %v1412 = vpop.f32.mrb[0].mxu0
    %v1413 = vpop.f32.mrb[0].mxu0
    %v1414 = vadd.f32 %v1347, %v1413
    %v1415 = vpop.f32.mrb[0].mxu0
    %1416 = vmatprep.mubr.bf16.mxu0 0
    %1417 = vmatmul.mubr.bf16.gmra.mrb[0].mxu0 %v1337
    %v1418 = vpop.f32.mrb[0].mxu0
    %v1419 = vadd.f32 %v1347, %v1418
    %v1420 = vpop.f32.mrb[0].mxu0
    %v1421 = vpop.f32.mrb[0].mxu0
    %v1422 = vadd.f32 %v1347, %v1421
    %v1423 = vpop.f32.mrb[0].mxu0
    %1424 = vdwg.mxu0
    %v1425 = vadd.f32 %v1216, %v1395
    %v1426 = vadd.f32 %v1217, %v1398
    %v1427 = vadd.f32 %v1218, %v1403
    %v1428 = vadd.f32 %v1219, %v1406
    %v1429 = vadd.f32 %v1220, %v1411
    %v1430 = vadd.f32 %v1221, %v1414
    %v1431 = vadd.f32 %v1222, %v1419
    %v1432 = vadd.f32 %v1223, %v1422
    %v1433 = vld [vmem:[%s4 + $0xa] sm:$0x1]
    %v1434 = vld [vmem:[%s4 + $0xb] sm:$0x1]
    %v1435 = vsel %vm66, %v1425, 0.0
    %1436 = vadd.xlane.f32.xlu0 %v1435
    %v1437 = vpop.xlane.xlu0 %1436
    %v1438 = vsel %vm66, %v1426, 0.0
    %1439 = vadd.xlane.f32.xlu0 %v1438
    %v1440 = vpop.xlane.xlu0 %1439
    %v1441 = vsel %vm66, %v1427, 0.0
    %1442 = vadd.xlane.f32.xlu0 %v1441
    %v1443 = vpop.xlane.xlu0 %1442
    %v1444 = vsel %vm66, %v1428, 0.0
    %1445 = vadd.xlane.f32.xlu0 %v1444
    %v1446 = vpop.xlane.xlu0 %1445
    %v1447 = vsel %vm66, %v1429, 0.0
    %1448 = vadd.xlane.f32.xlu0 %v1447
    %v1449 = vpop.xlane.xlu0 %1448
    %v1450 = vsel %vm66, %v1430, 0.0
    %1451 = vadd.xlane.f32.xlu0 %v1450
    %v1452 = vpop.xlane.xlu0 %1451
    %v1453 = vsel %vm66, %v1431, 0.0
    %1454 = vadd.xlane.f32.xlu0 %v1453
    %v1455 = vpop.xlane.xlu0 %1454
    %v1456 = vsel %vm66, %v1432, 0.0
    %1457 = vadd.xlane.f32.xlu0 %v1456
    %v1458 = vpop.xlane.xlu0 %1457
    %v1459 = vmul.f32 %v1437, %v1103
    %v1460 = vmul.f32 %v1440, %v1103
    %v1461 = vmul.f32 %v1443, %v1103
    %v1462 = vmul.f32 %v1446, %v1103
    %v1463 = vmul.f32 %v1449, %v1103
    %v1464 = vmul.f32 %v1452, %v1103
    %v1465 = vmul.f32 %v1455, %v1103
    %v1466 = vmul.f32 %v1458, %v1103
    %v1467 = vmul.f32 %v1425, %v1425
    %v1468 = vmul.f32 %v1426, %v1426
    %v1469 = vmul.f32 %v1427, %v1427
    %v1470 = vmul.f32 %v1428, %v1428
    %v1471 = vmul.f32 %v1429, %v1429
    %v1472 = vmul.f32 %v1430, %v1430
    %v1473 = vmul.f32 %v1431, %v1431
    %v1474 = vmul.f32 %v1432, %v1432
    %v1475 = vsel %vm66, %v1467, 0.0
    %1476 = vadd.xlane.f32.xlu0 %v1475
    %v1477 = vpop.xlane.xlu0 %1476
    %v1478 = vsel %vm66, %v1468, 0.0
    %1479 = vadd.xlane.f32.xlu0 %v1478
    %v1480 = vpop.xlane.xlu0 %1479
    %v1481 = vsel %vm66, %v1469, 0.0
    %1482 = vadd.xlane.f32.xlu0 %v1481
    %v1483 = vpop.xlane.xlu0 %1482
    %v1484 = vsel %vm66, %v1470, 0.0
    %1485 = vadd.xlane.f32.xlu0 %v1484
    %v1486 = vpop.xlane.xlu0 %1485
    %v1487 = vsel %vm66, %v1471, 0.0
    %1488 = vadd.xlane.f32.xlu0 %v1487
    %v1489 = vpop.xlane.xlu0 %1488
    %v1490 = vsel %vm66, %v1472, 0.0
    %1491 = vadd.xlane.f32.xlu0 %v1490
    %v1492 = vpop.xlane.xlu0 %1491
    %v1493 = vsel %vm66, %v1473, 0.0
    %1494 = vadd.xlane.f32.xlu0 %v1493
    %v1495 = vpop.xlane.xlu0 %1494
    %v1496 = vsel %vm66, %v1474, 0.0
    %1497 = vadd.xlane.f32.xlu0 %v1496
    %v1498 = vpop.xlane.xlu0 %1497
    %v1499 = vmul.f32 %v1477, %v1103
    %v1500 = vmul.f32 %v1480, %v1103
    %v1501 = vmul.f32 %v1483, %v1103
    %v1502 = vmul.f32 %v1486, %v1103
    %v1503 = vmul.f32 %v1489, %v1103
    %v1504 = vmul.f32 %v1492, %v1103
    %v1505 = vmul.f32 %v1495, %v1103
    %v1506 = vmul.f32 %v1498, %v1103
    %v1507 = vsub.f32 %v1425, %v1459
    %v1508 = vsub.f32 %v1426, %v1460
    %v1509 = vsub.f32 %v1427, %v1461
    %v1510 = vsub.f32 %v1428, %v1462
    %v1511 = vsub.f32 %v1429, %v1463
    %v1512 = vsub.f32 %v1430, %v1464
    %v1513 = vsub.f32 %v1431, %v1465
    %v1514 = vsub.f32 %v1432, %v1466
    %v1515 = vmul.f32 %v1459, %v1459
    %v1516 = vmul.f32 %v1460, %v1460
    %v1517 = vmul.f32 %v1461, %v1461
    %v1518 = vmul.f32 %v1462, %v1462
    %v1519 = vmul.f32 %v1463, %v1463
    %v1520 = vmul.f32 %v1464, %v1464
    %v1521 = vmul.f32 %v1465, %v1465
    %v1522 = vmul.f32 %v1466, %v1466
    %v1523 = vsub.f32 %v1499, %v1515
    %v1524 = vsub.f32 %v1500, %v1516
    %v1525 = vsub.f32 %v1501, %v1517
    %v1526 = vsub.f32 %v1502, %v1518
    %v1527 = vsub.f32 %v1503, %v1519
    %v1528 = vsub.f32 %v1504, %v1520
    %v1529 = vsub.f32 %v1505, %v1521
    %v1530 = vsub.f32 %v1506, %v1522
    %v1531 = vadd.f32 %v1523, 1e-05
    %v1532 = vadd.f32 %v1524, 1e-05
    %v1533 = vadd.f32 %v1525, 1e-05
    %v1534 = vadd.f32 %v1526, 1e-05
    %v1535 = vadd.f32 %v1527, 1e-05
    %v1536 = vadd.f32 %v1528, 1e-05
    %v1537 = vadd.f32 %v1529, 1e-05
    %v1538 = vadd.f32 %v1530, 1e-05
    %v1539 = vrsqrt.pop %v1531
    %v1540 = vrsqrt.pop %v1532
    %v1541 = vrsqrt.pop %v1533
    %v1542 = vrsqrt.pop %v1534
    %v1543 = vrsqrt.pop %v1535
    %v1544 = vrsqrt.pop %v1536
    %v1545 = vrsqrt.pop %v1537
    %v1546 = vrsqrt.pop %v1538
    %v1547 = vmul.f32 %v1507, %v1539
    %v1548 = vmul.f32 %v1508, %v1540
    %v1549 = vmul.f32 %v1509, %v1541
    %v1550 = vmul.f32 %v1510, %v1542
    %v1551 = vmul.f32 %v1511, %v1543
    %v1552 = vmul.f32 %v1512, %v1544
    %v1553 = vmul.f32 %v1513, %v1545
    %v1554 = vmul.f32 %v1514, %v1546
    %v1555 = vlaneseq
    %v1556 = vshrl.u32 %v1555, 7
    %v1557 = vsub.s32 0, %v1556
    %v1558 = vrot.slane %v1433, %v1557
    %v1559 = vmul.f32 %v1547, %v1558
    %v1560 = vmul.f32 %v1548, %v1558
    %v1561 = vmul.f32 %v1549, %v1558
    %v1562 = vmul.f32 %v1550, %v1558
    %v1563 = vmul.f32 %v1551, %v1558
    %v1564 = vmul.f32 %v1552, %v1558
    %v1565 = vmul.f32 %v1553, %v1558
    %v1566 = vmul.f32 %v1554, %v1558
    %v1567 = vlaneseq
    %v1568 = vshrl.u32 %v1567, 7
    %v1569 = vsub.s32 0, %v1568
    %v1570 = vrot.slane %v1434, %v1569
    %v1571 = vadd.f32 %v1559, %v1570
    %v1572 = vadd.f32 %v1560, %v1570
    %v1573 = vadd.f32 %v1561, %v1570
    %v1574 = vadd.f32 %v1562, %v1570
    %v1575 = vadd.f32 %v1563, %v1570
    %v1576 = vadd.f32 %v1564, %v1570
    %v1577 = vadd.f32 %v1565, %v1570
    %v1578 = vadd.f32 %v1566, %v1570
    %v1579 = vpack.c.bf16 %v1572, %v1571
    %v1580 = vpack.c.bf16 %v1574, %v1573
    %v1581 = vpack.c.bf16 %v1576, %v1575
    %v1582 = vpack.c.bf16 %v1578, %v1577
    %s1583 = scalar_lea.vmem %s2, 96
    %v1584 = vld [vmem:[%s1583] sm:$0xf]
    %v1585 = vld [vmem:[%s1583 + $0x4] sm:$0xf]
    %v1586 = vld [vmem:[%s1583 + $0x8] sm:$0xf]
    %v1587 = vld [vmem:[%s1583 + $0xc] sm:$0xf]
    %v1588 = vld [vmem:[%s4 + $0xc] sm:$0x1]
    %v1589 = vlaneseq
    %v1590 = vshrl.u32 %v1589, 7
    %v1591 = vsub.s32 0, %v1590
    %v1592 = vrot.slane %v1588, %v1591
    %v1597 = vunpack.c.l.b16 %v1584
    %v1598 = vunpack.c.l.b16 %v1585
    %v1599 = vunpack.c.l.b16 %v1586
    %v1600 = vunpack.c.l.b16 %v1587
    %v1601 = vpack.c.b16 %v1598, %v1597
    %v1602 = vpack.c.b16 %v1600, %v1599
    %v1606 = vsel %vm66, %v1579, 0
    %v1609 = vsel %vm66, %v1580, 0
    %v1612 = vsel %vm66, %v1581, 0
    %v1615 = vsel %vm66, %v1582, 0
    %1617 = vmatprep.subr.bf16.mxu0 0
    %1618 = vmatpush1.bf16.msra.mxu0 %v1601
    %1619 = vmatprep.subr.bf16.mxu0 0
    %1620 = vmatpush1.bf16.msra.mxu0 %v1602
    %1621 = vmatprep.subr.bf16.mxu0 0
    %1622 = vmatpush1.bf16.msra.mxu0 0
    %1623 = vmatprep.subr.bf16.mxu0 0
    %1624 = vmatpush1.bf16.msra.mxu0 0
    %1625 = vmatprep.subr.bf16.mxu0 0
    %1626 = vmatpush1.bf16.msra.mxu0 0
    %1627 = vmatprep.subr.bf16.mxu0 0
    %1628 = vmatpush1.bf16.msra.mxu0 0
    %1629 = vmatprep.subr.bf16.mxu0 0
    %1630 = vmatpush1.bf16.msra.mxu0 0
    %1631 = vmatprep.subr.bf16.mxu0 0
    %1632 = vmatpush1.bf16.msra.mxu0 0
    %1633 = vmatprep.subr.bf16.mxu0 0
    %1634 = vmatpush1.bf16.msra.mxu0 0
    %1635 = vmatprep.subr.bf16.mxu0 0
    %1636 = vmatpush1.bf16.msra.mxu0 0
    %1637 = vmatprep.subr.bf16.mxu0 0
    %1638 = vmatpush1.bf16.msra.mxu0 0
    %1639 = vmatprep.subr.bf16.mxu0 0
    %1640 = vmatpush1.bf16.msra.mxu0 0
    %1641 = vmatprep.subr.bf16.mxu0 0
    %1642 = vmatpush1.bf16.msra.mxu0 0
    %1643 = vmatprep.subr.bf16.mxu0 0
    %1644 = vmatpush1.bf16.msra.mxu0 0
    %1645 = vmatprep.subr.bf16.mxu0 0
    %1646 = vmatpush1.bf16.msra.mxu0 0
    %1647 = vmatprep.subr.bf16.mxu0 0
    %1648 = vmatpush1.bf16.msra.mxu0 0
    %1649 = vmatprep.mubr.bf16.mxu0 0
    %1650 = vmatmul.mubr.bf16.gmra.mrb[0].mxu0 %v1606
    %v1651 = vpop.f32.mrb[0].mxu0
    %v1652 = vadd.f32 %v1592, %v1651
    %v1653 = vpop.f32.mrb[0].mxu0
    %v1654 = vpop.f32.mrb[0].mxu0
    %v1655 = vadd.f32 %v1592, %v1654
    %v1656 = vpop.f32.mrb[0].mxu0
    %1657 = vmatprep.mubr.bf16.mxu0 0
    %1658 = vmatmul.mubr.bf16.gmra.mrb[0].mxu0 %v1609
    %v1659 = vpop.f32.mrb[0].mxu0
    %v1660 = vadd.f32 %v1592, %v1659
    %v1661 = vpop.f32.mrb[0].mxu0
    %v1662 = vpop.f32.mrb[0].mxu0
    %v1663 = vadd.f32 %v1592, %v1662
    %v1664 = vpop.f32.mrb[0].mxu0
    %1665 = vmatprep.mubr.bf16.mxu0 0
    %1666 = vmatmul.mubr.bf16.gmra.mrb[0].mxu0 %v1612
    %v1667 = vpop.f32.mrb[0].mxu0
    %v1668 = vadd.f32 %v1592, %v1667
    %v1669 = vpop.f32.mrb[0].mxu0
    %v1670 = vpop.f32.mrb[0].mxu0
    %v1671 = vadd.f32 %v1592, %v1670
    %v1672 = vpop.f32.mrb[0].mxu0
    %1673 = vmatprep.mubr.bf16.mxu0 0
    %1674 = vmatmul.mubr.bf16.gmra.mrb[0].mxu0 %v1615
    %v1675 = vpop.f32.mrb[0].mxu0
    %v1676 = vadd.f32 %v1592, %v1675
    %v1677 = vpop.f32.mrb[0].mxu0
    %v1678 = vpop.f32.mrb[0].mxu0
    %v1679 = vadd.f32 %v1592, %v1678
    %v1680 = vpop.f32.mrb[0].mxu0
    %1681 = vdwg.mxu0
    %s1682 = scalar_lea.vmem %s2, 112
    %v1683 = vld [vmem:[%s1682] sm:$0xf]
    %v1684 = vld [vmem:[%s1682 + $0x4] sm:$0xf]
    %v1685 = vld [vmem:[%s1682 + $0x8] sm:$0xf]
    %v1686 = vld [vmem:[%s1682 + $0xc] sm:$0xf]
    %v1687 = vld [vmem:[%s4 + $0xd] sm:$0x1]
    %v1688 = vlaneseq
    %v1689 = vshrl.u32 %v1688, 7
    %v1690 = vsub.s32 0, %v1689
    %v1691 = vrot.slane %v1687, %v1690
    %v1696 = vunpack.c.l.b16 %v1683
    %v1697 = vunpack.c.l.b16 %v1684
    %v1698 = vunpack.c.l.b16 %v1685
    %v1699 = vunpack.c.l.b16 %v1686
    %v1700 = vpack.c.b16 %v1697, %v1696
    %v1701 = vpack.c.b16 %v1699, %v1698
    %1704 = vmatprep.subr.bf16.mxu0 0
    %1705 = vmatpush1.bf16.msra.mxu0 %v1700
    %1706 = vmatprep.subr.bf16.mxu0 0
    %1707 = vmatpush1.bf16.msra.mxu0 %v1701
    %1708 = vmatprep.subr.bf16.mxu0 0
    %1709 = vmatpush1.bf16.msra.mxu0 0
    %1710 = vmatprep.subr.bf16.mxu0 0
    %1711 = vmatpush1.bf16.msra.mxu0 0
    %1712 = vmatprep.subr.bf16.mxu0 0
    %1713 = vmatpush1.bf16.msra.mxu0 0
    %1714 = vmatprep.subr.bf16.mxu0 0
    %1715 = vmatpush1.bf16.msra.mxu0 0
    %1716 = vmatprep.subr.bf16.mxu0 0
    %1717 = vmatpush1.bf16.msra.mxu0 0
    %1718 = vmatprep.subr.bf16.mxu0 0
    %1719 = vmatpush1.bf16.msra.mxu0 0
    %1720 = vmatprep.subr.bf16.mxu0 0
    %1721 = vmatpush1.bf16.msra.mxu0 0
    %1722 = vmatprep.subr.bf16.mxu0 0
    %1723 = vmatpush1.bf16.msra.mxu0 0
    %1724 = vmatprep.subr.bf16.mxu0 0
    %1725 = vmatpush1.bf16.msra.mxu0 0
    %1726 = vmatprep.subr.bf16.mxu0 0
    %1727 = vmatpush1.bf16.msra.mxu0 0
    %1728 = vmatprep.subr.bf16.mxu0 0
    %1729 = vmatpush1.bf16.msra.mxu0 0
    %1730 = vmatprep.subr.bf16.mxu0 0
    %1731 = vmatpush1.bf16.msra.mxu0 0
    %1732 = vmatprep.subr.bf16.mxu0 0
    %1733 = vmatpush1.bf16.msra.mxu0 0
    %1734 = vmatprep.subr.bf16.mxu0 0
    %1735 = vmatpush1.bf16.msra.mxu0 0
    %1736 = vmatprep.mubr.bf16.mxu0 0
    %1737 = vmatmul.mubr.bf16.gmra.mrb[0].mxu0 %v1606
    %v1738 = vpop.f32.mrb[0].mxu0
    %v1739 = vadd.f32 %v1691, %v1738
    %v1740 = vpop.f32.mrb[0].mxu0
    %v1741 = vpop.f32.mrb[0].mxu0
    %v1742 = vadd.f32 %v1691, %v1741
    %v1743 = vpop.f32.mrb[0].mxu0
    %1744 = vmatprep.mubr.bf16.mxu0 0
    %1745 = vmatmul.mubr.bf16.gmra.mrb[0].mxu0 %v1609
    %v1746 = vpop.f32.mrb[0].mxu0
    %v1747 = vadd.f32 %v1691, %v1746
    %v1748 = vpop.f32.mrb[0].mxu0
    %v1749 = vpop.f32.mrb[0].mxu0
    %v1750 = vadd.f32 %v1691, %v1749
    %v1751 = vpop.f32.mrb[0].mxu0
    %1752 = vmatprep.mubr.bf16.mxu0 0
    %1753 = vmatmul.mubr.bf16.gmra.mrb[0].mxu0 %v1612
    %v1754 = vpop.f32.mrb[0].mxu0
    %v1755 = vadd.f32 %v1691, %v1754
    %v1756 = vpop.f32.mrb[0].mxu0
    %v1757 = vpop.f32.mrb[0].mxu0
    %v1758 = vadd.f32 %v1691, %v1757
    %v1759 = vpop.f32.mrb[0].mxu0
    %1760 = vmatprep.mubr.bf16.mxu0 0
    %1761 = vmatmul.mubr.bf16.gmra.mrb[0].mxu0 %v1615
    %v1762 = vpop.f32.mrb[0].mxu0
    %v1763 = vadd.f32 %v1691, %v1762
    %v1764 = vpop.f32.mrb[0].mxu0
    %v1765 = vpop.f32.mrb[0].mxu0
    %v1766 = vadd.f32 %v1691, %v1765
    %v1767 = vpop.f32.mrb[0].mxu0
    %1768 = vdwg.mxu0
    %s1769 = scalar_lea.vmem %s2, 128
    %v1770 = vld [vmem:[%s1769] sm:$0xf]
    %v1771 = vld [vmem:[%s1769 + $0x4] sm:$0xf]
    %v1772 = vld [vmem:[%s1769 + $0x8] sm:$0xf]
    %v1773 = vld [vmem:[%s1769 + $0xc] sm:$0xf]
    %v1774 = vld [vmem:[%s4 + $0xe] sm:$0x1]
    %v1775 = vlaneseq
    %v1776 = vshrl.u32 %v1775, 7
    %v1777 = vsub.s32 0, %v1776
    %v1778 = vrot.slane %v1774, %v1777
    %v1783 = vunpack.c.l.b16 %v1770
    %v1784 = vunpack.c.l.b16 %v1771
    %v1785 = vunpack.c.l.b16 %v1772
    %v1786 = vunpack.c.l.b16 %v1773
    %v1787 = vpack.c.b16 %v1784, %v1783
    %v1788 = vpack.c.b16 %v1786, %v1785
    %1791 = vmatprep.subr.bf16.mxu0 0
    %1792 = vmatpush1.bf16.msra.mxu0 %v1787
    %1793 = vmatprep.subr.bf16.mxu0 0
    %1794 = vmatpush1.bf16.msra.mxu0 %v1788
    %1795 = vmatprep.subr.bf16.mxu0 0
    %1796 = vmatpush1.bf16.msra.mxu0 0
    %1797 = vmatprep.subr.bf16.mxu0 0
    %1798 = vmatpush1.bf16.msra.mxu0 0
    %1799 = vmatprep.subr.bf16.mxu0 0
    %1800 = vmatpush1.bf16.msra.mxu0 0
    %1801 = vmatprep.subr.bf16.mxu0 0
    %1802 = vmatpush1.bf16.msra.mxu0 0
    %1803 = vmatprep.subr.bf16.mxu0 0
    %1804 = vmatpush1.bf16.msra.mxu0 0
    %1805 = vmatprep.subr.bf16.mxu0 0
    %1806 = vmatpush1.bf16.msra.mxu0 0
    %1807 = vmatprep.subr.bf16.mxu0 0
    %1808 = vmatpush1.bf16.msra.mxu0 0
    %1809 = vmatprep.subr.bf16.mxu0 0
    %1810 = vmatpush1.bf16.msra.mxu0 0
    %1811 = vmatprep.subr.bf16.mxu0 0
    %1812 = vmatpush1.bf16.msra.mxu0 0
    %1813 = vmatprep.subr.bf16.mxu0 0
    %1814 = vmatpush1.bf16.msra.mxu0 0
    %1815 = vmatprep.subr.bf16.mxu0 0
    %1816 = vmatpush1.bf16.msra.mxu0 0
    %1817 = vmatprep.subr.bf16.mxu0 0
    %1818 = vmatpush1.bf16.msra.mxu0 0
    %1819 = vmatprep.subr.bf16.mxu0 0
    %1820 = vmatpush1.bf16.msra.mxu0 0
    %1821 = vmatprep.subr.bf16.mxu0 0
    %1822 = vmatpush1.bf16.msra.mxu0 0
    %1823 = vmatprep.mubr.bf16.mxu0 0
    %1824 = vmatmul.mubr.bf16.gmra.mrb[0].mxu0 %v1606
    %v1825 = vpop.f32.mrb[0].mxu0
    %v1826 = vadd.f32 %v1778, %v1825
    %v1827 = vpop.f32.mrb[0].mxu0
    %v1828 = vpop.f32.mrb[0].mxu0
    %v1829 = vadd.f32 %v1778, %v1828
    %v1830 = vpop.f32.mrb[0].mxu0
    %1831 = vmatprep.mubr.bf16.mxu0 0
    %1832 = vmatmul.mubr.bf16.gmra.mrb[0].mxu0 %v1609
    %v1833 = vpop.f32.mrb[0].mxu0
    %v1834 = vadd.f32 %v1778, %v1833
    %v1835 = vpop.f32.mrb[0].mxu0
    %v1836 = vpop.f32.mrb[0].mxu0
    %v1837 = vadd.f32 %v1778, %v1836
    %v1838 = vpop.f32.mrb[0].mxu0
    %1839 = vmatprep.mubr.bf16.mxu0 0
    %1840 = vmatmul.mubr.bf16.gmra.mrb[0].mxu0 %v1612
    %v1841 = vpop.f32.mrb[0].mxu0
    %v1842 = vadd.f32 %v1778, %v1841
    %v1843 = vpop.f32.mrb[0].mxu0
    %v1844 = vpop.f32.mrb[0].mxu0
    %v1845 = vadd.f32 %v1778, %v1844
    %v1846 = vpop.f32.mrb[0].mxu0
    %1847 = vmatprep.mubr.bf16.mxu0 0
    %1848 = vmatmul.mubr.bf16.gmra.mrb[0].mxu0 %v1615
    %v1849 = vpop.f32.mrb[0].mxu0
    %v1850 = vadd.f32 %v1778, %v1849
    %v1851 = vpop.f32.mrb[0].mxu0
    %v1852 = vpop.f32.mrb[0].mxu0
    %v1853 = vadd.f32 %v1778, %v1852
    %v1854 = vpop.f32.mrb[0].mxu0
    %1855 = vdwg.mxu0
    %v1856 = vpack.c.bf16 %v1655, %v1652
    %v1857 = vpack.c.bf16 %v1663, %v1660
    %v1858 = vpack.c.bf16 %v1671, %v1668
    %v1859 = vpack.c.bf16 %v1679, %v1676
    %v1860 = vpack.c.bf16 %v1742, %v1739
    %v1861 = vpack.c.bf16 %v1750, %v1747
    %v1862 = vpack.c.bf16 %v1758, %v1755
    %v1863 = vpack.c.bf16 %v1766, %v1763
    %v1865 = vsel %vm66, %v1856, 0
    %v1868 = vsel %vm66, %v1857, 0
    %v1871 = vsel %vm66, %v1858, 0
    %v1874 = vsel %vm66, %v1859, 0
    %v1877 = vsel %vm66, %v1860, 0
    %v1880 = vsel %vm66, %v1861, 0
    %v1883 = vsel %vm66, %v1862, 0
    %v1886 = vsel %vm66, %v1863, 0
    %1888 = vmatprep.subr.bf16.mxu0 0
    %1889 = vmatpush1.bf16.xpose.msra.mxu0 %v1877
    %1890 = vmatprep.subr.bf16.mxu0 0
    %1891 = vmatpush1.bf16.xpose.msra.mxu0 %v1880
    %1892 = vmatprep.subr.bf16.mxu0 0
    %1893 = vmatpush1.bf16.xpose.msra.mxu0 %v1883
    %1894 = vmatprep.subr.bf16.mxu0 0
    %1895 = vmatpush1.bf16.xpose.msra.mxu0 %v1886
    %1896 = vmatprep.subr.bf16.mxu0 0
    %1897 = vmatpush1.bf16.xpose.msra.mxu0 0
    %1898 = vmatprep.subr.bf16.mxu0 0
    %1899 = vmatpush1.bf16.xpose.msra.mxu0 0
    %1900 = vmatprep.subr.bf16.mxu0 0
    %1901 = vmatpush1.bf16.xpose.msra.mxu0 0
    %1902 = vmatprep.subr.bf16.mxu0 0
    %1903 = vmatpush1.bf16.xpose.msra.mxu0 0
    %1904 = vmatprep.subr.bf16.mxu0 0
    %1905 = vmatpush1.bf16.xpose.msra.mxu0 0
    %1906 = vmatprep.subr.bf16.mxu0 0
    %1907 = vmatpush1.bf16.xpose.msra.mxu0 0
    %1908 = vmatprep.subr.bf16.mxu0 0
    %1909 = vmatpush1.bf16.xpose.msra.mxu0 0
    %1910 = vmatprep.subr.bf16.mxu0 0
    %1911 = vmatpush1.bf16.xpose.msra.mxu0 0
    %1912 = vmatprep.subr.bf16.mxu0 0
    %1913 = vmatpush1.bf16.xpose.msra.mxu0 0
    %1914 = vmatprep.subr.bf16.mxu0 0
    %1915 = vmatpush1.bf16.xpose.msra.mxu0 0
    %1916 = vmatprep.subr.bf16.mxu0 0
    %1917 = vmatpush1.bf16.xpose.msra.mxu0 0
    %1918 = vmatprep.subr.bf16.mxu0 0
    %1919 = vmatpush1.bf16.xpose.msra.mxu0 0
    %1920 = vmatprep.mubr.bf16.mxu0 0
    %1921 = vmatmul.mubr.bf16.gmra.mrb[0].mxu0 %v1865
    %v1922 = vpop.f32.mrb[0].mxu0
    %v1923 = vadd.f32 %v33, %v1922
    %v1924 = vpop.f32.mrb[0].mxu0
    %v1925 = vpop.f32.mrb[0].mxu0
    %v1926 = vadd.f32 %v34, %v1925
    %v1927 = vpop.f32.mrb[0].mxu0
    %1928 = vmatprep.mubr.bf16.mxu0 0
    %1929 = vmatmul.mubr.bf16.gmra.mrb[0].mxu0 %v1868
    %v1930 = vpop.f32.mrb[0].mxu0
    %v1931 = vadd.f32 %v35, %v1930
    %v1932 = vpop.f32.mrb[0].mxu0
    %v1933 = vpop.f32.mrb[0].mxu0
    %v1934 = vadd.f32 %v36, %v1933
    %v1935 = vpop.f32.mrb[0].mxu0
    %1936 = vmatprep.mubr.bf16.mxu0 0
    %1937 = vmatmul.mubr.bf16.gmra.mrb[0].mxu0 %v1871
    %v1938 = vpop.f32.mrb[0].mxu0
    %v1939 = vadd.f32 %v37, %v1938
    %v1940 = vpop.f32.mrb[0].mxu0
    %v1941 = vpop.f32.mrb[0].mxu0
    %v1942 = vadd.f32 %v38, %v1941
    %v1943 = vpop.f32.mrb[0].mxu0
    %1944 = vmatprep.mubr.bf16.mxu0 0
    %1945 = vmatmul.mubr.bf16.gmra.mrb[0].mxu0 %v1874
    %v1946 = vpop.f32.mrb[0].mxu0
    %v1947 = vadd.f32 %v39, %v1946
    %v1948 = vpop.f32.mrb[0].mxu0
    %v1949 = vpop.f32.mrb[0].mxu0
    %v1950 = vadd.f32 %v40, %v1949
    %v1951 = vpop.f32.mrb[0].mxu0
    %1952 = vdwg.mxu0
    %v1953 = vmul.f32 %v1923, 1.442695
    %v1954 = vpow.pop %v1953
    %v1955 = vmul.f32 %v1926, 1.442695
    %v1956 = vpow.pop %v1955
    %v1957 = vmul.f32 %v1931, 1.442695
    %v1958 = vpow.pop %v1957
    %v1959 = vmul.f32 %v1934, 1.442695
    %v1960 = vpow.pop %v1959
    %v1961 = vmul.f32 %v1939, 1.442695
    %v1962 = vpow.pop %v1961
    %v1963 = vmul.f32 %v1942, 1.442695
    %v1964 = vpow.pop %v1963
    %v1965 = vmul.f32 %v1947, 1.442695
    %v1966 = vpow.pop %v1965
    %v1967 = vmul.f32 %v1950, 1.442695
    %v1968 = vpow.pop %v1967
    %v1969 = vsel %vm431, %v1954, 0.0
    %1970 = vadd.xlane.f32.xlu0 %v1969
    %v1971 = vpop.xlane.xlu0 %1970
    %v1972 = vsel %vm431, %v1956, 0.0
    %1973 = vadd.xlane.f32.xlu0 %v1972
    %v1974 = vpop.xlane.xlu0 %1973
    %v1975 = vsel %vm431, %v1958, 0.0
    %1976 = vadd.xlane.f32.xlu0 %v1975
    %v1977 = vpop.xlane.xlu0 %1976
    %v1978 = vsel %vm431, %v1960, 0.0
    %1979 = vadd.xlane.f32.xlu0 %v1978
    %v1980 = vpop.xlane.xlu0 %1979
    %v1981 = vsel %vm431, %v1962, 0.0
    %1982 = vadd.xlane.f32.xlu0 %v1981
    %v1983 = vpop.xlane.xlu0 %1982
    %v1984 = vsel %vm431, %v1964, 0.0
    %1985 = vadd.xlane.f32.xlu0 %v1984
    %v1986 = vpop.xlane.xlu0 %1985
    %v1987 = vsel %vm431, %v1966, 0.0
    %1988 = vadd.xlane.f32.xlu0 %v1987
    %v1989 = vpop.xlane.xlu0 %1988
    %v1990 = vsel %vm431, %v1968, 0.0
    %1991 = vadd.xlane.f32.xlu0 %v1990
    %v1992 = vpop.xlane.xlu0 %1991
    %v1993 = vrcp.pop %v1971
    %v1994 = vrcp.pop %v1974
    %v1995 = vrcp.pop %v1977
    %v1996 = vrcp.pop %v1980
    %v1997 = vrcp.pop %v1983
    %v1998 = vrcp.pop %v1986
    %v1999 = vrcp.pop %v1989
    %v2000 = vrcp.pop %v1992
    %v2001 = vmul.f32 %v1954, %v1993
    %v2002 = vmul.f32 %v1956, %v1994
    %v2003 = vmul.f32 %v1958, %v1995
    %v2004 = vmul.f32 %v1960, %v1996
    %v2005 = vmul.f32 %v1962, %v1997
    %v2006 = vmul.f32 %v1964, %v1998
    %v2007 = vmul.f32 %v1966, %v1999
    %v2008 = vmul.f32 %v1968, %v2000
    %v2009 = vpack.c.bf16 %v2002, %v2001
    %v2010 = vpack.c.bf16 %v2004, %v2003
    %v2011 = vpack.c.bf16 %v2006, %v2005
    %v2012 = vpack.c.bf16 %v2008, %v2007
    %v2013 = vpack.c.bf16 %v1829, %v1826
    %v2014 = vpack.c.bf16 %v1837, %v1834
    %v2015 = vpack.c.bf16 %v1845, %v1842
    %v2016 = vpack.c.bf16 %v1853, %v1850
    %s2017 = scalar_lea.vmem %s2, 144
    %v2018 = vld [vmem:[%s2017] sm:$0xf]
    %v2019 = vld [vmem:[%s2017 + $0x4] sm:$0xf]
    %v2020 = vld [vmem:[%s2017 + $0x8] sm:$0xf]
    %v2021 = vld [vmem:[%s2017 + $0xc] sm:$0xf]
    %v2022 = vld [vmem:[%s4 + $0xf] sm:$0x1]
    %v2023 = vlaneseq
    %v2024 = vshrl.u32 %v2023, 7
    %v2025 = vsub.s32 0, %v2024
    %v2026 = vrot.slane %v2022, %v2025
    %v2031 = vunpack.c.l.b16 %v2018
    %v2032 = vunpack.c.l.b16 %v2019
    %v2033 = vunpack.c.l.b16 %v2020
    %v2034 = vunpack.c.l.b16 %v2021
    %v2035 = vpack.c.b16 %v2032, %v2031
    %v2036 = vpack.c.b16 %v2034, %v2033
    %2039 = vmatprep.subr.bf16.mxu0 0
    %2040 = vmatpush1.bf16.msra.mxu0 %v2035
    %2041 = vmatprep.subr.bf16.mxu0 0
    %2042 = vmatpush1.bf16.msra.mxu0 %v2036
    %2043 = vmatprep.subr.bf16.mxu0 0
    %2044 = vmatpush1.bf16.msra.mxu0 0
    %2045 = vmatprep.subr.bf16.mxu0 0
    %2046 = vmatpush1.bf16.msra.mxu0 0
    %2047 = vmatprep.subr.bf16.mxu0 0
    %2048 = vmatpush1.bf16.msra.mxu0 0
    %2049 = vmatprep.subr.bf16.mxu0 0
    %2050 = vmatpush1.bf16.msra.mxu0 0
    %2051 = vmatprep.subr.bf16.mxu0 0
    %2052 = vmatpush1.bf16.msra.mxu0 0
    %2053 = vmatprep.subr.bf16.mxu0 0
    %2054 = vmatpush1.bf16.msra.mxu0 0
    %2055 = vmatprep.subr.bf16.mxu0 0
    %2056 = vmatpush1.bf16.msra.mxu0 0
    %2057 = vmatprep.subr.bf16.mxu0 0
    %2058 = vmatpush1.bf16.msra.mxu0 0
    %2059 = vmatprep.subr.bf16.mxu0 0
    %2060 = vmatpush1.bf16.msra.mxu0 0
    %2061 = vmatprep.subr.bf16.mxu0 0
    %2062 = vmatpush1.bf16.msra.mxu0 0
    %2063 = vmatprep.subr.bf16.mxu0 0
    %2064 = vmatpush1.bf16.msra.mxu0 0
    %2065 = vmatprep.subr.bf16.mxu0 0
    %2066 = vmatpush1.bf16.msra.mxu0 0
    %2067 = vmatprep.subr.bf16.mxu0 0
    %2068 = vmatpush1.bf16.msra.mxu0 0
    %2069 = vmatprep.subr.bf16.mxu0 0
    %2070 = vmatpush1.bf16.msra.mxu0 0
    %2071 = vmatprep.mubr.bf16.mxu0 0
    %2072 = vmatmul.mubr.bf16.gmra.mrb[0].mxu0 %v1606
    %v2073 = vpop.f32.mrb[0].mxu0
    %v2074 = vadd.f32 %v2026, %v2073
    %v2075 = vpop.f32.mrb[0].mxu0
    %v2076 = vpop.f32.mrb[0].mxu0
    %v2077 = vadd.f32 %v2026, %v2076
    %v2078 = vpop.f32.mrb[0].mxu0
    %2079 = vmatprep.mubr.bf16.mxu0 0
    %2080 = vmatmul.mubr.bf16.gmra.mrb[0].mxu0 %v1609
    %v2081 = vpop.f32.mrb[0].mxu0
    %v2082 = vadd.f32 %v2026, %v2081
    %v2083 = vpop.f32.mrb[0].mxu0
    %v2084 = vpop.f32.mrb[0].mxu0
    %v2085 = vadd.f32 %v2026, %v2084
    %v2086 = vpop.f32.mrb[0].mxu0
    %2087 = vmatprep.mubr.bf16.mxu0 0
    %2088 = vmatmul.mubr.bf16.gmra.mrb[0].mxu0 %v1612
    %v2089 = vpop.f32.mrb[0].mxu0
    %v2090 = vadd.f32 %v2026, %v2089
    %v2091 = vpop.f32.mrb[0].mxu0
    %v2092 = vpop.f32.mrb[0].mxu0
    %v2093 = vadd.f32 %v2026, %v2092
    %v2094 = vpop.f32.mrb[0].mxu0
    %2095 = vmatprep.mubr.bf16.mxu0 0
    %2096 = vmatmul.mubr.bf16.gmra.mrb[0].mxu0 %v1615
    %v2097 = vpop.f32.mrb[0].mxu0
    %v2098 = vadd.f32 %v2026, %v2097
    %v2099 = vpop.f32.mrb[0].mxu0
    %v2100 = vpop.f32.mrb[0].mxu0
    %v2101 = vadd.f32 %v2026, %v2100
    %v2102 = vpop.f32.mrb[0].mxu0
    %2103 = vdwg.mxu0
    %s2104 = scalar_lea.vmem %s2, 160
    %v2105 = vld [vmem:[%s2104] sm:$0xf]
    %v2106 = vld [vmem:[%s2104 + $0x4] sm:$0xf]
    %v2107 = vld [vmem:[%s2104 + $0x8] sm:$0xf]
    %v2108 = vld [vmem:[%s2104 + $0xc] sm:$0xf]
    %v2109 = vld [vmem:[%s4 + $0x10] sm:$0x1]
    %v2110 = vlaneseq
    %v2111 = vshrl.u32 %v2110, 7
    %v2112 = vsub.s32 0, %v2111
    %v2113 = vrot.slane %v2109, %v2112
    %v2118 = vunpack.c.l.b16 %v2105
    %v2119 = vunpack.c.l.b16 %v2106
    %v2120 = vunpack.c.l.b16 %v2107
    %v2121 = vunpack.c.l.b16 %v2108
    %v2122 = vpack.c.b16 %v2119, %v2118
    %v2123 = vpack.c.b16 %v2121, %v2120
    %2126 = vmatprep.subr.bf16.mxu0 0
    %2127 = vmatpush1.bf16.msra.mxu0 %v2122
    %2128 = vmatprep.subr.bf16.mxu0 0
    %2129 = vmatpush1.bf16.msra.mxu0 %v2123
    %2130 = vmatprep.subr.bf16.mxu0 0
    %2131 = vmatpush1.bf16.msra.mxu0 0
    %2132 = vmatprep.subr.bf16.mxu0 0
    %2133 = vmatpush1.bf16.msra.mxu0 0
    %2134 = vmatprep.subr.bf16.mxu0 0
    %2135 = vmatpush1.bf16.msra.mxu0 0
    %2136 = vmatprep.subr.bf16.mxu0 0
    %2137 = vmatpush1.bf16.msra.mxu0 0
    %2138 = vmatprep.subr.bf16.mxu0 0
    %2139 = vmatpush1.bf16.msra.mxu0 0
    %2140 = vmatprep.subr.bf16.mxu0 0
    %2141 = vmatpush1.bf16.msra.mxu0 0
    %2142 = vmatprep.subr.bf16.mxu0 0
    %2143 = vmatpush1.bf16.msra.mxu0 0
    %2144 = vmatprep.subr.bf16.mxu0 0
    %2145 = vmatpush1.bf16.msra.mxu0 0
    %2146 = vmatprep.subr.bf16.mxu0 0
    %2147 = vmatpush1.bf16.msra.mxu0 0
    %2148 = vmatprep.subr.bf16.mxu0 0
    %2149 = vmatpush1.bf16.msra.mxu0 0
    %2150 = vmatprep.subr.bf16.mxu0 0
    %2151 = vmatpush1.bf16.msra.mxu0 0
    %2152 = vmatprep.subr.bf16.mxu0 0
    %2153 = vmatpush1.bf16.msra.mxu0 0
    %2154 = vmatprep.subr.bf16.mxu0 0
    %2155 = vmatpush1.bf16.msra.mxu0 0
    %2156 = vmatprep.subr.bf16.mxu0 0
    %2157 = vmatpush1.bf16.msra.mxu0 0
    %2158 = vmatprep.mubr.bf16.mxu0 0
    %2159 = vmatmul.mubr.bf16.gmra.mrb[0].mxu0 %v1606
    %v2160 = vpop.f32.mrb[0].mxu0
    %v2161 = vadd.f32 %v2113, %v2160
    %v2162 = vpop.f32.mrb[0].mxu0
    %v2163 = vpop.f32.mrb[0].mxu0
    %v2164 = vadd.f32 %v2113, %v2163
    %v2165 = vpop.f32.mrb[0].mxu0
    %2166 = vmatprep.mubr.bf16.mxu0 0
    %2167 = vmatmul.mubr.bf16.gmra.mrb[0].mxu0 %v1609
    %v2168 = vpop.f32.mrb[0].mxu0
    %v2169 = vadd.f32 %v2113, %v2168
    %v2170 = vpop.f32.mrb[0].mxu0
    %v2171 = vpop.f32.mrb[0].mxu0
    %v2172 = vadd.f32 %v2113, %v2171
    %v2173 = vpop.f32.mrb[0].mxu0
    %2174 = vmatprep.mubr.bf16.mxu0 0
    %2175 = vmatmul.mubr.bf16.gmra.mrb[0].mxu0 %v1612
    %v2176 = vpop.f32.mrb[0].mxu0
    %v2177 = vadd.f32 %v2113, %v2176
    %v2178 = vpop.f32.mrb[0].mxu0
    %v2179 = vpop.f32.mrb[0].mxu0
    %v2180 = vadd.f32 %v2113, %v2179
    %v2181 = vpop.f32.mrb[0].mxu0
    %2182 = vmatprep.mubr.bf16.mxu0 0
    %2183 = vmatmul.mubr.bf16.gmra.mrb[0].mxu0 %v1615
    %v2184 = vpop.f32.mrb[0].mxu0
    %v2185 = vadd.f32 %v2113, %v2184
    %v2186 = vpop.f32.mrb[0].mxu0
    %v2187 = vpop.f32.mrb[0].mxu0
    %v2188 = vadd.f32 %v2113, %v2187
    %v2189 = vpop.f32.mrb[0].mxu0
    %2190 = vdwg.mxu0
    %s2191 = scalar_lea.vmem %s2, 176
    %v2192 = vld [vmem:[%s2191] sm:$0xf]
    %v2193 = vld [vmem:[%s2191 + $0x4] sm:$0xf]
    %v2194 = vld [vmem:[%s2191 + $0x8] sm:$0xf]
    %v2195 = vld [vmem:[%s2191 + $0xc] sm:$0xf]
    %v2196 = vld [vmem:[%s4 + $0x11] sm:$0x1]
    %v2197 = vlaneseq
    %v2198 = vshrl.u32 %v2197, 7
    %v2199 = vsub.s32 0, %v2198
    %v2200 = vrot.slane %v2196, %v2199
    %v2205 = vunpack.c.l.b16 %v2192
    %v2206 = vunpack.c.l.b16 %v2193
    %v2207 = vunpack.c.l.b16 %v2194
    %v2208 = vunpack.c.l.b16 %v2195
    %v2209 = vpack.c.b16 %v2206, %v2205
    %v2210 = vpack.c.b16 %v2208, %v2207
    %2213 = vmatprep.subr.bf16.mxu0 0
    %2214 = vmatpush1.bf16.msra.mxu0 %v2209
    %2215 = vmatprep.subr.bf16.mxu0 0
    %2216 = vmatpush1.bf16.msra.mxu0 %v2210
    %2217 = vmatprep.subr.bf16.mxu0 0
    %2218 = vmatpush1.bf16.msra.mxu0 0
    %2219 = vmatprep.subr.bf16.mxu0 0
    %2220 = vmatpush1.bf16.msra.mxu0 0
    %2221 = vmatprep.subr.bf16.mxu0 0
    %2222 = vmatpush1.bf16.msra.mxu0 0
    %2223 = vmatprep.subr.bf16.mxu0 0
    %2224 = vmatpush1.bf16.msra.mxu0 0
    %2225 = vmatprep.subr.bf16.mxu0 0
    %2226 = vmatpush1.bf16.msra.mxu0 0
    %2227 = vmatprep.subr.bf16.mxu0 0
    %2228 = vmatpush1.bf16.msra.mxu0 0
    %2229 = vmatprep.subr.bf16.mxu0 0
    %2230 = vmatpush1.bf16.msra.mxu0 0
    %2231 = vmatprep.subr.bf16.mxu0 0
    %2232 = vmatpush1.bf16.msra.mxu0 0
    %2233 = vmatprep.subr.bf16.mxu0 0
    %2234 = vmatpush1.bf16.msra.mxu0 0
    %2235 = vmatprep.subr.bf16.mxu0 0
    %2236 = vmatpush1.bf16.msra.mxu0 0
    %2237 = vmatprep.subr.bf16.mxu0 0
    %2238 = vmatpush1.bf16.msra.mxu0 0
    %2239 = vmatprep.subr.bf16.mxu0 0
    %2240 = vmatpush1.bf16.msra.mxu0 0
    %2241 = vmatprep.subr.bf16.mxu0 0
    %2242 = vmatpush1.bf16.msra.mxu0 0
    %2243 = vmatprep.subr.bf16.mxu0 0
    %2244 = vmatpush1.bf16.msra.mxu0 0
    %2245 = vmatprep.mubr.bf16.mxu0 0
    %2246 = vmatmul.mubr.bf16.gmra.mrb[0].mxu0 %v1606
    %v2247 = vpop.f32.mrb[0].mxu0
    %v2248 = vadd.f32 %v2200, %v2247
    %v2249 = vpop.f32.mrb[0].mxu0
    %v2250 = vpop.f32.mrb[0].mxu0
    %v2251 = vadd.f32 %v2200, %v2250
    %v2252 = vpop.f32.mrb[0].mxu0
    %2253 = vmatprep.mubr.bf16.mxu0 0
    %2254 = vmatmul.mubr.bf16.gmra.mrb[0].mxu0 %v1609
    %v2255 = vpop.f32.mrb[0].mxu0
    %v2256 = vadd.f32 %v2200, %v2255
    %v2257 = vpop.f32.mrb[0].mxu0
    %v2258 = vpop.f32.mrb[0].mxu0
    %v2259 = vadd.f32 %v2200, %v2258
    %v2260 = vpop.f32.mrb[0].mxu0
    %2261 = vmatprep.mubr.bf16.mxu0 0
    %2262 = vmatmul.mubr.bf16.gmra.mrb[0].mxu0 %v1612
    %v2263 = vpop.f32.mrb[0].mxu0
    %v2264 = vadd.f32 %v2200, %v2263
    %v2265 = vpop.f32.mrb[0].mxu0
    %v2266 = vpop.f32.mrb[0].mxu0
    %v2267 = vadd.f32 %v2200, %v2266
    %v2268 = vpop.f32.mrb[0].mxu0
    %2269 = vmatprep.mubr.bf16.mxu0 0
    %2270 = vmatmul.mubr.bf16.gmra.mrb[0].mxu0 %v1615
    %v2271 = vpop.f32.mrb[0].mxu0
    %v2272 = vadd.f32 %v2200, %v2271
    %v2273 = vpop.f32.mrb[0].mxu0
    %v2274 = vpop.f32.mrb[0].mxu0
    %v2275 = vadd.f32 %v2200, %v2274
    %v2276 = vpop.f32.mrb[0].mxu0
    %2277 = vdwg.mxu0
    %v2278 = vpack.c.bf16 %v2077, %v2074
    %v2279 = vpack.c.bf16 %v2085, %v2082
    %v2280 = vpack.c.bf16 %v2093, %v2090
    %v2281 = vpack.c.bf16 %v2101, %v2098
    %v2282 = vpack.c.bf16 %v2164, %v2161
    %v2283 = vpack.c.bf16 %v2172, %v2169
    %v2284 = vpack.c.bf16 %v2180, %v2177
    %v2285 = vpack.c.bf16 %v2188, %v2185
    %v2287 = vsel %vm66, %v2278, 0
    %v2290 = vsel %vm66, %v2279, 0
    %v2293 = vsel %vm66, %v2280, 0
    %v2296 = vsel %vm66, %v2281, 0
    %v2299 = vsel %vm66, %v2282, 0
    %v2302 = vsel %vm66, %v2283, 0
    %v2305 = vsel %vm66, %v2284, 0
    %v2308 = vsel %vm66, %v2285, 0
    %2310 = vmatprep.subr.bf16.mxu0 0
    %2311 = vmatpush1.bf16.xpose.msra.mxu0 %v2299
    %2312 = vmatprep.subr.bf16.mxu0 0
    %2313 = vmatpush1.bf16.xpose.msra.mxu0 %v2302
    %2314 = vmatprep.subr.bf16.mxu0 0
    %2315 = vmatpush1.bf16.xpose.msra.mxu0 %v2305
    %2316 = vmatprep.subr.bf16.mxu0 0
    %2317 = vmatpush1.bf16.xpose.msra.mxu0 %v2308
    %2318 = vmatprep.subr.bf16.mxu0 0
    %2319 = vmatpush1.bf16.xpose.msra.mxu0 0
    %2320 = vmatprep.subr.bf16.mxu0 0
    %2321 = vmatpush1.bf16.xpose.msra.mxu0 0
    %2322 = vmatprep.subr.bf16.mxu0 0
    %2323 = vmatpush1.bf16.xpose.msra.mxu0 0
    %2324 = vmatprep.subr.bf16.mxu0 0
    %2325 = vmatpush1.bf16.xpose.msra.mxu0 0
    %2326 = vmatprep.subr.bf16.mxu0 0
    %2327 = vmatpush1.bf16.xpose.msra.mxu0 0
    %2328 = vmatprep.subr.bf16.mxu0 0
    %2329 = vmatpush1.bf16.xpose.msra.mxu0 0
    %2330 = vmatprep.subr.bf16.mxu0 0
    %2331 = vmatpush1.bf16.xpose.msra.mxu0 0
    %2332 = vmatprep.subr.bf16.mxu0 0
    %2333 = vmatpush1.bf16.xpose.msra.mxu0 0
    %2334 = vmatprep.subr.bf16.mxu0 0
    %2335 = vmatpush1.bf16.xpose.msra.mxu0 0
    %2336 = vmatprep.subr.bf16.mxu0 0
    %2337 = vmatpush1.bf16.xpose.msra.mxu0 0
    %2338 = vmatprep.subr.bf16.mxu0 0
    %2339 = vmatpush1.bf16.xpose.msra.mxu0 0
    %2340 = vmatprep.subr.bf16.mxu0 0
    %2341 = vmatpush1.bf16.xpose.msra.mxu0 0
    %2342 = vmatprep.mubr.bf16.mxu0 0
    %2343 = vmatmul.mubr.bf16.gmra.mrb[0].mxu0 %v2287
    %v2344 = vpop.f32.mrb[0].mxu0
    %v2345 = vadd.f32 %v33, %v2344
    %v2346 = vpop.f32.mrb[0].mxu0
    %v2347 = vpop.f32.mrb[0].mxu0
    %v2348 = vadd.f32 %v34, %v2347
    %v2349 = vpop.f32.mrb[0].mxu0
    %2350 = vmatprep.mubr.bf16.mxu0 0
    %2351 = vmatmul.mubr.bf16.gmra.mrb[0].mxu0 %v2290
    %v2352 = vpop.f32.mrb[0].mxu0
    %v2353 = vadd.f32 %v35, %v2352
    %v2354 = vpop.f32.mrb[0].mxu0
    %v2355 = vpop.f32.mrb[0].mxu0
    %v2356 = vadd.f32 %v36, %v2355
    %v2357 = vpop.f32.mrb[0].mxu0
    %2358 = vmatprep.mubr.bf16.mxu0 0
    %2359 = vmatmul.mubr.bf16.gmra.mrb[0].mxu0 %v2293
    %v2360 = vpop.f32.mrb[0].mxu0
    %v2361 = vadd.f32 %v37, %v2360
    %v2362 = vpop.f32.mrb[0].mxu0
    %v2363 = vpop.f32.mrb[0].mxu0
    %v2364 = vadd.f32 %v38, %v2363
    %v2365 = vpop.f32.mrb[0].mxu0
    %2366 = vmatprep.mubr.bf16.mxu0 0
    %2367 = vmatmul.mubr.bf16.gmra.mrb[0].mxu0 %v2296
    %v2368 = vpop.f32.mrb[0].mxu0
    %v2369 = vadd.f32 %v39, %v2368
    %v2370 = vpop.f32.mrb[0].mxu0
    %v2371 = vpop.f32.mrb[0].mxu0
    %v2372 = vadd.f32 %v40, %v2371
    %v2373 = vpop.f32.mrb[0].mxu0
    %2374 = vdwg.mxu0
    %v2375 = vmul.f32 %v2345, 1.442695
    %v2376 = vpow.pop %v2375
    %v2377 = vmul.f32 %v2348, 1.442695
    %v2378 = vpow.pop %v2377
    %v2379 = vmul.f32 %v2353, 1.442695
    %v2380 = vpow.pop %v2379
    %v2381 = vmul.f32 %v2356, 1.442695
    %v2382 = vpow.pop %v2381
    %v2383 = vmul.f32 %v2361, 1.442695
    %v2384 = vpow.pop %v2383
    %v2385 = vmul.f32 %v2364, 1.442695
    %v2386 = vpow.pop %v2385
    %v2387 = vmul.f32 %v2369, 1.442695
    %v2388 = vpow.pop %v2387
    %v2389 = vmul.f32 %v2372, 1.442695
    %v2390 = vpow.pop %v2389
    %v2391 = vsel %vm431, %v2376, 0.0
    %2392 = vadd.xlane.f32.xlu0 %v2391
    %v2393 = vpop.xlane.xlu0 %2392
    %v2394 = vsel %vm431, %v2378, 0.0
    %2395 = vadd.xlane.f32.xlu0 %v2394
    %v2396 = vpop.xlane.xlu0 %2395
    %v2397 = vsel %vm431, %v2380, 0.0
    %2398 = vadd.xlane.f32.xlu0 %v2397
    %v2399 = vpop.xlane.xlu0 %2398
    %v2400 = vsel %vm431, %v2382, 0.0
    %2401 = vadd.xlane.f32.xlu0 %v2400
    %v2402 = vpop.xlane.xlu0 %2401
    %v2403 = vsel %vm431, %v2384, 0.0
    %2404 = vadd.xlane.f32.xlu0 %v2403
    %v2405 = vpop.xlane.xlu0 %2404
    %v2406 = vsel %vm431, %v2386, 0.0
    %2407 = vadd.xlane.f32.xlu0 %v2406
    %v2408 = vpop.xlane.xlu0 %2407
    %v2409 = vsel %vm431, %v2388, 0.0
    %2410 = vadd.xlane.f32.xlu0 %v2409
    %v2411 = vpop.xlane.xlu0 %2410
    %v2412 = vsel %vm431, %v2390, 0.0
    %2413 = vadd.xlane.f32.xlu0 %v2412
    %v2414 = vpop.xlane.xlu0 %2413
    %v2415 = vrcp.pop %v2393
    %v2416 = vrcp.pop %v2396
    %v2417 = vrcp.pop %v2399
    %v2418 = vrcp.pop %v2402
    %v2419 = vrcp.pop %v2405
    %v2420 = vrcp.pop %v2408
    %v2421 = vrcp.pop %v2411
    %v2422 = vrcp.pop %v2414
    %v2423 = vmul.f32 %v2376, %v2415
    %v2424 = vmul.f32 %v2378, %v2416
    %v2425 = vmul.f32 %v2380, %v2417
    %v2426 = vmul.f32 %v2382, %v2418
    %v2427 = vmul.f32 %v2384, %v2419
    %v2428 = vmul.f32 %v2386, %v2420
    %v2429 = vmul.f32 %v2388, %v2421
    %v2430 = vmul.f32 %v2390, %v2422
    %v2431 = vpack.c.bf16 %v2424, %v2423
    %v2432 = vpack.c.bf16 %v2426, %v2425
    %v2433 = vpack.c.bf16 %v2428, %v2427
    %v2434 = vpack.c.bf16 %v2430, %v2429
    %v2435 = vpack.c.bf16 %v2251, %v2248
    %v2436 = vpack.c.bf16 %v2259, %v2256
    %v2437 = vpack.c.bf16 %v2267, %v2264
    %v2438 = vpack.c.bf16 %v2275, %v2272
    %v2440 = vsel %vm431, %v2431, 0
    %v2443 = vsel %vm431, %v2432, 0
    %v2446 = vsel %vm431, %v2433, 0
    %v2449 = vsel %vm431, %v2434, 0
    %2451 = vmatprep.subr.bf16.mxu0 0
    %2452 = vmatpush1.bf16.msra.mxu0 %v2435
    %2453 = vmatprep.subr.bf16.mxu0 0
    %2454 = vmatpush1.bf16.msra.mxu0 %v2436
    %2455 = vmatprep.subr.bf16.mxu0 0
    %2456 = vmatpush1.bf16.msra.mxu0 %v2437
    %2457 = vmatprep.subr.bf16.mxu0 0
    %2458 = vmatpush1.bf16.msra.mxu0 %v2438
    %2459 = vmatprep.subr.bf16.mxu0 0
    %2460 = vmatpush1.bf16.msra.mxu0 0
    %2461 = vmatprep.subr.bf16.mxu0 0
    %2462 = vmatpush1.bf16.msra.mxu0 0
    %2463 = vmatprep.subr.bf16.mxu0 0
    %2464 = vmatpush1.bf16.msra.mxu0 0
    %2465 = vmatprep.subr.bf16.mxu0 0
    %2466 = vmatpush1.bf16.msra.mxu0 0
    %2467 = vmatprep.subr.bf16.mxu0 0
    %2468 = vmatpush1.bf16.msra.mxu0 0
    %2469 = vmatprep.subr.bf16.mxu0 0
    %2470 = vmatpush1.bf16.msra.mxu0 0
    %2471 = vmatprep.subr.bf16.mxu0 0
    %2472 = vmatpush1.bf16.msra.mxu0 0
    %2473 = vmatprep.subr.bf16.mxu0 0
    %2474 = vmatpush1.bf16.msra.mxu0 0
    %2475 = vmatprep.subr.bf16.mxu0 0
    %2476 = vmatpush1.bf16.msra.mxu0 0
    %2477 = vmatprep.subr.bf16.mxu0 0
    %2478 = vmatpush1.bf16.msra.mxu0 0
    %2479 = vmatprep.subr.bf16.mxu0 0
    %2480 = vmatpush1.bf16.msra.mxu0 0
    %2481 = vmatprep.subr.bf16.mxu0 0
    %2482 = vmatpush1.bf16.msra.mxu0 0
    %2483 = vmatprep.mubr.bf16.mxu0 0
    %2484 = vmatmul.mubr.bf16.gmra.mrb[0].mxu0 %v2440
    %v2485 = vpop.f32.mrb[0].mxu0
    %v2486 = vadd.f32 0.0, %v2485
    %v2487 = vpop.f32.mrb[0].mxu0
    %v2488 = vpop.f32.mrb[0].mxu0
    %v2489 = vadd.f32 0.0, %v2488
    %v2490 = vpop.f32.mrb[0].mxu0
    %2491 = vmatprep.mubr.bf16.mxu0 0
    %2492 = vmatmul.mubr.bf16.gmra.mrb[0].mxu0 %v2443
    %v2493 = vpop.f32.mrb[0].mxu0
    %v2494 = vadd.f32 0.0, %v2493
    %v2495 = vpop.f32.mrb[0].mxu0
    %v2496 = vpop.f32.mrb[0].mxu0
    %v2497 = vadd.f32 0.0, %v2496
    %v2498 = vpop.f32.mrb[0].mxu0
    %2499 = vmatprep.mubr.bf16.mxu0 0
    %2500 = vmatmul.mubr.bf16.gmra.mrb[0].mxu0 %v2446
    %v2501 = vpop.f32.mrb[0].mxu0
    %v2502 = vadd.f32 0.0, %v2501
    %v2503 = vpop.f32.mrb[0].mxu0
    %v2504 = vpop.f32.mrb[0].mxu0
    %v2505 = vadd.f32 0.0, %v2504
    %v2506 = vpop.f32.mrb[0].mxu0
    %2507 = vmatprep.mubr.bf16.mxu0 0
    %2508 = vmatmul.mubr.bf16.gmra.mrb[0].mxu0 %v2449
    %v2509 = vpop.f32.mrb[0].mxu0
    %v2510 = vadd.f32 0.0, %v2509
    %v2511 = vpop.f32.mrb[0].mxu0
    %v2512 = vpop.f32.mrb[0].mxu0
    %v2513 = vadd.f32 0.0, %v2512
    %v2514 = vpop.f32.mrb[0].mxu0
    %2515 = vdwg.mxu0
    %v2517 = vsel %vm431, %v2009, 0
    %v2520 = vsel %vm431, %v2010, 0
    %v2523 = vsel %vm431, %v2011, 0
    %v2526 = vsel %vm431, %v2012, 0
    %2528 = vmatprep.subr.bf16.mxu0 0
    %2529 = vmatpush1.bf16.msra.mxu0 %v2013
    %2530 = vmatprep.subr.bf16.mxu0 0
    %2531 = vmatpush1.bf16.msra.mxu0 %v2014
    %2532 = vmatprep.subr.bf16.mxu0 0
    %2533 = vmatpush1.bf16.msra.mxu0 %v2015
    %2534 = vmatprep.subr.bf16.mxu0 0
    %2535 = vmatpush1.bf16.msra.mxu0 %v2016
    %2536 = vmatprep.subr.bf16.mxu0 0
    %2537 = vmatpush1.bf16.msra.mxu0 0
    %2538 = vmatprep.subr.bf16.mxu0 0
    %2539 = vmatpush1.bf16.msra.mxu0 0
    %2540 = vmatprep.subr.bf16.mxu0 0
    %2541 = vmatpush1.bf16.msra.mxu0 0
    %2542 = vmatprep.subr.bf16.mxu0 0
    %2543 = vmatpush1.bf16.msra.mxu0 0
    %2544 = vmatprep.subr.bf16.mxu0 0
    %2545 = vmatpush1.bf16.msra.mxu0 0
    %2546 = vmatprep.subr.bf16.mxu0 0
    %2547 = vmatpush1.bf16.msra.mxu0 0
    %2548 = vmatprep.subr.bf16.mxu0 0
    %2549 = vmatpush1.bf16.msra.mxu0 0
    %2550 = vmatprep.subr.bf16.mxu0 0
    %2551 = vmatpush1.bf16.msra.mxu0 0
    %2552 = vmatprep.subr.bf16.mxu0 0
    %2553 = vmatpush1.bf16.msra.mxu0 0
    %2554 = vmatprep.subr.bf16.mxu0 0
    %2555 = vmatpush1.bf16.msra.mxu0 0
    %2556 = vmatprep.subr.bf16.mxu0 0
    %2557 = vmatpush1.bf16.msra.mxu0 0
    %2558 = vmatprep.subr.bf16.mxu0 0
    %2559 = vmatpush1.bf16.msra.mxu0 0
    %2560 = vmatprep.mubr.bf16.mxu0 0
    %2561 = vmatmul.mubr.bf16.gmra.mrb[0].mxu0 %v2517
    %v2562 = vpop.f32.mrb[0].mxu0
    %v2563 = vadd.f32 %v2486, %v2562
    %v2564 = vpop.f32.mrb[0].mxu0
    %v2565 = vpop.f32.mrb[0].mxu0
    %v2566 = vadd.f32 %v2489, %v2565
    %v2567 = vpop.f32.mrb[0].mxu0
    %2568 = vmatprep.mubr.bf16.mxu0 0
    %2569 = vmatmul.mubr.bf16.gmra.mrb[0].mxu0 %v2520
    %v2570 = vpop.f32.mrb[0].mxu0
    %v2571 = vadd.f32 %v2494, %v2570
    %v2572 = vpop.f32.mrb[0].mxu0
    %v2573 = vpop.f32.mrb[0].mxu0
    %v2574 = vadd.f32 %v2497, %v2573
    %v2575 = vpop.f32.mrb[0].mxu0
    %2576 = vmatprep.mubr.bf16.mxu0 0
    %2577 = vmatmul.mubr.bf16.gmra.mrb[0].mxu0 %v2523
    %v2578 = vpop.f32.mrb[0].mxu0
    %v2579 = vadd.f32 %v2502, %v2578
    %v2580 = vpop.f32.mrb[0].mxu0
    %v2581 = vpop.f32.mrb[0].mxu0
    %v2582 = vadd.f32 %v2505, %v2581
    %v2583 = vpop.f32.mrb[0].mxu0
    %2584 = vmatprep.mubr.bf16.mxu0 0
    %2585 = vmatmul.mubr.bf16.gmra.mrb[0].mxu0 %v2526
    %v2586 = vpop.f32.mrb[0].mxu0
    %v2587 = vadd.f32 %v2510, %v2586
    %v2588 = vpop.f32.mrb[0].mxu0
    %v2589 = vpop.f32.mrb[0].mxu0
    %v2590 = vadd.f32 %v2513, %v2589
    %v2591 = vpop.f32.mrb[0].mxu0
    %2592 = vdwg.mxu0
    %v2593 = vld [vmem:[%s4 + $0x12] sm:$0x1]
    %v2594 = vlaneseq
    %v2595 = vshrl.u32 %v2594, 7
    %v2596 = vsub.s32 0, %v2595
    %v2597 = vrot.slane %v2593, %v2596
    %v2598 = vadd.f32 %v2563, %v2597
    %v2599 = vadd.f32 %v2566, %v2597
    %v2600 = vadd.f32 %v2571, %v2597
    %v2601 = vadd.f32 %v2574, %v2597
    %v2602 = vadd.f32 %v2579, %v2597
    %v2603 = vadd.f32 %v2582, %v2597
    %v2604 = vadd.f32 %v2587, %v2597
    %v2605 = vadd.f32 %v2590, %v2597
    %v2606 = vadd.f32 %v1571, %v2598
    %v2607 = vadd.f32 %v1572, %v2599
    %v2608 = vadd.f32 %v1573, %v2600
    %v2609 = vadd.f32 %v1574, %v2601
    %v2610 = vadd.f32 %v1575, %v2602
    %v2611 = vadd.f32 %v1576, %v2603
    %v2612 = vadd.f32 %v1577, %v2604
    %v2613 = vadd.f32 %v1578, %v2605
    %v2614 = vld [vmem:[%s4 + $0x13] sm:$0x1]
    %v2615 = vld [vmem:[%s4 + $0x14] sm:$0x1]
    %v2616 = vsel %vm66, %v2606, 0.0
    %2617 = vadd.xlane.f32.xlu0 %v2616
    %v2618 = vpop.xlane.xlu0 %2617
    %v2619 = vsel %vm66, %v2607, 0.0
    %2620 = vadd.xlane.f32.xlu0 %v2619
    %v2621 = vpop.xlane.xlu0 %2620
    %v2622 = vsel %vm66, %v2608, 0.0
    %2623 = vadd.xlane.f32.xlu0 %v2622
    %v2624 = vpop.xlane.xlu0 %2623
    %v2625 = vsel %vm66, %v2609, 0.0
    %2626 = vadd.xlane.f32.xlu0 %v2625
    %v2627 = vpop.xlane.xlu0 %2626
    %v2628 = vsel %vm66, %v2610, 0.0
    %2629 = vadd.xlane.f32.xlu0 %v2628
    %v2630 = vpop.xlane.xlu0 %2629
    %v2631 = vsel %vm66, %v2611, 0.0
    %2632 = vadd.xlane.f32.xlu0 %v2631
    %v2633 = vpop.xlane.xlu0 %2632
    %v2634 = vsel %vm66, %v2612, 0.0
    %2635 = vadd.xlane.f32.xlu0 %v2634
    %v2636 = vpop.xlane.xlu0 %2635
    %v2637 = vsel %vm66, %v2613, 0.0
    %2638 = vadd.xlane.f32.xlu0 %v2637
    %v2639 = vpop.xlane.xlu0 %2638
    %v2640 = vmul.f32 %v2618, %v1103
    %v2641 = vmul.f32 %v2621, %v1103
    %v2642 = vmul.f32 %v2624, %v1103
    %v2643 = vmul.f32 %v2627, %v1103
    %v2644 = vmul.f32 %v2630, %v1103
    %v2645 = vmul.f32 %v2633, %v1103
    %v2646 = vmul.f32 %v2636, %v1103
    %v2647 = vmul.f32 %v2639, %v1103
    %v2648 = vmul.f32 %v2606, %v2606
    %v2649 = vmul.f32 %v2607, %v2607
    %v2650 = vmul.f32 %v2608, %v2608
    %v2651 = vmul.f32 %v2609, %v2609
    %v2652 = vmul.f32 %v2610, %v2610
    %v2653 = vmul.f32 %v2611, %v2611
    %v2654 = vmul.f32 %v2612, %v2612
    %v2655 = vmul.f32 %v2613, %v2613
    %v2656 = vsel %vm66, %v2648, 0.0
    %2657 = vadd.xlane.f32.xlu0 %v2656
    %v2658 = vpop.xlane.xlu0 %2657
    %v2659 = vsel %vm66, %v2649, 0.0
    %2660 = vadd.xlane.f32.xlu0 %v2659
    %v2661 = vpop.xlane.xlu0 %2660
    %v2662 = vsel %vm66, %v2650, 0.0
    %2663 = vadd.xlane.f32.xlu0 %v2662
    %v2664 = vpop.xlane.xlu0 %2663
    %v2665 = vsel %vm66, %v2651, 0.0
    %2666 = vadd.xlane.f32.xlu0 %v2665
    %v2667 = vpop.xlane.xlu0 %2666
    %v2668 = vsel %vm66, %v2652, 0.0
    %2669 = vadd.xlane.f32.xlu0 %v2668
    %v2670 = vpop.xlane.xlu0 %2669
    %v2671 = vsel %vm66, %v2653, 0.0
    %2672 = vadd.xlane.f32.xlu0 %v2671
    %v2673 = vpop.xlane.xlu0 %2672
    %v2674 = vsel %vm66, %v2654, 0.0
    %2675 = vadd.xlane.f32.xlu0 %v2674
    %v2676 = vpop.xlane.xlu0 %2675
    %v2677 = vsel %vm66, %v2655, 0.0
    %2678 = vadd.xlane.f32.xlu0 %v2677
    %v2679 = vpop.xlane.xlu0 %2678
    %v2680 = vmul.f32 %v2658, %v1103
    %v2681 = vmul.f32 %v2661, %v1103
    %v2682 = vmul.f32 %v2664, %v1103
    %v2683 = vmul.f32 %v2667, %v1103
    %v2684 = vmul.f32 %v2670, %v1103
    %v2685 = vmul.f32 %v2673, %v1103
    %v2686 = vmul.f32 %v2676, %v1103
    %v2687 = vmul.f32 %v2679, %v1103
    %v2688 = vsub.f32 %v2606, %v2640
    %v2689 = vsub.f32 %v2607, %v2641
    %v2690 = vsub.f32 %v2608, %v2642
    %v2691 = vsub.f32 %v2609, %v2643
    %v2692 = vsub.f32 %v2610, %v2644
    %v2693 = vsub.f32 %v2611, %v2645
    %v2694 = vsub.f32 %v2612, %v2646
    %v2695 = vsub.f32 %v2613, %v2647
    %v2696 = vmul.f32 %v2640, %v2640
    %v2697 = vmul.f32 %v2641, %v2641
    %v2698 = vmul.f32 %v2642, %v2642
    %v2699 = vmul.f32 %v2643, %v2643
    %v2700 = vmul.f32 %v2644, %v2644
    %v2701 = vmul.f32 %v2645, %v2645
    %v2702 = vmul.f32 %v2646, %v2646
    %v2703 = vmul.f32 %v2647, %v2647
    %v2704 = vsub.f32 %v2680, %v2696
    %v2705 = vsub.f32 %v2681, %v2697
    %v2706 = vsub.f32 %v2682, %v2698
    %v2707 = vsub.f32 %v2683, %v2699
    %v2708 = vsub.f32 %v2684, %v2700
    %v2709 = vsub.f32 %v2685, %v2701
    %v2710 = vsub.f32 %v2686, %v2702
    %v2711 = vsub.f32 %v2687, %v2703
    %v2712 = vadd.f32 %v2704, 1e-05
    %v2713 = vadd.f32 %v2705, 1e-05
    %v2714 = vadd.f32 %v2706, 1e-05
    %v2715 = vadd.f32 %v2707, 1e-05
    %v2716 = vadd.f32 %v2708, 1e-05
    %v2717 = vadd.f32 %v2709, 1e-05
    %v2718 = vadd.f32 %v2710, 1e-05
    %v2719 = vadd.f32 %v2711, 1e-05
    %v2720 = vrsqrt.pop %v2712
    %v2721 = vrsqrt.pop %v2713
    %v2722 = vrsqrt.pop %v2714
    %v2723 = vrsqrt.pop %v2715
    %v2724 = vrsqrt.pop %v2716
    %v2725 = vrsqrt.pop %v2717
    %v2726 = vrsqrt.pop %v2718
    %v2727 = vrsqrt.pop %v2719
    %v2728 = vmul.f32 %v2688, %v2720
    %v2729 = vmul.f32 %v2689, %v2721
    %v2730 = vmul.f32 %v2690, %v2722
    %v2731 = vmul.f32 %v2691, %v2723
    %v2732 = vmul.f32 %v2692, %v2724
    %v2733 = vmul.f32 %v2693, %v2725
    %v2734 = vmul.f32 %v2694, %v2726
    %v2735 = vmul.f32 %v2695, %v2727
    %v2736 = vlaneseq
    %v2737 = vshrl.u32 %v2736, 7
    %v2738 = vsub.s32 0, %v2737
    %v2739 = vrot.slane %v2614, %v2738
    %v2740 = vmul.f32 %v2728, %v2739
    %v2741 = vmul.f32 %v2729, %v2739
    %v2742 = vmul.f32 %v2730, %v2739
    %v2743 = vmul.f32 %v2731, %v2739
    %v2744 = vmul.f32 %v2732, %v2739
    %v2745 = vmul.f32 %v2733, %v2739
    %v2746 = vmul.f32 %v2734, %v2739
    %v2747 = vmul.f32 %v2735, %v2739
    %v2748 = vlaneseq
    %v2749 = vshrl.u32 %v2748, 7
    %v2750 = vsub.s32 0, %v2749
    %v2751 = vrot.slane %v2615, %v2750
    %v2752 = vadd.f32 %v2740, %v2751
    %v2753 = vadd.f32 %v2741, %v2751
    %v2754 = vadd.f32 %v2742, %v2751
    %v2755 = vadd.f32 %v2743, %v2751
    %v2756 = vadd.f32 %v2744, %v2751
    %v2757 = vadd.f32 %v2745, %v2751
    %v2758 = vadd.f32 %v2746, %v2751
    %v2759 = vadd.f32 %v2747, %v2751
    %v2760 = vpack.c.bf16 %v2753, %v2752
    %v2761 = vpack.c.bf16 %v2755, %v2754
    %v2762 = vpack.c.bf16 %v2757, %v2756
    %v2763 = vpack.c.bf16 %v2759, %v2758
    %s2764 = scalar_lea.vmem %s3, 32
    %v2765 = vld [vmem:[%s2764] sm:$0xf]
    %v2766 = vld [vmem:[%s2764 + $0x4] sm:$0xf]
    %v2767 = vld [vmem:[%s2764 + $0x8] sm:$0xf]
    %v2768 = vld [vmem:[%s2764 + $0xc] sm:$0xf]
    %v2769 = vld [vmem:[%s5 + $0x1] sm:$0x1]
    %v2770 = vlaneseq
    %v2771 = vshrl.u32 %v2770, 7
    %v2772 = vsub.s32 0, %v2771
    %v2773 = vrot.slane %v2769, %v2772
    %v2778 = vunpack.c.l.b16 %v2765
    %v2779 = vunpack.c.l.b16 %v2766
    %v2780 = vunpack.c.l.b16 %v2767
    %v2781 = vunpack.c.l.b16 %v2768
    %v2782 = vpack.c.b16 %v2779, %v2778
    %v2783 = vpack.c.b16 %v2781, %v2780
    %v2787 = vsel %vm66, %v2760, 0
    %v2790 = vsel %vm66, %v2761, 0
    %v2793 = vsel %vm66, %v2762, 0
    %v2796 = vsel %vm66, %v2763, 0
    %2798 = vmatprep.subr.bf16.mxu0 0
    %2799 = vmatpush1.bf16.msra.mxu0 %v2782
    %2800 = vmatprep.subr.bf16.mxu0 0
    %2801 = vmatpush1.bf16.msra.mxu0 %v2783
    %2802 = vmatprep.subr.bf16.mxu0 0
    %2803 = vmatpush1.bf16.msra.mxu0 0
    %2804 = vmatprep.subr.bf16.mxu0 0
    %2805 = vmatpush1.bf16.msra.mxu0 0
    %2806 = vmatprep.subr.bf16.mxu0 0
    %2807 = vmatpush1.bf16.msra.mxu0 0
    %2808 = vmatprep.subr.bf16.mxu0 0
    %2809 = vmatpush1.bf16.msra.mxu0 0
    %2810 = vmatprep.subr.bf16.mxu0 0
    %2811 = vmatpush1.bf16.msra.mxu0 0
    %2812 = vmatprep.subr.bf16.mxu0 0
    %2813 = vmatpush1.bf16.msra.mxu0 0
    %2814 = vmatprep.subr.bf16.mxu0 0
    %2815 = vmatpush1.bf16.msra.mxu0 0
    %2816 = vmatprep.subr.bf16.mxu0 0
    %2817 = vmatpush1.bf16.msra.mxu0 0
    %2818 = vmatprep.subr.bf16.mxu0 0
    %2819 = vmatpush1.bf16.msra.mxu0 0
    %2820 = vmatprep.subr.bf16.mxu0 0
    %2821 = vmatpush1.bf16.msra.mxu0 0
    %2822 = vmatprep.subr.bf16.mxu0 0
    %2823 = vmatpush1.bf16.msra.mxu0 0
    %2824 = vmatprep.subr.bf16.mxu0 0
    %2825 = vmatpush1.bf16.msra.mxu0 0
    %2826 = vmatprep.subr.bf16.mxu0 0
    %2827 = vmatpush1.bf16.msra.mxu0 0
    %2828 = vmatprep.subr.bf16.mxu0 0
    %2829 = vmatpush1.bf16.msra.mxu0 0
    %2830 = vmatprep.mubr.bf16.mxu0 0
    %2831 = vmatmul.mubr.bf16.gmra.mrb[0].mxu0 %v2787
    %v2832 = vpop.f32.mrb[0].mxu0
    %v2833 = vadd.f32 %v2773, %v2832
    %v2834 = vpop.f32.mrb[0].mxu0
    %v2835 = vpop.f32.mrb[0].mxu0
    %v2836 = vadd.f32 %v2773, %v2835
    %v2837 = vpop.f32.mrb[0].mxu0
    %2838 = vmatprep.mubr.bf16.mxu0 0
    %2839 = vmatmul.mubr.bf16.gmra.mrb[0].mxu0 %v2790
    %v2840 = vpop.f32.mrb[0].mxu0
    %v2841 = vadd.f32 %v2773, %v2840
    %v2842 = vpop.f32.mrb[0].mxu0
    %v2843 = vpop.f32.mrb[0].mxu0
    %v2844 = vadd.f32 %v2773, %v2843
    %v2845 = vpop.f32.mrb[0].mxu0
    %2846 = vmatprep.mubr.bf16.mxu0 0
    %2847 = vmatmul.mubr.bf16.gmra.mrb[0].mxu0 %v2793
    %v2848 = vpop.f32.mrb[0].mxu0
    %v2849 = vadd.f32 %v2773, %v2848
    %v2850 = vpop.f32.mrb[0].mxu0
    %v2851 = vpop.f32.mrb[0].mxu0
    %v2852 = vadd.f32 %v2773, %v2851
    %v2853 = vpop.f32.mrb[0].mxu0
    %2854 = vmatprep.mubr.bf16.mxu0 0
    %2855 = vmatmul.mubr.bf16.gmra.mrb[0].mxu0 %v2796
    %v2856 = vpop.f32.mrb[0].mxu0
    %v2857 = vadd.f32 %v2773, %v2856
    %v2858 = vpop.f32.mrb[0].mxu0
    %v2859 = vpop.f32.mrb[0].mxu0
    %v2860 = vadd.f32 %v2773, %v2859
    %v2861 = vpop.f32.mrb[0].mxu0
    %2862 = vdwg.mxu0
    %v2863 = vmax.f32 %v2833, 0.0
    %v2864 = vmax.f32 %v2836, 0.0
    %v2865 = vmax.f32 %v2841, 0.0
    %v2866 = vmax.f32 %v2844, 0.0
    %v2867 = vmax.f32 %v2849, 0.0
    %v2868 = vmax.f32 %v2852, 0.0
    %v2869 = vmax.f32 %v2857, 0.0
    %v2870 = vmax.f32 %v2860, 0.0
    %v2871 = vpack.c.bf16 %v2864, %v2863
    %v2872 = vpack.c.bf16 %v2866, %v2865
    %v2873 = vpack.c.bf16 %v2868, %v2867
    %v2874 = vpack.c.bf16 %v2870, %v2869
    %s2875 = scalar_lea.vmem %s3, 48
    %v2876 = vld [vmem:[%s2875] sm:$0xf]
    %v2877 = vld [vmem:[%s2875 + $0x4] sm:$0xf]
    %v2878 = vld [vmem:[%s2875 + $0x8] sm:$0xf]
    %v2879 = vld [vmem:[%s2875 + $0xc] sm:$0xf]
    %v2880 = vld [vmem:[%s4 + $0x15] sm:$0x1]
    %v2881 = vlaneseq
    %v2882 = vshrl.u32 %v2881, 7
    %v2883 = vsub.s32 0, %v2882
    %v2884 = vrot.slane %v2880, %v2883
    %v2889 = vunpack.c.l.b16 %v2876
    %v2890 = vunpack.c.l.b16 %v2877
    %v2891 = vunpack.c.l.b16 %v2878
    %v2892 = vunpack.c.l.b16 %v2879
    %v2893 = vpack.c.b16 %v2890, %v2889
    %v2894 = vpack.c.b16 %v2892, %v2891
    %2897 = vmatprep.subr.bf16.mxu0 0
    %2898 = vmatpush1.bf16.xpose.msra.mxu0 %v2893
    %2899 = vmatprep.subr.bf16.mxu0 0
    %2900 = vmatpush1.bf16.xpose.msra.mxu0 %v2894
    %2901 = vmatprep.subr.bf16.mxu0 0
    %2902 = vmatpush1.bf16.xpose.msra.mxu0 0
    %2903 = vmatprep.subr.bf16.mxu0 0
    %2904 = vmatpush1.bf16.xpose.msra.mxu0 0
    %2905 = vmatprep.subr.bf16.mxu0 0
    %2906 = vmatpush1.bf16.xpose.msra.mxu0 0
    %2907 = vmatprep.subr.bf16.mxu0 0
    %2908 = vmatpush1.bf16.xpose.msra.mxu0 0
    %2909 = vmatprep.subr.bf16.mxu0 0
    %2910 = vmatpush1.bf16.xpose.msra.mxu0 0
    %2911 = vmatprep.subr.bf16.mxu0 0
    %2912 = vmatpush1.bf16.xpose.msra.mxu0 0
    %2913 = vmatprep.subr.bf16.mxu0 0
    %2914 = vmatpush1.bf16.xpose.msra.mxu0 0
    %2915 = vmatprep.subr.bf16.mxu0 0
    %2916 = vmatpush1.bf16.xpose.msra.mxu0 0
    %2917 = vmatprep.subr.bf16.mxu0 0
    %2918 = vmatpush1.bf16.xpose.msra.mxu0 0
    %2919 = vmatprep.subr.bf16.mxu0 0
    %2920 = vmatpush1.bf16.xpose.msra.mxu0 0
    %2921 = vmatprep.subr.bf16.mxu0 0
    %2922 = vmatpush1.bf16.xpose.msra.mxu0 0
    %2923 = vmatprep.subr.bf16.mxu0 0
    %2924 = vmatpush1.bf16.xpose.msra.mxu0 0
    %2925 = vmatprep.subr.bf16.mxu0 0
    %2926 = vmatpush1.bf16.xpose.msra.mxu0 0
    %2927 = vmatprep.subr.bf16.mxu0 0
    %2928 = vmatpush1.bf16.xpose.msra.mxu0 0
    %2929 = vmatprep.mubr.bf16.mxu0 0
    %2930 = vmatmul.mubr.bf16.gmra.mrb[0].mxu0 %v2871
    %v2931 = vpop.f32.mrb[0].mxu0
    %v2932 = vadd.f32 %v2884, %v2931
    %v2933 = vpop.f32.mrb[0].mxu0
    %v2934 = vpop.f32.mrb[0].mxu0
    %v2935 = vadd.f32 %v2884, %v2934
    %v2936 = vpop.f32.mrb[0].mxu0
    %2937 = vmatprep.mubr.bf16.mxu0 0
    %2938 = vmatmul.mubr.bf16.gmra.mrb[0].mxu0 %v2872
    %v2939 = vpop.f32.mrb[0].mxu0
    %v2940 = vadd.f32 %v2884, %v2939
    %v2941 = vpop.f32.mrb[0].mxu0
    %v2942 = vpop.f32.mrb[0].mxu0
    %v2943 = vadd.f32 %v2884, %v2942
    %v2944 = vpop.f32.mrb[0].mxu0
    %2945 = vmatprep.mubr.bf16.mxu0 0
    %2946 = vmatmul.mubr.bf16.gmra.mrb[0].mxu0 %v2873
    %v2947 = vpop.f32.mrb[0].mxu0
    %v2948 = vadd.f32 %v2884, %v2947
    %v2949 = vpop.f32.mrb[0].mxu0
    %v2950 = vpop.f32.mrb[0].mxu0
    %v2951 = vadd.f32 %v2884, %v2950
    %v2952 = vpop.f32.mrb[0].mxu0
    %2953 = vmatprep.mubr.bf16.mxu0 0
    %2954 = vmatmul.mubr.bf16.gmra.mrb[0].mxu0 %v2874
    %v2955 = vpop.f32.mrb[0].mxu0
    %v2956 = vadd.f32 %v2884, %v2955
    %v2957 = vpop.f32.mrb[0].mxu0
    %v2958 = vpop.f32.mrb[0].mxu0
    %v2959 = vadd.f32 %v2884, %v2958
    %v2960 = vpop.f32.mrb[0].mxu0
    %2961 = vdwg.mxu0
    %v2962 = vadd.f32 %v2752, %v2932
    %v2963 = vadd.f32 %v2753, %v2935
    %v2964 = vadd.f32 %v2754, %v2940
    %v2965 = vadd.f32 %v2755, %v2943
    %v2966 = vadd.f32 %v2756, %v2948
    %v2967 = vadd.f32 %v2757, %v2951
    %v2968 = vadd.f32 %v2758, %v2956
    %v2969 = vadd.f32 %v2759, %v2959
    %v2970 = vld [vmem:[%s4 + $0x16] sm:$0x1]
    %v2971 = vld [vmem:[%s4 + $0x17] sm:$0x1]
    %v2972 = vsel %vm66, %v2962, 0.0
    %2973 = vadd.xlane.f32.xlu0 %v2972
    %v2974 = vpop.xlane.xlu0 %2973
    %v2975 = vsel %vm66, %v2963, 0.0
    %2976 = vadd.xlane.f32.xlu0 %v2975
    %v2977 = vpop.xlane.xlu0 %2976
    %v2978 = vsel %vm66, %v2964, 0.0
    %2979 = vadd.xlane.f32.xlu0 %v2978
    %v2980 = vpop.xlane.xlu0 %2979
    %v2981 = vsel %vm66, %v2965, 0.0
    %2982 = vadd.xlane.f32.xlu0 %v2981
    %v2983 = vpop.xlane.xlu0 %2982
    %v2984 = vsel %vm66, %v2966, 0.0
    %2985 = vadd.xlane.f32.xlu0 %v2984
    %v2986 = vpop.xlane.xlu0 %2985
    %v2987 = vsel %vm66, %v2967, 0.0
    %2988 = vadd.xlane.f32.xlu0 %v2987
    %v2989 = vpop.xlane.xlu0 %2988
    %v2990 = vsel %vm66, %v2968, 0.0
    %2991 = vadd.xlane.f32.xlu0 %v2990
    %v2992 = vpop.xlane.xlu0 %2991
    %v2993 = vsel %vm66, %v2969, 0.0
    %2994 = vadd.xlane.f32.xlu0 %v2993
    %v2995 = vpop.xlane.xlu0 %2994
    %v2996 = vmul.f32 %v2974, %v1103
    %v2997 = vmul.f32 %v2977, %v1103
    %v2998 = vmul.f32 %v2980, %v1103
    %v2999 = vmul.f32 %v2983, %v1103
    %v3000 = vmul.f32 %v2986, %v1103
    %v3001 = vmul.f32 %v2989, %v1103
    %v3002 = vmul.f32 %v2992, %v1103
    %v3003 = vmul.f32 %v2995, %v1103
    %v3004 = vmul.f32 %v2962, %v2962
    %v3005 = vmul.f32 %v2963, %v2963
    %v3006 = vmul.f32 %v2964, %v2964
    %v3007 = vmul.f32 %v2965, %v2965
    %v3008 = vmul.f32 %v2966, %v2966
    %v3009 = vmul.f32 %v2967, %v2967
    %v3010 = vmul.f32 %v2968, %v2968
    %v3011 = vmul.f32 %v2969, %v2969
    %v3012 = vsel %vm66, %v3004, 0.0
    %3013 = vadd.xlane.f32.xlu0 %v3012
    %v3014 = vpop.xlane.xlu0 %3013
    %v3015 = vsel %vm66, %v3005, 0.0
    %3016 = vadd.xlane.f32.xlu0 %v3015
    %v3017 = vpop.xlane.xlu0 %3016
    %v3018 = vsel %vm66, %v3006, 0.0
    %3019 = vadd.xlane.f32.xlu0 %v3018
    %v3020 = vpop.xlane.xlu0 %3019
    %v3021 = vsel %vm66, %v3007, 0.0
    %3022 = vadd.xlane.f32.xlu0 %v3021
    %v3023 = vpop.xlane.xlu0 %3022
    %v3024 = vsel %vm66, %v3008, 0.0
    %3025 = vadd.xlane.f32.xlu0 %v3024
    %v3026 = vpop.xlane.xlu0 %3025
    %v3027 = vsel %vm66, %v3009, 0.0
    %3028 = vadd.xlane.f32.xlu0 %v3027
    %v3029 = vpop.xlane.xlu0 %3028
    %v3030 = vsel %vm66, %v3010, 0.0
    %3031 = vadd.xlane.f32.xlu0 %v3030
    %v3032 = vpop.xlane.xlu0 %3031
    %v3033 = vsel %vm66, %v3011, 0.0
    %3034 = vadd.xlane.f32.xlu0 %v3033
    %v3035 = vpop.xlane.xlu0 %3034
    %v3036 = vmul.f32 %v3014, %v1103
    %v3037 = vmul.f32 %v3017, %v1103
    %v3038 = vmul.f32 %v3020, %v1103
    %v3039 = vmul.f32 %v3023, %v1103
    %v3040 = vmul.f32 %v3026, %v1103
    %v3041 = vmul.f32 %v3029, %v1103
    %v3042 = vmul.f32 %v3032, %v1103
    %v3043 = vmul.f32 %v3035, %v1103
    %v3044 = vsub.f32 %v2962, %v2996
    %v3045 = vsub.f32 %v2963, %v2997
    %v3046 = vsub.f32 %v2964, %v2998
    %v3047 = vsub.f32 %v2965, %v2999
    %v3048 = vsub.f32 %v2966, %v3000
    %v3049 = vsub.f32 %v2967, %v3001
    %v3050 = vsub.f32 %v2968, %v3002
    %v3051 = vsub.f32 %v2969, %v3003
    %v3052 = vmul.f32 %v2996, %v2996
    %v3053 = vmul.f32 %v2997, %v2997
    %v3054 = vmul.f32 %v2998, %v2998
    %v3055 = vmul.f32 %v2999, %v2999
    %v3056 = vmul.f32 %v3000, %v3000
    %v3057 = vmul.f32 %v3001, %v3001
    %v3058 = vmul.f32 %v3002, %v3002
    %v3059 = vmul.f32 %v3003, %v3003
    %v3060 = vsub.f32 %v3036, %v3052
    %v3061 = vsub.f32 %v3037, %v3053
    %v3062 = vsub.f32 %v3038, %v3054
    %v3063 = vsub.f32 %v3039, %v3055
    %v3064 = vsub.f32 %v3040, %v3056
    %v3065 = vsub.f32 %v3041, %v3057
    %v3066 = vsub.f32 %v3042, %v3058
    %v3067 = vsub.f32 %v3043, %v3059
    %v3068 = vadd.f32 %v3060, 1e-05
    %v3069 = vadd.f32 %v3061, 1e-05
    %v3070 = vadd.f32 %v3062, 1e-05
    %v3071 = vadd.f32 %v3063, 1e-05
    %v3072 = vadd.f32 %v3064, 1e-05
    %v3073 = vadd.f32 %v3065, 1e-05
    %v3074 = vadd.f32 %v3066, 1e-05
    %v3075 = vadd.f32 %v3067, 1e-05
    %v3076 = vrsqrt.pop %v3068
    %v3077 = vrsqrt.pop %v3069
    %v3078 = vrsqrt.pop %v3070
    %v3079 = vrsqrt.pop %v3071
    %v3080 = vrsqrt.pop %v3072
    %v3081 = vrsqrt.pop %v3073
    %v3082 = vrsqrt.pop %v3074
    %v3083 = vrsqrt.pop %v3075
    %v3084 = vmul.f32 %v3044, %v3076
    %v3085 = vmul.f32 %v3045, %v3077
    %v3086 = vmul.f32 %v3046, %v3078
    %v3087 = vmul.f32 %v3047, %v3079
    %v3088 = vmul.f32 %v3048, %v3080
    %v3089 = vmul.f32 %v3049, %v3081
    %v3090 = vmul.f32 %v3050, %v3082
    %v3091 = vmul.f32 %v3051, %v3083
    %v3092 = vlaneseq
    %v3093 = vshrl.u32 %v3092, 7
    %v3094 = vsub.s32 0, %v3093
    %v3095 = vrot.slane %v2970, %v3094
    %v3096 = vmul.f32 %v3084, %v3095
    %v3097 = vmul.f32 %v3085, %v3095
    %v3098 = vmul.f32 %v3086, %v3095
    %v3099 = vmul.f32 %v3087, %v3095
    %v3100 = vmul.f32 %v3088, %v3095
    %v3101 = vmul.f32 %v3089, %v3095
    %v3102 = vmul.f32 %v3090, %v3095
    %v3103 = vmul.f32 %v3091, %v3095
    %v3104 = vlaneseq
    %v3105 = vshrl.u32 %v3104, 7
    %v3106 = vsub.s32 0, %v3105
    %v3107 = vrot.slane %v2971, %v3106
    %v3108 = vadd.f32 %v3096, %v3107
    %v3109 = vadd.f32 %v3097, %v3107
    %v3110 = vadd.f32 %v3098, %v3107
    %v3111 = vadd.f32 %v3099, %v3107
    %v3112 = vadd.f32 %v3100, %v3107
    %v3113 = vadd.f32 %v3101, %v3107
    %v3114 = vadd.f32 %v3102, %v3107
    %v3115 = vadd.f32 %v3103, %v3107
    %v3116 = vld [vmem:[%s4 + $0x18] sm:$0x1]
    %v3117 = vld [vmem:[%s4 + $0x19] sm:$0x1]
    %v3118 = vsel %vm66, %v3108, 0.0
    %3119 = vadd.xlane.f32.xlu0 %v3118
    %v3120 = vpop.xlane.xlu0 %3119
    %v3121 = vsel %vm66, %v3109, 0.0
    %3122 = vadd.xlane.f32.xlu0 %v3121
    %v3123 = vpop.xlane.xlu0 %3122
    %v3124 = vsel %vm66, %v3110, 0.0
    %3125 = vadd.xlane.f32.xlu0 %v3124
    %v3126 = vpop.xlane.xlu0 %3125
    %v3127 = vsel %vm66, %v3111, 0.0
    %3128 = vadd.xlane.f32.xlu0 %v3127
    %v3129 = vpop.xlane.xlu0 %3128
    %v3130 = vsel %vm66, %v3112, 0.0
    %3131 = vadd.xlane.f32.xlu0 %v3130
    %v3132 = vpop.xlane.xlu0 %3131
    %v3133 = vsel %vm66, %v3113, 0.0
    %3134 = vadd.xlane.f32.xlu0 %v3133
    %v3135 = vpop.xlane.xlu0 %3134
    %v3136 = vsel %vm66, %v3114, 0.0
    %3137 = vadd.xlane.f32.xlu0 %v3136
    %v3138 = vpop.xlane.xlu0 %3137
    %v3139 = vsel %vm66, %v3115, 0.0
    %3140 = vadd.xlane.f32.xlu0 %v3139
    %v3141 = vpop.xlane.xlu0 %3140
    %v3142 = vmul.f32 %v3120, %v1103
    %v3143 = vmul.f32 %v3123, %v1103
    %v3144 = vmul.f32 %v3126, %v1103
    %v3145 = vmul.f32 %v3129, %v1103
    %v3146 = vmul.f32 %v3132, %v1103
    %v3147 = vmul.f32 %v3135, %v1103
    %v3148 = vmul.f32 %v3138, %v1103
    %v3149 = vmul.f32 %v3141, %v1103
    %v3150 = vmul.f32 %v3108, %v3108
    %v3151 = vmul.f32 %v3109, %v3109
    %v3152 = vmul.f32 %v3110, %v3110
    %v3153 = vmul.f32 %v3111, %v3111
    %v3154 = vmul.f32 %v3112, %v3112
    %v3155 = vmul.f32 %v3113, %v3113
    %v3156 = vmul.f32 %v3114, %v3114
    %v3157 = vmul.f32 %v3115, %v3115
    %v3158 = vsel %vm66, %v3150, 0.0
    %3159 = vadd.xlane.f32.xlu0 %v3158
    %v3160 = vpop.xlane.xlu0 %3159
    %v3161 = vsel %vm66, %v3151, 0.0
    %3162 = vadd.xlane.f32.xlu0 %v3161
    %v3163 = vpop.xlane.xlu0 %3162
    %v3164 = vsel %vm66, %v3152, 0.0
    %3165 = vadd.xlane.f32.xlu0 %v3164
    %v3166 = vpop.xlane.xlu0 %3165
    %v3167 = vsel %vm66, %v3153, 0.0
    %3168 = vadd.xlane.f32.xlu0 %v3167
    %v3169 = vpop.xlane.xlu0 %3168
    %v3170 = vsel %vm66, %v3154, 0.0
    %3171 = vadd.xlane.f32.xlu0 %v3170
    %v3172 = vpop.xlane.xlu0 %3171
    %v3173 = vsel %vm66, %v3155, 0.0
    %3174 = vadd.xlane.f32.xlu0 %v3173
    %v3175 = vpop.xlane.xlu0 %3174
    %v3176 = vsel %vm66, %v3156, 0.0
    %3177 = vadd.xlane.f32.xlu0 %v3176
    %v3178 = vpop.xlane.xlu0 %3177
    %v3179 = vsel %vm66, %v3157, 0.0
    %3180 = vadd.xlane.f32.xlu0 %v3179
    %v3181 = vpop.xlane.xlu0 %3180
    %v3182 = vmul.f32 %v3160, %v1103
    %v3183 = vmul.f32 %v3163, %v1103
    %v3184 = vmul.f32 %v3166, %v1103
    %v3185 = vmul.f32 %v3169, %v1103
    %v3186 = vmul.f32 %v3172, %v1103
    %v3187 = vmul.f32 %v3175, %v1103
    %v3188 = vmul.f32 %v3178, %v1103
    %v3189 = vmul.f32 %v3181, %v1103
    %v3190 = vsub.f32 %v3108, %v3142
    %v3191 = vsub.f32 %v3109, %v3143
    %v3192 = vsub.f32 %v3110, %v3144
    %v3193 = vsub.f32 %v3111, %v3145
    %v3194 = vsub.f32 %v3112, %v3146
    %v3195 = vsub.f32 %v3113, %v3147
    %v3196 = vsub.f32 %v3114, %v3148
    %v3197 = vsub.f32 %v3115, %v3149
    %v3198 = vmul.f32 %v3142, %v3142
    %v3199 = vmul.f32 %v3143, %v3143
    %v3200 = vmul.f32 %v3144, %v3144
    %v3201 = vmul.f32 %v3145, %v3145
    %v3202 = vmul.f32 %v3146, %v3146
    %v3203 = vmul.f32 %v3147, %v3147
    %v3204 = vmul.f32 %v3148, %v3148
    %v3205 = vmul.f32 %v3149, %v3149
    %v3206 = vsub.f32 %v3182, %v3198
    %v3207 = vsub.f32 %v3183, %v3199
    %v3208 = vsub.f32 %v3184, %v3200
    %v3209 = vsub.f32 %v3185, %v3201
    %v3210 = vsub.f32 %v3186, %v3202
    %v3211 = vsub.f32 %v3187, %v3203
    %v3212 = vsub.f32 %v3188, %v3204
    %v3213 = vsub.f32 %v3189, %v3205
    %v3214 = vadd.f32 %v3206, 1e-05
    %v3215 = vadd.f32 %v3207, 1e-05
    %v3216 = vadd.f32 %v3208, 1e-05
    %v3217 = vadd.f32 %v3209, 1e-05
    %v3218 = vadd.f32 %v3210, 1e-05
    %v3219 = vadd.f32 %v3211, 1e-05
    %v3220 = vadd.f32 %v3212, 1e-05
    %v3221 = vadd.f32 %v3213, 1e-05
    %v3222 = vrsqrt.pop %v3214
    %v3223 = vrsqrt.pop %v3215
    %v3224 = vrsqrt.pop %v3216
    %v3225 = vrsqrt.pop %v3217
    %v3226 = vrsqrt.pop %v3218
    %v3227 = vrsqrt.pop %v3219
    %v3228 = vrsqrt.pop %v3220
    %v3229 = vrsqrt.pop %v3221
    %v3230 = vmul.f32 %v3190, %v3222
    %v3231 = vmul.f32 %v3191, %v3223
    %v3232 = vmul.f32 %v3192, %v3224
    %v3233 = vmul.f32 %v3193, %v3225
    %v3234 = vmul.f32 %v3194, %v3226
    %v3235 = vmul.f32 %v3195, %v3227
    %v3236 = vmul.f32 %v3196, %v3228
    %v3237 = vmul.f32 %v3197, %v3229
    %v3238 = vlaneseq
    %v3239 = vshrl.u32 %v3238, 7
    %v3240 = vsub.s32 0, %v3239
    %v3241 = vrot.slane %v3116, %v3240
    %v3242 = vmul.f32 %v3230, %v3241
    %v3243 = vmul.f32 %v3231, %v3241
    %v3244 = vmul.f32 %v3232, %v3241
    %v3245 = vmul.f32 %v3233, %v3241
    %v3246 = vmul.f32 %v3234, %v3241
    %v3247 = vmul.f32 %v3235, %v3241
    %v3248 = vmul.f32 %v3236, %v3241
    %v3249 = vmul.f32 %v3237, %v3241
    %v3250 = vlaneseq
    %v3251 = vshrl.u32 %v3250, 7
    %v3252 = vsub.s32 0, %v3251
    %v3253 = vrot.slane %v3117, %v3252
    %v3254 = vadd.f32 %v3242, %v3253
    %v3255 = vadd.f32 %v3243, %v3253
    %v3256 = vadd.f32 %v3244, %v3253
    %v3257 = vadd.f32 %v3245, %v3253
    %v3258 = vadd.f32 %v3246, %v3253
    %v3259 = vadd.f32 %v3247, %v3253
    %v3260 = vadd.f32 %v3248, %v3253
    %v3261 = vadd.f32 %v3249, %v3253
    %v3262 = vpack.c.bf16 %v3255, %v3254
    %v3263 = vpack.c.bf16 %v3257, %v3256
    %v3264 = vpack.c.bf16 %v3259, %v3258
    %v3265 = vpack.c.bf16 %v3261, %v3260
    %s3266 = scalar_lea.vmem %s3, 64
    %v3267 = vld [vmem:[%s3266] sm:$0xf]
    %v3268 = vld [vmem:[%s3266 + $0x4] sm:$0xf]
    %v3269 = vld [vmem:[%s3266 + $0x8] sm:$0xf]
    %v3270 = vld [vmem:[%s3266 + $0xc] sm:$0xf]
    %v3271 = vld [vmem:[%s5 + $0x2] sm:$0x1]
    %v3272 = vlaneseq
    %v3273 = vshrl.u32 %v3272, 7
    %v3274 = vsub.s32 0, %v3273
    %v3275 = vrot.slane %v3271, %v3274
    %v3280 = vunpack.c.l.b16 %v3267
    %v3281 = vunpack.c.l.b16 %v3268
    %v3282 = vunpack.c.l.b16 %v3269
    %v3283 = vunpack.c.l.b16 %v3270
    %v3284 = vpack.c.b16 %v3281, %v3280
    %v3285 = vpack.c.b16 %v3283, %v3282
    %v3289 = vsel %vm66, %v3262, 0
    %v3292 = vsel %vm66, %v3263, 0
    %v3295 = vsel %vm66, %v3264, 0
    %v3298 = vsel %vm66, %v3265, 0
    %3300 = vmatprep.subr.bf16.mxu0 0
    %3301 = vmatpush1.bf16.msra.mxu0 %v3284
    %3302 = vmatprep.subr.bf16.mxu0 0
    %3303 = vmatpush1.bf16.msra.mxu0 %v3285
    %3304 = vmatprep.subr.bf16.mxu0 0
    %3305 = vmatpush1.bf16.msra.mxu0 0
    %3306 = vmatprep.subr.bf16.mxu0 0
    %3307 = vmatpush1.bf16.msra.mxu0 0
    %3308 = vmatprep.subr.bf16.mxu0 0
    %3309 = vmatpush1.bf16.msra.mxu0 0
    %3310 = vmatprep.subr.bf16.mxu0 0
    %3311 = vmatpush1.bf16.msra.mxu0 0
    %3312 = vmatprep.subr.bf16.mxu0 0
    %3313 = vmatpush1.bf16.msra.mxu0 0
    %3314 = vmatprep.subr.bf16.mxu0 0
    %3315 = vmatpush1.bf16.msra.mxu0 0
    %3316 = vmatprep.subr.bf16.mxu0 0
    %3317 = vmatpush1.bf16.msra.mxu0 0
    %3318 = vmatprep.subr.bf16.mxu0 0
    %3319 = vmatpush1.bf16.msra.mxu0 0
    %3320 = vmatprep.subr.bf16.mxu0 0
    %3321 = vmatpush1.bf16.msra.mxu0 0
    %3322 = vmatprep.subr.bf16.mxu0 0
    %3323 = vmatpush1.bf16.msra.mxu0 0
    %3324 = vmatprep.subr.bf16.mxu0 0
    %3325 = vmatpush1.bf16.msra.mxu0 0
    %3326 = vmatprep.subr.bf16.mxu0 0
    %3327 = vmatpush1.bf16.msra.mxu0 0
    %3328 = vmatprep.subr.bf16.mxu0 0
    %3329 = vmatpush1.bf16.msra.mxu0 0
    %3330 = vmatprep.subr.bf16.mxu0 0
    %3331 = vmatpush1.bf16.msra.mxu0 0
    %3332 = vmatprep.mubr.bf16.mxu0 0
    %3333 = vmatmul.mubr.bf16.gmra.mrb[0].mxu0 %v3289
    %v3334 = vpop.f32.mrb[0].mxu0
    %v3335 = vadd.f32 %v3275, %v3334
    %v3336 = vpop.f32.mrb[0].mxu0
    %v3337 = vpop.f32.mrb[0].mxu0
    %v3338 = vadd.f32 %v3275, %v3337
    %v3339 = vpop.f32.mrb[0].mxu0
    %3340 = vmatprep.mubr.bf16.mxu0 0
    %3341 = vmatmul.mubr.bf16.gmra.mrb[0].mxu0 %v3292
    %v3342 = vpop.f32.mrb[0].mxu0
    %v3343 = vadd.f32 %v3275, %v3342
    %v3344 = vpop.f32.mrb[0].mxu0
    %v3345 = vpop.f32.mrb[0].mxu0
    %v3346 = vadd.f32 %v3275, %v3345
    %v3347 = vpop.f32.mrb[0].mxu0
    %3348 = vmatprep.mubr.bf16.mxu0 0
    %3349 = vmatmul.mubr.bf16.gmra.mrb[0].mxu0 %v3295
    %v3350 = vpop.f32.mrb[0].mxu0
    %v3351 = vadd.f32 %v3275, %v3350
    %v3352 = vpop.f32.mrb[0].mxu0
    %v3353 = vpop.f32.mrb[0].mxu0
    %v3354 = vadd.f32 %v3275, %v3353
    %v3355 = vpop.f32.mrb[0].mxu0
    %3356 = vmatprep.mubr.bf16.mxu0 0
    %3357 = vmatmul.mubr.bf16.gmra.mrb[0].mxu0 %v3298
    %v3358 = vpop.f32.mrb[0].mxu0
    %v3359 = vadd.f32 %v3275, %v3358
    %v3360 = vpop.f32.mrb[0].mxu0
    %v3361 = vpop.f32.mrb[0].mxu0
    %v3362 = vadd.f32 %v3275, %v3361
    %v3363 = vpop.f32.mrb[0].mxu0
    %3364 = vdwg.mxu0
    %3365 = vst [vmem:[#allocation2] sm:$0xff] %v3335
    %3366 = vst [vmem:[#allocation2 + $0x8] sm:$0xff] %v3338
    %3367 = vst [vmem:[#allocation2 + $0x10] sm:$0xff] %v3343
    %3368 = vst [vmem:[#allocation2 + $0x18] sm:$0xff] %v3346
    %3369 = vst [vmem:[#allocation2 + $0x20] sm:$0xff] %v3351
    %3370 = vst [vmem:[#allocation2 + $0x28] sm:$0xff] %v3354
    %3371 = vst [vmem:[#allocation2 + $0x30] sm:$0xff] %v3359
    %3372 = vst [vmem:[#allocation2 + $0x38] sm:$0xff] %v3362
    // Predicated region
    $region26: #{sequence_predictor_forward.1} parent=1 // pred_check
      _
    $region27: #{sequence_predictor_forward.1} parent=1 // pred_check_branch
      %3374 = sbr.rel (0) target = $region29
    $region28: #{sequence_predictor_forward.1} parent=1 // pred_region
      %s3376 = ssub.s32 1024, 1024
      %3377 = vsyncadd [#allocation3], %s3376
      %s3378 = sshll.u32 [#allocation2], 4
      %s3379 = int_to_ptr.vmem [resolvable:$true] %s3378
      %3384 = dma.vmem_to_hbm [thread:$0]  %s3379, 1024, %s6, [#allocation3], 128, 128, 8
    $region29: #{sequence_predictor_forward.1} parent=1 // pred_fallthru
      _
    // Predicated region
    $region30: #{sequence_predictor_forward.1} parent=1 // pred_check
      _
    $region31: #{sequence_predictor_forward.1} parent=1 // pred_check_branch
      %3386 = sbr.rel (0) target = $region33
    $region32: #{sequence_predictor_forward.1} parent=1 // pred_region
      %3387 = dma.done [#allocation3], 1024
    $region33: #{sequence_predictor_forward.1} parent=1 // pred_fallthru
      _
    %3388 = vsyncpa [#allocation3], 1

</llo_original>
